<compile_context>
chip_gen: v5e
topology: v5e:2x2
jax: 0.10.0
libtpu: 0.0.40
codegen_flags: <defaults>
</compile_context>

<pallas_src>
import functools
import math

import jax
import jax.numpy as jnp
from jax import lax
from jax.experimental import pallas as pl
from jax.experimental.pallas import tpu as pltpu


def _attention_kernel(x_ref, wq_ref, wk_ref, wv_ref, wo_ref,
                      bq_ref, bk_ref, bv_ref, bo_ref,
                      o_ref, k_scr, v_scr,
                      *, n_heads, q_tile, causal):
    qi = pl.program_id(1)
    seq_len = x_ref.shape[1]
    d_embed = o_ref.shape[2]

    # ---- K/V projection for the whole sequence: once per batch element ----
    @pl.when(qi == 0)
    def _():
        xf = x_ref[0]                                         # (S, D) bf16

        def kv_body(h, carry):
            kh = jnp.dot(xf, wk_ref[h],
                         preferred_element_type=jnp.float32) + bk_ref[h]
            vh = jnp.dot(xf, wv_ref[h],
                         preferred_element_type=jnp.float32) + bv_ref[h]
            k_scr[h] = kh.astype(jnp.bfloat16)                # (S, dh)
            v_scr[h] = vh.astype(jnp.bfloat16)                # (S, dh)
            return carry

        lax.fori_loop(0, n_heads, kv_body, 0)

    # ---- current query tile (sliced from the resident x slab) ----
    q_start = pl.multiple_of(qi * q_tile, q_tile)
    xq = x_ref[0, pl.ds(q_start, q_tile), :]                  # (Tq, D) bf16

    if causal:
        # Hoisted: built once, reused by every head.
        row = q_start + lax.broadcasted_iota(jnp.int32, (q_tile, seq_len), 0)
        col = lax.broadcasted_iota(jnp.int32, (q_tile, seq_len), 1)
        masked = col > row                                    # triu(1)

    def head_body(h, y_acc):
        # Q projection (scale already folded into wq/bq in the wrapper).
        qh = jnp.dot(xq, wq_ref[h],
                     preferred_element_type=jnp.float32) + bq_ref[h]   # (Tq, dh)
        kh = k_scr[h]                                         # (S, dh) bf16
        vh = v_scr[h]                                         # (S, dh) bf16

        # scores[q, k] = sum_d qh[q, d] * kh[k, d]  -- no transpose materialized
        scores = lax.dot_general(
            qh.astype(jnp.bfloat16), kh,
            dimension_numbers=(((1,), (1,)), ((), ())),
            preferred_element_type=jnp.float32)               # (Tq, S) f32
        if causal:
            scores = jnp.where(masked, -1e30, scores)

        # Numerically stable softmax, normalization deferred to the output.
        m = jnp.max(scores, axis=-1, keepdims=True)
        p = jnp.exp(scores - m)                               # (Tq, S) f32
        denom = jnp.sum(p, axis=-1, keepdims=True)            # (Tq, 1)

        o_h = jnp.dot(p.astype(jnp.bfloat16), vh,
                      preferred_element_type=jnp.float32)     # (Tq, dh)
        o_h = o_h * pl.reciprocal(denom, approx=True)

        # out_proj distributes over head chunks: accumulate o_h @ WoutT[h].
        return y_acc + jnp.dot(o_h.astype(jnp.bfloat16), wo_ref[h],
                               preferred_element_type=jnp.float32)     # (Tq, D)

    y = lax.fori_loop(0, n_heads,
                      head_body,
                      jnp.zeros((q_tile, d_embed), jnp.float32))
    y = y + bo_ref[...]                                       # (1, D) broadcast
    o_ref[0] = y.astype(o_ref.dtype)


def _pick_q_tile(s):
    for cand in (256, 128):
        if s % cand == 0:
            return cand
    return s


def self_attention(x, w_in, b_in, w_out, b_out, *, n_heads, causal=False):
    """Pallas TPU forward of SelfAttention.

    x: (B, S, D); w_in: (3D, D); b_in: (3D,) or (1, 3D); w_out: (D, D);
    b_out: (D,) or (1, D).  PyTorch Linear convention y = x @ W.T + b.
    """
    b, s, d = x.shape
    assert d % n_heads == 0
    dh = d // n_heads
    scale = 1.0 / math.sqrt(dh)

    tq = _pick_q_tile(s)
    nq = s // tq

    # ---- weight prep (one-time, outside the kernel) ----
    w_in_t = jnp.transpose(w_in)                              # (D, 3D)
    wq_t, wk_t, wv_t = jnp.split(w_in_t, 3, axis=1)           # (D, D) each

    def to_heads(wt):                                         # (D, D) -> (H, D, dh)
        return jnp.transpose(wt.reshape(d, n_heads, dh), (1, 0, 2))

    wq_h = (to_heads(wq_t) * scale).astype(jnp.bfloat16)      # scale folded in
    wk_h = to_heads(wk_t).astype(jnp.bfloat16)
    wv_h = to_heads(wv_t).astype(jnp.bfloat16)
    wo_h = jnp.transpose(w_out).reshape(n_heads, dh, d).astype(jnp.bfloat16)

    b_in_f = jnp.reshape(b_in, (-1,)).astype(jnp.float32)
    bq_h = (b_in_f[:d].reshape(n_heads, 1, dh) * scale)
    bk_h = b_in_f[d:2 * d].reshape(n_heads, 1, dh)
    bv_h = b_in_f[2 * d:].reshape(n_heads, 1, dh)
    bo = jnp.reshape(b_out, (1, d)).astype(jnp.float32)

    x_bf = x.astype(jnp.bfloat16)

    # ---- cost estimate & VMEM budget ----
    flops = int(8 * b * s * d * d + 4 * b * s * s * d)
    transcendentals = int(b * n_heads * s * s)
    bytes_accessed = int(x_bf.size * 2 + b * s * d * 4
                         + 2 * (wq_h.size + wk_h.size + wv_h.size + wo_h.size)
                         + 4 * (bq_h.size + bk_h.size + bv_h.size + bo.size))
    cost = pl.CostEstimate(flops=flops, transcendentals=transcendentals,
                           bytes_accessed=bytes_accessed)

    dh_pad = ((dh + 127) // 128) * 128
    vmem_est = (2 * s * d * 2                 # x slab (bf16, double-buffered)
                + 2 * tq * d * 4              # out tile (f32, double-buffered)
                + 4 * n_heads * (3 * d * dh_pad + dh * d) * 2   # weight blocks
                + 2 * n_heads * s * dh_pad * 2                  # K/V scratch
                + 6 * tq * s * 4              # scores / probs temporaries
                + 4 * tq * d * 4)             # projection temporaries
    vmem_limit = int(min(64 * 1024 * 1024,
                         max(32 * 1024 * 1024, int(vmem_est * 1.5))))

    kernel = functools.partial(_attention_kernel, n_heads=n_heads,
                               q_tile=tq, causal=causal)

    return pl.pallas_call(
        kernel,
        out_shape=jax.ShapeDtypeStruct((b, s, d), x.dtype),
        grid=(b, nq),
        in_specs=[
            pl.BlockSpec((1, s, d), lambda bi, qi: (bi, 0, 0)),          # x slab
            pl.BlockSpec((n_heads, d, dh), lambda bi, qi: (0, 0, 0)),    # Wq^T/head
            pl.BlockSpec((n_heads, d, dh), lambda bi, qi: (0, 0, 0)),    # Wk^T/head
            pl.BlockSpec((n_heads, d, dh), lambda bi, qi: (0, 0, 0)),    # Wv^T/head
            pl.BlockSpec((n_heads, dh, d), lambda bi, qi: (0, 0, 0)),    # Wo^T/head
            pl.BlockSpec((n_heads, 1, dh), lambda bi, qi: (0, 0, 0)),    # bq/head
            pl.BlockSpec((n_heads, 1, dh), lambda bi, qi: (0, 0, 0)),    # bk/head
            pl.BlockSpec((n_heads, 1, dh), lambda bi, qi: (0, 0, 0)),    # bv/head
            pl.BlockSpec((1, d), lambda bi, qi: (0, 0)),                 # b_out
        ],
        out_specs=pl.BlockSpec((1, tq, d), lambda bi, qi: (bi, qi, 0)),
        scratch_shapes=[
            pltpu.VMEM((n_heads, s, dh), jnp.bfloat16),   # K, head-major
            pltpu.VMEM((n_heads, s, dh), jnp.bfloat16),   # V, head-major
        ],
        compiler_params=pltpu.CompilerParams(
            dimension_semantics=("parallel", "arbitrary"),
            vmem_limit_bytes=vmem_limit),
        cost_estimate=cost,
    )(x_bf, wq_h, wk_h, wv_h, wo_h, bq_h, bk_h, bv_h, bo)


def self_attention_reference(x, w_in, b_in, w_out, b_out, *, n_heads, causal=False):
    """Pure-JAX f32 mirror of the PyTorch forward, for verification."""
    b, s, d = x.shape
    dh = d // n_heads
    b_in_f = jnp.reshape(b_in, (-1,))
    b_out_f = jnp.reshape(b_out, (-1,))
    qkv = jnp.einsum('bsd,ed->bse', x, w_in) + b_in_f
    q, k, v = jnp.split(qkv, 3, axis=-1)

    def to_heads(t):
        return t.reshape(b, s, n_heads, dh).transpose(0, 2, 1, 3)

    q, k, v = to_heads(q), to_heads(k), to_heads(v)
    att = jnp.einsum('bhqd,bhkd->bhqk', q, k)
    if causal:
        row = lax.broadcasted_iota(jnp.int32, (s, s), 0)
        col = lax.broadcasted_iota(jnp.int32, (s, s), 1)
        att = jnp.where(col > row, -jnp.inf, att)
    att = att / math.sqrt(dh)
    att = jax.nn.softmax(att, axis=-1)
    out = jnp.einsum('bhqk,bhkd->bhqd', att, v)
    out = out.transpose(0, 2, 1, 3).reshape(b, s, d)
    return jnp.einsum('bsd,ed->bse', out, w_out) + b_out_f


if __name__ == "__main__":
    batch, seq_len, d_embed, n_heads = 2, 512, 128, 4   # dh=32, grid=(2, 2)

    key = jax.random.PRNGKey(0)
    kx, kw1, kb1, kw2, kb2 = jax.random.split(key, 5)

    w_scale = 1.0 / math.sqrt(d_embed)
    x = jax.random.normal(kx, (batch, seq_len, d_embed), dtype=jnp.float32)
    w_in = w_scale * jax.random.normal(kw1, (3 * d_embed, d_embed), dtype=jnp.float32)
    b_in = 0.05 * jax.random.normal(kb1, (3 * d_embed,), dtype=jnp.float32)
    w_out = w_scale * jax.random.normal(kw2, (d_embed, d_embed), dtype=jnp.float32)
    b_out = 0.05 * jax.random.normal(kb2, (d_embed,), dtype=jnp.float32)

    # Non-causal path (mask=False in the PyTorch forward).
    out = jax.block_until_ready(
        self_attention(x, w_in, b_in, w_out, b_out, n_heads=n_heads, causal=False))
    ref = self_attention_reference(x, w_in, b_in, w_out, b_out,
                                   n_heads=n_heads, causal=False)
    assert out.shape == (batch, seq_len, d_embed)
    err = float(jnp.max(jnp.abs(out - ref)))
    assert err < 3e-2, f"non-causal mismatch: max abs err {err}"

    # Causal path (mask=True in the PyTorch forward).
    out_c = jax.block_until_ready(
        self_attention(x, w_in, b_in, w_out, b_out, n_heads=n_heads, causal=True))
    ref_c = self_attention_reference(x, w_in, b_in, w_out, b_out,
                                     n_heads=n_heads, causal=True)
    err_c = float(jnp.max(jnp.abs(out_c - ref_c)))
    assert err_c < 3e-2, f"causal mismatch: max abs err {err_c}"

    print("KERNEL_OK")
</pallas_src>

<mosaic_0001>
module attributes {stable_mosaic.version = 11 : i64} {
  func.func @_attention_kernel(%arg0: i32, %arg1: i32, %arg2: memref<1x512x128xbf16, #tpu.memory_space<vmem>>, %arg3: memref<4x128x32xbf16, #tpu.memory_space<vmem>>, %arg4: memref<4x128x32xbf16, #tpu.memory_space<vmem>>, %arg5: memref<4x128x32xbf16, #tpu.memory_space<vmem>>, %arg6: memref<4x32x128xbf16, #tpu.memory_space<vmem>>, %arg7: memref<4x1x32xf32, #tpu.memory_space<vmem>>, %arg8: memref<4x1x32xf32, #tpu.memory_space<vmem>>, %arg9: memref<4x1x32xf32, #tpu.memory_space<vmem>>, %arg10: memref<1x128xf32, #tpu.memory_space<vmem>>, %arg11: memref<1x256x128xf32, #tpu.memory_space<vmem>>, %arg12: memref<4x512x32xbf16, #tpu.memory_space<vmem>>, %arg13: memref<4x512x32xbf16, #tpu.memory_space<vmem>>) attributes {dimension_semantics = [#tpu.dimension_semantics<parallel>, #tpu.dimension_semantics<arbitrary>], iteration_bounds = array<i64: 2, 2>, scalar_prefetch = 0 : i64, scratch_operands = 2 : i64, tpu.core_type = #tpu.core_type<tc>, window_params = [{transform_indices = @transform_0, window_bounds = array<i64: 1, 512, 128>}, {pipeline_mode = #tpu.pipeline_mode<synchronous>, transform_indices = @transform_1, window_bounds = array<i64: 4, 128, 32>}, {pipeline_mode = #tpu.pipeline_mode<synchronous>, transform_indices = @transform_2, window_bounds = array<i64: 4, 128, 32>}, {pipeline_mode = #tpu.pipeline_mode<synchronous>, transform_indices = @transform_3, window_bounds = array<i64: 4, 128, 32>}, {pipeline_mode = #tpu.pipeline_mode<synchronous>, transform_indices = @transform_4, window_bounds = array<i64: 4, 32, 128>}, {pipeline_mode = #tpu.pipeline_mode<synchronous>, transform_indices = @transform_5, window_bounds = array<i64: 4, 1, 32>}, {pipeline_mode = #tpu.pipeline_mode<synchronous>, transform_indices = @transform_6, window_bounds = array<i64: 4, 1, 32>}, {pipeline_mode = #tpu.pipeline_mode<synchronous>, transform_indices = @transform_7, window_bounds = array<i64: 4, 1, 32>}, {pipeline_mode = #tpu.pipeline_mode<synchronous>, transform_indices = @transform_8, window_bounds = array<i64: 1, 128>}, {transform_indices = @transform_9, window_bounds = array<i64: 1, 256, 128>}]} {
    %c0_i32 = arith.constant 0 : i32
    %0 = arith.cmpi eq, %arg1, %c0_i32 : i32
    %1 = arith.extui %0 : i1 to i32
    %c0_i32_0 = arith.constant 0 : i32
    %2 = arith.cmpi ne, %1, %c0_i32_0 : i32
    scf.if %2 {
      %c0_9 = arith.constant 0 : index
      %c0_10 = arith.constant 0 : index
      %c0_11 = arith.constant 0 : index
      %17 = vector.load %arg2[%c0_9, %c0_10, %c0_11] : memref<1x512x128xbf16, #tpu.memory_space<vmem>>, vector<1x512x128xbf16>
      %18 = vector.shape_cast %17 : vector<1x512x128xbf16> to vector<512x128xbf16>
      %c0_i32_12 = arith.constant 0 : i32
      %c4_i32_13 = arith.constant 4 : i32
      %19 = arith.addi %c0_i32_12, %c4_i32_13 : i32
      %c1_i32_14 = arith.constant 1 : i32
      scf.for %arg14 = %c0_i32_12 to %19 step %c1_i32_14  : i32 {
        %20 = arith.index_cast %arg14 : i32 to index
        %c0_16 = arith.constant 0 : index
        %c0_17 = arith.constant 0 : index
        %21 = vector.load %arg4[%20, %c0_16, %c0_17] : memref<4x128x32xbf16, #tpu.memory_space<vmem>>, vector<1x128x32xbf16>
        %22 = vector.shape_cast %21 : vector<1x128x32xbf16> to vector<128x32xbf16>
        %cst_18 = arith.constant dense<0.000000e+00> : vector<512x32xf32>
        %23 = tpu.matmul %18, %22, %cst_18 {dimension_numbers = #tpu.dot_dimension_numbers<[1], [0], [0], [1], [0, 0, 1, 1], [], []>} : vector<512x128xbf16>, vector<128x32xbf16>, vector<512x32xf32> -> vector<512x32xf32>
        %24 = arith.index_cast %arg14 : i32 to index
        %c0_19 = arith.constant 0 : index
        %c0_20 = arith.constant 0 : index
        %25 = vector.load %arg8[%24, %c0_19, %c0_20] : memref<4x1x32xf32, #tpu.memory_space<vmem>>, vector<1x1x32xf32>
        %26 = vector.shape_cast %25 : vector<1x1x32xf32> to vector<1x32xf32>
        %27 = vector.broadcast %26 : vector<1x32xf32> to vector<512x32xf32>
        %28 = arith.addf %23, %27 : vector<512x32xf32>
        %29 = arith.index_cast %arg14 : i32 to index
        %c0_21 = arith.constant 0 : index
        %c0_22 = arith.constant 0 : index
        %30 = vector.load %arg5[%29, %c0_21, %c0_22] : memref<4x128x32xbf16, #tpu.memory_space<vmem>>, vector<1x128x32xbf16>
        %31 = vector.shape_cast %30 : vector<1x128x32xbf16> to vector<128x32xbf16>
        %cst_23 = arith.constant dense<0.000000e+00> : vector<512x32xf32>
        %32 = tpu.matmul %18, %31, %cst_23 {dimension_numbers = #tpu.dot_dimension_numbers<[1], [0], [0], [1], [0, 0, 1, 1], [], []>} : vector<512x128xbf16>, vector<128x32xbf16>, vector<512x32xf32> -> vector<512x32xf32>
        %33 = arith.index_cast %arg14 : i32 to index
        %c0_24 = arith.constant 0 : index
        %c0_25 = arith.constant 0 : index
        %34 = vector.load %arg9[%33, %c0_24, %c0_25] : memref<4x1x32xf32, #tpu.memory_space<vmem>>, vector<1x1x32xf32>
        %35 = vector.shape_cast %34 : vector<1x1x32xf32> to vector<1x32xf32>
        %36 = vector.broadcast %35 : vector<1x32xf32> to vector<512x32xf32>
        %37 = arith.addf %32, %36 : vector<512x32xf32>
        %38 = arith.truncf %28 : vector<512x32xf32> to vector<512x32xbf16>
        %39 = arith.index_cast %arg14 : i32 to index
        %c0_26 = arith.constant 0 : index
        %c0_27 = arith.constant 0 : index
        %40 = vector.load %arg12[%39, %c0_26, %c0_27] : memref<4x512x32xbf16, #tpu.memory_space<vmem>>, vector<1x512x32xbf16>
        %41 = vector.shape_cast %40 : vector<1x512x32xbf16> to vector<512x32xbf16>
        %42 = vector.shape_cast %38 : vector<512x32xbf16> to vector<1x512x32xbf16>
        tpu.vector_store %arg12[%39, %c0_26, %c0_27], %42 {strides = array<i32>} : memref<4x512x32xbf16, #tpu.memory_space<vmem>>, vector<1x512x32xbf16>,
        %43 = arith.truncf %37 : vector<512x32xf32> to vector<512x32xbf16>
        %44 = arith.index_cast %arg14 : i32 to index
        %c0_28 = arith.constant 0 : index
        %c0_29 = arith.constant 0 : index
        %45 = vector.load %arg13[%44, %c0_28, %c0_29] : memref<4x512x32xbf16, #tpu.memory_space<vmem>>, vector<1x512x32xbf16>
        %46 = vector.shape_cast %45 : vector<1x512x32xbf16> to vector<512x32xbf16>
        %47 = vector.shape_cast %43 : vector<512x32xbf16> to vector<1x512x32xbf16>
        tpu.vector_store %arg13[%44, %c0_28, %c0_29], %47 {strides = array<i32>} : memref<4x512x32xbf16, #tpu.memory_space<vmem>>, vector<1x512x32xbf16>,
      }
      %c4_i32_15 = arith.constant 4 : i32
    } else {
    }
    %c256_i32 = arith.constant 256 : i32
    %3 = arith.muli %arg1, %c256_i32 : i32
    %4 = tpu.assume_multiple %3, 256 : i32
    %c0 = arith.constant 0 : index
    %5 = arith.index_cast %4 : i32 to index
    %c0_1 = arith.constant 0 : index
    %6 = vector.load %arg2[%c0, %5, %c0_1] : memref<1x512x128xbf16, #tpu.memory_space<vmem>>, vector<1x256x128xbf16>
    %7 = vector.shape_cast %6 : vector<1x256x128xbf16> to vector<256x128xbf16>
    %cst = arith.constant 0.000000e+00 : f32
    %8 = vector.broadcast %cst : f32 to vector<256x128xf32>
    %c0_i32_2 = arith.constant 0 : i32
    %c4_i32 = arith.constant 4 : i32
    %9 = arith.addi %c0_i32_2, %c4_i32 : i32
    %c1_i32 = arith.constant 1 : i32
    %10 = scf.for %arg14 = %c0_i32_2 to %9 step %c1_i32 iter_args(%arg15 = %8) -> (vector<256x128xf32>)  : i32 {
      %17 = arith.index_cast %arg14 : i32 to index
      %c0_9 = arith.constant 0 : index
      %c0_10 = arith.constant 0 : index
      %18 = vector.load %arg3[%17, %c0_9, %c0_10] : memref<4x128x32xbf16, #tpu.memory_space<vmem>>, vector<1x128x32xbf16>
      %19 = vector.shape_cast %18 : vector<1x128x32xbf16> to vector<128x32xbf16>
      %cst_11 = arith.constant dense<0.000000e+00> : vector<256x32xf32>
      %20 = tpu.matmul %7, %19, %cst_11 {dimension_numbers = #tpu.dot_dimension_numbers<[1], [0], [0], [1], [0, 0, 1, 1], [], []>} : vector<256x128xbf16>, vector<128x32xbf16>, vector<256x32xf32> -> vector<256x32xf32>
      %21 = arith.index_cast %arg14 : i32 to index
      %c0_12 = arith.constant 0 : index
      %c0_13 = arith.constant 0 : index
      %22 = vector.load %arg7[%21, %c0_12, %c0_13] : memref<4x1x32xf32, #tpu.memory_space<vmem>>, vector<1x1x32xf32>
      %23 = vector.shape_cast %22 : vector<1x1x32xf32> to vector<1x32xf32>
      %24 = vector.broadcast %23 : vector<1x32xf32> to vector<256x32xf32>
      %25 = arith.addf %20, %24 : vector<256x32xf32>
      %26 = arith.index_cast %arg14 : i32 to index
      %c0_14 = arith.constant 0 : index
      %c0_15 = arith.constant 0 : index
      %27 = vector.load %arg12[%26, %c0_14, %c0_15] : memref<4x512x32xbf16, #tpu.memory_space<vmem>>, vector<1x512x32xbf16>
      %28 = vector.shape_cast %27 : vector<1x512x32xbf16> to vector<512x32xbf16>
      %29 = arith.index_cast %arg14 : i32 to index
      %c0_16 = arith.constant 0 : index
      %c0_17 = arith.constant 0 : index
      %30 = vector.load %arg13[%29, %c0_16, %c0_17] : memref<4x512x32xbf16, #tpu.memory_space<vmem>>, vector<1x512x32xbf16>
      %31 = vector.shape_cast %30 : vector<1x512x32xbf16> to vector<512x32xbf16>
      %32 = arith.truncf %25 : vector<256x32xf32> to vector<256x32xbf16>
      %cst_18 = arith.constant dense<0.000000e+00> : vector<256x512xf32>
      %33 = tpu.matmul %32, %28, %cst_18 {dimension_numbers = #tpu.dot_dimension_numbers<[1], [1], [0], [0], [0, 0, 1, 0], [], []>} : vector<256x32xbf16>, vector<512x32xbf16>, vector<256x512xf32> -> vector<256x512xf32>
      %cst_19 = arith.constant dense<0xFF800000> : vector<256xf32>
      %34 = vector.multi_reduction <maximumf>, %33, %cst_19 [1] : vector<256x512xf32> to vector<256xf32>
      %35 = vector.shape_cast %34 : vector<256xf32> to vector<256x1xf32>
      %36 = vector.broadcast %35 : vector<256x1xf32> to vector<256x512xf32>
      %37 = arith.subf %33, %36 : vector<256x512xf32>
      %38 = math.exp %37 : vector<256x512xf32>
      %cst_20 = arith.constant dense<0.000000e+00> : vector<256xf32>
      %39 = vector.multi_reduction <add>, %38, %cst_20 [1] : vector<256x512xf32> to vector<256xf32>
      %40 = vector.shape_cast %39 : vector<256xf32> to vector<256x1xf32>
      %41 = arith.truncf %38 : vector<256x512xf32> to vector<256x512xbf16>
      %cst_21 = arith.constant dense<0.000000e+00> : vector<256x32xf32>
      %42 = tpu.matmul %41, %31, %cst_21 {dimension_numbers = #tpu.dot_dimension_numbers<[1], [0], [0], [1], [0, 0, 1, 1], [], []>} : vector<256x512xbf16>, vector<512x32xbf16>, vector<256x32xf32> -> vector<256x32xf32>
      %43 = tpu.reciprocal %40 {approx = true} : vector<256x1xf32> -> vector<256x1xf32>
      %44 = vector.broadcast %43 : vector<256x1xf32> to vector<256x32xf32>
      %45 = arith.mulf %42, %44 : vector<256x32xf32>
      %46 = arith.truncf %45 : vector<256x32xf32> to vector<256x32xbf16>
      %47 = arith.index_cast %arg14 : i32 to index
      %c0_22 = arith.constant 0 : index
      %c0_23 = arith.constant 0 : index
      %48 = vector.load %arg6[%47, %c0_22, %c0_23] : memref<4x32x128xbf16, #tpu.memory_space<vmem>>, vector<1x32x128xbf16>
      %49 = vector.shape_cast %48 : vector<1x32x128xbf16> to vector<32x128xbf16>
      %cst_24 = arith.constant dense<0.000000e+00> : vector<256x128xf32>
      %50 = tpu.matmul %46, %49, %cst_24 {dimension_numbers = #tpu.dot_dimension_numbers<[1], [0], [0], [1], [0, 0, 1, 1], [], []>} : vector<256x32xbf16>, vector<32x128xbf16>, vector<256x128xf32> -> vector<256x128xf32>
      %51 = arith.addf %arg15, %50 : vector<256x128xf32>
      scf.yield %51 : vector<256x128xf32>
    }
    %c4_i32_3 = arith.constant 4 : i32
    %c0_4 = arith.constant 0 : index
    %c0_5 = arith.constant 0 : index
    %11 = vector.load %arg10[%c0_4, %c0_5] : memref<1x128xf32, #tpu.memory_space<vmem>>, vector<1x128xf32>
    %12 = vector.broadcast %11 : vector<1x128xf32> to vector<256x128xf32>
    %13 = arith.addf %10, %12 : vector<256x128xf32>
    %c0_6 = arith.constant 0 : index
    %c0_7 = arith.constant 0 : index
    %c0_8 = arith.constant 0 : index
    %14 = vector.load %arg11[%c0_6, %c0_7, %c0_8] : memref<1x256x128xf32, #tpu.memory_space<vmem>>, vector<1x256x128xf32>
    %15 = vector.shape_cast %14 : vector<1x256x128xf32> to vector<256x128xf32>
    %16 = vector.shape_cast %13 : vector<256x128xf32> to vector<1x256x128xf32>
    tpu.vector_store %arg11[%c0_6, %c0_7, %c0_8], %16 {strides = array<i32>} : memref<1x256x128xf32, #tpu.memory_space<vmem>>, vector<1x256x128xf32>,
    return
  }
  func.func @transform_0(%arg0: i32, %arg1: i32) -> (i32, i32, i32) {
    %c0_i32 = arith.constant 0 : i32
    %c0_i32_0 = arith.constant 0 : i32
    %c0_i32_1 = arith.constant 0 : i32
    return %arg0, %c0_i32, %c0_i32_0 : i32, i32, i32
  }
  func.func @transform_1(%arg0: i32, %arg1: i32) -> (i32, i32, i32) {
    %c0_i32 = arith.constant 0 : i32
    %c0_i32_0 = arith.constant 0 : i32
    %c0_i32_1 = arith.constant 0 : i32
    %c0_i32_2 = arith.constant 0 : i32
    return %c0_i32, %c0_i32_0, %c0_i32_1 : i32, i32, i32
  }
  func.func @transform_2(%arg0: i32, %arg1: i32) -> (i32, i32, i32) {
    %c0_i32 = arith.constant 0 : i32
    %c0_i32_0 = arith.constant 0 : i32
    %c0_i32_1 = arith.constant 0 : i32
    %c0_i32_2 = arith.constant 0 : i32
    return %c0_i32, %c0_i32_0, %c0_i32_1 : i32, i32, i32
  }
  func.func @transform_3(%arg0: i32, %arg1: i32) -> (i32, i32, i32) {
    %c0_i32 = arith.constant 0 : i32
    %c0_i32_0 = arith.constant 0 : i32
    %c0_i32_1 = arith.constant 0 : i32
    %c0_i32_2 = arith.constant 0 : i32
    return %c0_i32, %c0_i32_0, %c0_i32_1 : i32, i32, i32
  }
  func.func @transform_4(%arg0: i32, %arg1: i32) -> (i32, i32, i32) {
    %c0_i32 = arith.constant 0 : i32
    %c0_i32_0 = arith.constant 0 : i32
    %c0_i32_1 = arith.constant 0 : i32
    %c0_i32_2 = arith.constant 0 : i32
    return %c0_i32, %c0_i32_0, %c0_i32_1 : i32, i32, i32
  }
  func.func @transform_5(%arg0: i32, %arg1: i32) -> (i32, i32, i32) {
    %c0_i32 = arith.constant 0 : i32
    %c0_i32_0 = arith.constant 0 : i32
    %c0_i32_1 = arith.constant 0 : i32
    %c0_i32_2 = arith.constant 0 : i32
    return %c0_i32, %c0_i32_0, %c0_i32_1 : i32, i32, i32
  }
  func.func @transform_6(%arg0: i32, %arg1: i32) -> (i32, i32, i32) {
    %c0_i32 = arith.constant 0 : i32
    %c0_i32_0 = arith.constant 0 : i32
    %c0_i32_1 = arith.constant 0 : i32
    %c0_i32_2 = arith.constant 0 : i32
    return %c0_i32, %c0_i32_0, %c0_i32_1 : i32, i32, i32
  }
  func.func @transform_7(%arg0: i32, %arg1: i32) -> (i32, i32, i32) {
    %c0_i32 = arith.constant 0 : i32
    %c0_i32_0 = arith.constant 0 : i32
    %c0_i32_1 = arith.constant 0 : i32
    %c0_i32_2 = arith.constant 0 : i32
    return %c0_i32, %c0_i32_0, %c0_i32_1 : i32, i32, i32
  }
  func.func @transform_8(%arg0: i32, %arg1: i32) -> (i32, i32) {
    %c0_i32 = arith.constant 0 : i32
    %c0_i32_0 = arith.constant 0 : i32
    %c0_i32_1 = arith.constant 0 : i32
    return %c0_i32, %c0_i32_0 : i32, i32
  }
  func.func @transform_9(%arg0: i32, %arg1: i32) -> (i32, i32, i32) {
    %c0_i32 = arith.constant 0 : i32
    %c0_i32_0 = arith.constant 0 : i32
    return %arg0, %arg1, %c0_i32 : i32, i32, i32
  }
}

</mosaic_0001>

<llo_original>
// kernel: tpu_custom_call.1
$region0: #{tpu_custom_call.1}
  #allocation0 [shape = 'u32[]', space=smem, size = 0x4, offset = 0x4, fixed_abs, tag = 'smem constant byte address 0x4 - core index']
  #allocation1 [shape = 'u32[72,128]{1,0:T(1,128)}', space=vmem, size = 0x9000, scoped, tag = 'internal scratch']
  #allocation2 [shape = 'bf16[4,512,32]{2,1,0:T(8,128)(2,1)}', space=vmem, size = 0x80000, scoped, tag = 'scratch operand']
  #allocation3 [shape = 'bf16[4,512,32]{2,1,0:T(8,128)(2,1)}', space=vmem, size = 0x80000, scoped, tag = 'scratch operand']
  %s0 = inlined_call_operand.vmem [shape: bf16[2,512,128], index: 0, kind: input, shape index: {}]
  %s1 = inlined_call_operand.vmem [shape: bf16[4,128,32], index: 1, kind: input, shape index: {}]
  %s2 = inlined_call_operand.vmem [shape: bf16[4,128,32], index: 2, kind: input, shape index: {}]
  %s3 = inlined_call_operand.vmem [shape: bf16[4,128,32], index: 3, kind: input, shape index: {}]
  %s4 = inlined_call_operand.vmem [shape: bf16[4,32,128], index: 4, kind: input, shape index: {}]
  %s5 = inlined_call_operand.vmem [shape: f32[4,1,32], index: 5, kind: input, shape index: {}]
  %s6 = inlined_call_operand.vmem [shape: f32[4,1,32], index: 6, kind: input, shape index: {}]
  %s7 = inlined_call_operand.vmem [shape: f32[4,1,32], index: 7, kind: input, shape index: {}]
  %s8 = inlined_call_operand.vmem [shape: f32[1,128], index: 8, kind: input, shape index: {}]
  %s9 = inlined_call_operand.hbm [shape: f32[2,512,128], index: 9, kind: output, shape index: {}]
  %s10 = sld [smem:[#allocation0]]
  $region87: #{tpu_custom_call.1} parent=0
    _
  %s12 = ssub.s32 1, %s10
  %s13 = scalar_select 0, %s12, %s10
  $region1: #{tpu_custom_call.1} parent=0
    #allocation4 [shape = 'u8[262144]{0}', space=vmem, size = 0x40000, scoped, tag = 'output window, operand 0']
    #allocation5 [shape = 's32[2]{0}', space=sflag, size = 0x8, scoped, tag = 'scoped memory for tpu_custom_call.1']
    %14 = vsyncpa [#allocation5], 0
    %s15 = scalar_lea.sflag [#allocation5], 1
    %16 = vsyncpa %s15, 0
    loop: start=0, step=1, limit=6
    $region2: #{tpu_custom_call.1} parent=1 // loop_pre_header
      _
    $region3: #{tpu_custom_call.1} parent=1 // loop_header
      %s18 = sphi 0, %s22
      %p19 = scmp.ge.s32.totalorder %s18, 6
      %s25 = sphi 0, %s37
      %s26 = sphi 0, %s33
      %s27 = sphi 0, %s25
      %s28 = sphi 0, %s26
      %s29 = sphi 0, %s27
      %s30 = sphi 0, %s28
      %s40 = sphi 0, %s42
      %s43 = sphi 0, %s40
      %s44 = sphi 0, %s43
      %s60 = sphi 0, %s44
      %s64 = sphi 0, %s64
      %s66 = sphi 0, %s64
      %s67 = sphi 0, %s66
      %s81 = sphi 0, %s67
      %s85 = sphi 0, %s85
      %s87 = sphi 0, %s85
      %s88 = sphi 0, %s87
      %s102 = sphi 0, %s88
      %s106 = sphi 0, %s106
      %s108 = sphi 0, %s106
      %s109 = sphi 0, %s108
      %s123 = sphi 0, %s109
      %s127 = sphi 0, %s127
      %s129 = sphi 0, %s127
      %s130 = sphi 0, %s129
      %s144 = sphi 0, %s130
      %s148 = sphi 0, %s148
      %s150 = sphi 0, %s148
      %s151 = sphi 0, %s150
      %s165 = sphi 0, %s151
      %s169 = sphi 0, %s169
      %s171 = sphi 0, %s169
      %s172 = sphi 0, %s171
      %s186 = sphi 0, %s172
      %s190 = sphi 0, %s190
      %s192 = sphi 0, %s190
      %s193 = sphi 0, %s192
      %s207 = sphi 0, %s193
      %s211 = sphi 0, %s211
      %s213 = sphi 0, %s211
      %s214 = sphi 0, %s213
      %s228 = sphi 0, %s214
      %s236 = sphi 0, %s238
      %s239 = sphi 0, %s236
      %s240 = sphi 0, %s239
      %s256 = sphi 0, %s240
    $region4: #{tpu_custom_call.1} parent=1 // loop_header_branch
      %21 = sbr.rel (%p19) target = $region8
    $region5: #{tpu_custom_call.1} parent=1 // loop_body
      %s23 = ssub.s32 %s18, 1
      %s24 = ssub.s32 %s18, 2
      %s31 = sadd.s32 1, %s26
      %p32 = scmp.ge.s32.totalorder %s31, 2
      %s33 = scalar_select %p32, 0, %s31
      %s34 = sadd.s32 1, %s25
      %s35 = scalar_select %p32, %s34, %s25
      %p36 = scmp.ge.s32.totalorder %s35, 2
      %s37 = scalar_select %p36, 0, %s35
      %s38 = ssub.s32 %s25, %s37
      %p39 = scmp.eq.s32.totalorder %s38, 0
      %s41 = sadd.s32 %s40, 1
      %s42 = scalar_select %p39, %s40, %s41
      %p45 = pneg %p39
      %p46 = scmp.eq.s32.totalorder %s18, 3
      %p47 = por %p45, %p46
      %p48 = scmp.ne.s32.totalorder %s40, %s43
      %p49 = scmp.eq.s32.totalorder %s18, 0
      %p50 = por %p48, %p49
      %p51 = scmp.ne.s32.totalorder %s40, %s43
      %p52 = scmp.eq.s32.totalorder %s23, 3
      %p53 = por %p51, %p52
      %p54 = scmp.ne.s32.totalorder %s43, %s44
      %p55 = scmp.eq.s32.totalorder %s23, 0
      %p56 = por %p54, %p55
      %p57 = scmp.ne.s32.totalorder %s43, %s44
      %p58 = scmp.eq.s32.totalorder %s24, 3
      %p59 = por %p57, %p58
      %p61 = scmp.ne.s32.totalorder %s44, %s60
      %p62 = scmp.eq.s32.totalorder %s24, 0
      %p63 = por %p61, %p62
      %s65 = sadd.s32 %s64, 1
      %p68 = scmp.eq.s32.totalorder %s18, 3
      %p69 = scmp.ne.s32.totalorder %s64, %s66
      %p70 = scmp.eq.s32.totalorder %s18, 0
      %p71 = por %p69, %p70
      %p72 = scmp.ne.s32.totalorder %s64, %s66
      %p73 = scmp.eq.s32.totalorder %s23, 3
      %p74 = por %p72, %p73
      %p75 = scmp.ne.s32.totalorder %s66, %s67
      %p76 = scmp.eq.s32.totalorder %s23, 0
      %p77 = por %p75, %p76
      %p78 = scmp.ne.s32.totalorder %s66, %s67
      %p79 = scmp.eq.s32.totalorder %s24, 3
      %p80 = por %p78, %p79
      %p82 = scmp.ne.s32.totalorder %s67, %s81
      %p83 = scmp.eq.s32.totalorder %s24, 0
      %p84 = por %p82, %p83
      %s86 = sadd.s32 %s85, 1
      %p89 = scmp.eq.s32.totalorder %s18, 3
      %p90 = scmp.ne.s32.totalorder %s85, %s87
      %p91 = scmp.eq.s32.totalorder %s18, 0
      %p92 = por %p90, %p91
      %p93 = scmp.ne.s32.totalorder %s85, %s87
      %p94 = scmp.eq.s32.totalorder %s23, 3
      %p95 = por %p93, %p94
      %p96 = scmp.ne.s32.totalorder %s87, %s88
      %p97 = scmp.eq.s32.totalorder %s23, 0
      %p98 = por %p96, %p97
      %p99 = scmp.ne.s32.totalorder %s87, %s88
      %p100 = scmp.eq.s32.totalorder %s24, 3
      %p101 = por %p99, %p100
      %p103 = scmp.ne.s32.totalorder %s88, %s102
      %p104 = scmp.eq.s32.totalorder %s24, 0
      %p105 = por %p103, %p104
      %s107 = sadd.s32 %s106, 1
      %p110 = scmp.eq.s32.totalorder %s18, 3
      %p111 = scmp.ne.s32.totalorder %s106, %s108
      %p112 = scmp.eq.s32.totalorder %s18, 0
      %p113 = por %p111, %p112
      %p114 = scmp.ne.s32.totalorder %s106, %s108
      %p115 = scmp.eq.s32.totalorder %s23, 3
      %p116 = por %p114, %p115
      %p117 = scmp.ne.s32.totalorder %s108, %s109
      %p118 = scmp.eq.s32.totalorder %s23, 0
      %p119 = por %p117, %p118
      %p120 = scmp.ne.s32.totalorder %s108, %s109
      %p121 = scmp.eq.s32.totalorder %s24, 3
      %p122 = por %p120, %p121
      %p124 = scmp.ne.s32.totalorder %s109, %s123
      %p125 = scmp.eq.s32.totalorder %s24, 0
      %p126 = por %p124, %p125
      %s128 = sadd.s32 %s127, 1
      %p131 = scmp.eq.s32.totalorder %s18, 3
      %p132 = scmp.ne.s32.totalorder %s127, %s129
      %p133 = scmp.eq.s32.totalorder %s18, 0
      %p134 = por %p132, %p133
      %p135 = scmp.ne.s32.totalorder %s127, %s129
      %p136 = scmp.eq.s32.totalorder %s23, 3
      %p137 = por %p135, %p136
      %p138 = scmp.ne.s32.totalorder %s129, %s130
      %p139 = scmp.eq.s32.totalorder %s23, 0
      %p140 = por %p138, %p139
      %p141 = scmp.ne.s32.totalorder %s129, %s130
      %p142 = scmp.eq.s32.totalorder %s24, 3
      %p143 = por %p141, %p142
      %p145 = scmp.ne.s32.totalorder %s130, %s144
      %p146 = scmp.eq.s32.totalorder %s24, 0
      %p147 = por %p145, %p146
      %s149 = sadd.s32 %s148, 1
      %p152 = scmp.eq.s32.totalorder %s18, 3
      %p153 = scmp.ne.s32.totalorder %s148, %s150
      %p154 = scmp.eq.s32.totalorder %s18, 0
      %p155 = por %p153, %p154
      %p156 = scmp.ne.s32.totalorder %s148, %s150
      %p157 = scmp.eq.s32.totalorder %s23, 3
      %p158 = por %p156, %p157
      %p159 = scmp.ne.s32.totalorder %s150, %s151
      %p160 = scmp.eq.s32.totalorder %s23, 0
      %p161 = por %p159, %p160
      %p162 = scmp.ne.s32.totalorder %s150, %s151
      %p163 = scmp.eq.s32.totalorder %s24, 3
      %p164 = por %p162, %p163
      %p166 = scmp.ne.s32.totalorder %s151, %s165
      %p167 = scmp.eq.s32.totalorder %s24, 0
      %p168 = por %p166, %p167
      %s170 = sadd.s32 %s169, 1
      %p173 = scmp.eq.s32.totalorder %s18, 3
      %p174 = scmp.ne.s32.totalorder %s169, %s171
      %p175 = scmp.eq.s32.totalorder %s18, 0
      %p176 = por %p174, %p175
      %p177 = scmp.ne.s32.totalorder %s169, %s171
      %p178 = scmp.eq.s32.totalorder %s23, 3
      %p179 = por %p177, %p178
      %p180 = scmp.ne.s32.totalorder %s171, %s172
      %p181 = scmp.eq.s32.totalorder %s23, 0
      %p182 = por %p180, %p181
      %p183 = scmp.ne.s32.totalorder %s171, %s172
      %p184 = scmp.eq.s32.totalorder %s24, 3
      %p185 = por %p183, %p184
      %p187 = scmp.ne.s32.totalorder %s172, %s186
      %p188 = scmp.eq.s32.totalorder %s24, 0
      %p189 = por %p187, %p188
      %s191 = sadd.s32 %s190, 1
      %p194 = scmp.eq.s32.totalorder %s18, 3
      %p195 = scmp.ne.s32.totalorder %s190, %s192
      %p196 = scmp.eq.s32.totalorder %s18, 0
      %p197 = por %p195, %p196
      %p198 = scmp.ne.s32.totalorder %s190, %s192
      %p199 = scmp.eq.s32.totalorder %s23, 3
      %p200 = por %p198, %p199
      %p201 = scmp.ne.s32.totalorder %s192, %s193
      %p202 = scmp.eq.s32.totalorder %s23, 0
      %p203 = por %p201, %p202
      %p204 = scmp.ne.s32.totalorder %s192, %s193
      %p205 = scmp.eq.s32.totalorder %s24, 3
      %p206 = por %p204, %p205
      %p208 = scmp.ne.s32.totalorder %s193, %s207
      %p209 = scmp.eq.s32.totalorder %s24, 0
      %p210 = por %p208, %p209
      %s212 = sadd.s32 %s211, 1
      %p215 = scmp.eq.s32.totalorder %s18, 3
      %p216 = scmp.ne.s32.totalorder %s211, %s213
      %p217 = scmp.eq.s32.totalorder %s18, 0
      %p218 = por %p216, %p217
      %p219 = scmp.ne.s32.totalorder %s211, %s213
      %p220 = scmp.eq.s32.totalorder %s23, 3
      %p221 = por %p219, %p220
      %p222 = scmp.ne.s32.totalorder %s213, %s214
      %p223 = scmp.eq.s32.totalorder %s23, 0
      %p224 = por %p222, %p223
      %p225 = scmp.ne.s32.totalorder %s213, %s214
      %p226 = scmp.eq.s32.totalorder %s24, 3
      %p227 = por %p225, %p226
      %p229 = scmp.ne.s32.totalorder %s214, %s228
      %p230 = scmp.eq.s32.totalorder %s24, 0
      %p231 = por %p229, %p230
      %s232 = ssub.s32 %s25, %s37
      %s233 = ssub.s32 %s26, %s33
      %s234 = sor.u32 %s232, %s233
      %p235 = scmp.eq.s32.totalorder %s234, 0
      %s237 = sadd.s32 %s236, 1
      %s238 = scalar_select %p235, %s236, %s237
      %p241 = pneg %p235
      %p242 = scmp.eq.s32.totalorder %s18, 3
      %p243 = por %p241, %p242
      %p244 = scmp.ne.s32.totalorder %s236, %s239
      %p245 = scmp.eq.s32.totalorder %s18, 0
      %p246 = por %p244, %p245
      %p247 = scmp.ne.s32.totalorder %s236, %s239
      %p248 = scmp.eq.s32.totalorder %s23, 3
      %p249 = por %p247, %p248
      %p250 = scmp.ne.s32.totalorder %s239, %s240
      %p251 = scmp.eq.s32.totalorder %s23, 0
      %p252 = por %p250, %p251
      %p253 = scmp.ne.s32.totalorder %s239, %s240
      %p254 = scmp.eq.s32.totalorder %s24, 3
      %p255 = por %p253, %p254
      %p257 = scmp.ne.s32.totalorder %s240, %s256
      %p258 = scmp.eq.s32.totalorder %s24, 0
      %p259 = por %p257, %p258
      %p260 = scmp.le.s32.totalorder 1, %s18
      %p261 = scmp.lt.s32.totalorder %s18, 5
      %p262 = pnand %p260, %p261
      %p263 = pneg %p262
      // Predicated region
      $region9: #{tpu_custom_call.1} parent=5 // pred_check
        _
      $region10: #{tpu_custom_call.1} parent=5 // pred_check_branch
        %265 = sbr.rel (%p262) target = $region12
      $region11: #{tpu_custom_call.1} parent=5 // pred_region
        %s266 = ssub.s32 %s18, 1
        // Predicated region
        $region13: #{tpu_custom_call.1} parent=11 // pred_check
          %p267 = pneg %p77
        $region14: #{tpu_custom_call.1} parent=11 // pred_check_branch
          %269 = sbr.rel (%p267) target = $region16
        $region15: #{tpu_custom_call.1} parent=11 // pred_region
          _
        $region16: #{tpu_custom_call.1} parent=11 // pred_fallthru
          _
        // Predicated region
        $region17: #{tpu_custom_call.1} parent=11 // pred_check
          %p270 = pneg %p98
        $region18: #{tpu_custom_call.1} parent=11 // pred_check_branch
          %272 = sbr.rel (%p270) target = $region20
        $region19: #{tpu_custom_call.1} parent=11 // pred_region
          _
        $region20: #{tpu_custom_call.1} parent=11 // pred_fallthru
          _
        // Predicated region
        $region21: #{tpu_custom_call.1} parent=11 // pred_check
          %p273 = pneg %p119
        $region22: #{tpu_custom_call.1} parent=11 // pred_check_branch
          %275 = sbr.rel (%p273) target = $region24
        $region23: #{tpu_custom_call.1} parent=11 // pred_region
          _
        $region24: #{tpu_custom_call.1} parent=11 // pred_fallthru
          _
        // Predicated region
        $region25: #{tpu_custom_call.1} parent=11 // pred_check
          %p276 = pneg %p140
        $region26: #{tpu_custom_call.1} parent=11 // pred_check_branch
          %278 = sbr.rel (%p276) target = $region28
        $region27: #{tpu_custom_call.1} parent=11 // pred_region
          _
        $region28: #{tpu_custom_call.1} parent=11 // pred_fallthru
          _
        // Predicated region
        $region29: #{tpu_custom_call.1} parent=11 // pred_check
          %p279 = pneg %p161
        $region30: #{tpu_custom_call.1} parent=11 // pred_check_branch
          %281 = sbr.rel (%p279) target = $region32
        $region31: #{tpu_custom_call.1} parent=11 // pred_region
          _
        $region32: #{tpu_custom_call.1} parent=11 // pred_fallthru
          _
        // Predicated region
        $region33: #{tpu_custom_call.1} parent=11 // pred_check
          %p282 = pneg %p182
        $region34: #{tpu_custom_call.1} parent=11 // pred_check_branch
          %284 = sbr.rel (%p282) target = $region36
        $region35: #{tpu_custom_call.1} parent=11 // pred_region
          _
        $region36: #{tpu_custom_call.1} parent=11 // pred_fallthru
          _
        // Predicated region
        $region37: #{tpu_custom_call.1} parent=11 // pred_check
          %p285 = pneg %p203
        $region38: #{tpu_custom_call.1} parent=11 // pred_check_branch
          %287 = sbr.rel (%p285) target = $region40
        $region39: #{tpu_custom_call.1} parent=11 // pred_region
          _
        $region40: #{tpu_custom_call.1} parent=11 // pred_fallthru
          _
        // Predicated region
        $region41: #{tpu_custom_call.1} parent=11 // pred_check
          %p288 = pneg %p224
        $region42: #{tpu_custom_call.1} parent=11 // pred_check_branch
          %290 = sbr.rel (%p288) target = $region44
        $region43: #{tpu_custom_call.1} parent=11 // pred_region
          _
        $region44: #{tpu_custom_call.1} parent=11 // pred_fallthru
          _
      $region12: #{tpu_custom_call.1} parent=5 // pred_fallthru
        _
      %p291 = scmp.lt.s32.totalorder %s18, 4
      // Predicated region
      $region45: #{tpu_custom_call.1} parent=5 // pred_check
        %p292 = pneg %p291
      $region46: #{tpu_custom_call.1} parent=5 // pred_check_branch
        %294 = sbr.rel (%p292) target = $region48
      $region47: #{tpu_custom_call.1} parent=5 // pred_region
        // Predicated region
        $region49: #{tpu_custom_call.1} parent=47 // pred_check
          %p295 = pneg %p50
        $region50: #{tpu_custom_call.1} parent=47 // pred_check_branch
          %297 = sbr.rel (%p295) target = $region52
        $region51: #{tpu_custom_call.1} parent=47 // pred_region
          %p298 = scmp.lt.s32.totalorder %s25, 1
          %s299 = scalar_select %p298, %s25, 1
          %s300 = smul.addr %s299, 64
          %s301 = smul.addr %s300, 4
          %s302 = scalar_lea.vmem %s0, %s301
        $region52: #{tpu_custom_call.1} parent=47 // pred_fallthru
          _
      $region48: #{tpu_custom_call.1} parent=5 // pred_fallthru
        _
      %p303 = scmp.le.s32.totalorder 1, %s18
      %p304 = scmp.lt.s32.totalorder %s18, 5
      %p305 = pnand %p303, %p304
      %p306 = pneg %p305
      // Predicated region
      $region53: #{tpu_custom_call.1} parent=5 // pred_check
        _
      $region54: #{tpu_custom_call.1} parent=5 // pred_check_branch
        %308 = sbr.rel (%p305) target = $region56
      $region55: #{tpu_custom_call.1} parent=5 // pred_region
        %s309 = ssub.s32 %s18, 1
        %p310 = scmp.lt.s32.totalorder %s27, 1
        %s311 = scalar_select %p310, %s27, 1
        %s312 = smul.addr %s311, 64
        %s313 = smul.addr %s312, 4
        %s314 = scalar_lea.vmem %s0, %s313
        %p315 = pneg %p56
        %p316 = pneg %p53
        %p317 = pneg %p77
        %p318 = pneg %p74
        %p319 = pneg %p98
        %p320 = pneg %p95
        %p321 = pneg %p119
        %p322 = pneg %p116
        %p323 = pneg %p140
        %p324 = pneg %p137
        %p325 = pneg %p161
        %p326 = pneg %p158
        %p327 = pneg %p182
        %p328 = pneg %p179
        %p329 = pneg %p203
        %p330 = pneg %p200
        %p331 = pneg %p224
        %p332 = pneg %p221
        %p333 = pneg %p252
        %p334 = pneg %p249
        %s335 = sand.u32 %s239, 1
        %s336 = scalar_lea.sflag [#allocation5], %s335
        %s337 = sand.u32 %s239, 1
        %s338 = smul.addr %s337, 256
        %s339 = scalar_lea.vmem [#allocation4], %s338
        %p340 = scmp.lt.s32.totalorder %s27, 1
        %s341 = scalar_select %p340, %s27, 1
        %s342 = smul.addr %s341, 64
        %s343 = smul.addr %s342, 4
        %s344 = scalar_lea.vmem %s0, %s343
        %s345 = smul.u32 32, %s28
        %p347 = scmp.eq.s32.totalorder %s28, 0
        // Predicated region
        $region57: #{tpu_custom_call.1} parent=55 // pred_check
          %p348 = pneg %p347
        $region58: #{tpu_custom_call.1} parent=55 // pred_check_branch
          %350 = sbr.rel (%p348) target = $region60
        $region59: #{tpu_custom_call.1} parent=55 // pred_region
          %v351 = vld [vmem:[%s344] sm:$0xf]
          %v352 = vld [vmem:[%s344 + $0x4] sm:$0xf]
          %v353 = vld [vmem:[%s344 + $0x8] sm:$0xf]
          %v354 = vld [vmem:[%s344 + $0xc] sm:$0xf]
          %v355 = vld [vmem:[%s344 + $0x10] sm:$0xf]
          %v356 = vld [vmem:[%s344 + $0x14] sm:$0xf]
          %v357 = vld [vmem:[%s344 + $0x18] sm:$0xf]
          %v358 = vld [vmem:[%s344 + $0x1c] sm:$0xf]
          %v359 = vld [vmem:[%s344 + $0x20] sm:$0xf]
          %v360 = vld [vmem:[%s344 + $0x24] sm:$0xf]
          %v361 = vld [vmem:[%s344 + $0x28] sm:$0xf]
          %v362 = vld [vmem:[%s344 + $0x2c] sm:$0xf]
          %v363 = vld [vmem:[%s344 + $0x30] sm:$0xf]
          %v364 = vld [vmem:[%s344 + $0x34] sm:$0xf]
          %v365 = vld [vmem:[%s344 + $0x38] sm:$0xf]
          %v366 = vld [vmem:[%s344 + $0x3c] sm:$0xf]
          %v367 = vld [vmem:[%s344 + $0x40] sm:$0xf]
          %v368 = vld [vmem:[%s344 + $0x44] sm:$0xf]
          %v369 = vld [vmem:[%s344 + $0x48] sm:$0xf]
          %v370 = vld [vmem:[%s344 + $0x4c] sm:$0xf]
          %v371 = vld [vmem:[%s344 + $0x50] sm:$0xf]
          %v372 = vld [vmem:[%s344 + $0x54] sm:$0xf]
          %v373 = vld [vmem:[%s344 + $0x58] sm:$0xf]
          %v374 = vld [vmem:[%s344 + $0x5c] sm:$0xf]
          %v375 = vld [vmem:[%s344 + $0x60] sm:$0xf]
          %v376 = vld [vmem:[%s344 + $0x64] sm:$0xf]
          %v377 = vld [vmem:[%s344 + $0x68] sm:$0xf]
          %v378 = vld [vmem:[%s344 + $0x6c] sm:$0xf]
          %v379 = vld [vmem:[%s344 + $0x70] sm:$0xf]
          %v380 = vld [vmem:[%s344 + $0x74] sm:$0xf]
          %v381 = vld [vmem:[%s344 + $0x78] sm:$0xf]
          %v382 = vld [vmem:[%s344 + $0x7c] sm:$0xf]
          %v383 = vld [vmem:[%s344 + $0x80] sm:$0xf]
          %v384 = vld [vmem:[%s344 + $0x84] sm:$0xf]
          %v385 = vld [vmem:[%s344 + $0x88] sm:$0xf]
          %v386 = vld [vmem:[%s344 + $0x8c] sm:$0xf]
          %v387 = vld [vmem:[%s344 + $0x90] sm:$0xf]
          %v388 = vld [vmem:[%s344 + $0x94] sm:$0xf]
          %v389 = vld [vmem:[%s344 + $0x98] sm:$0xf]
          %v390 = vld [vmem:[%s344 + $0x9c] sm:$0xf]
          %v391 = vld [vmem:[%s344 + $0xa0] sm:$0xf]
          %v392 = vld [vmem:[%s344 + $0xa4] sm:$0xf]
          %v393 = vld [vmem:[%s344 + $0xa8] sm:$0xf]
          %v394 = vld [vmem:[%s344 + $0xac] sm:$0xf]
          %v395 = vld [vmem:[%s344 + $0xb0] sm:$0xf]
          %v396 = vld [vmem:[%s344 + $0xb4] sm:$0xf]
          %v397 = vld [vmem:[%s344 + $0xb8] sm:$0xf]
          %v398 = vld [vmem:[%s344 + $0xbc] sm:$0xf]
          %v399 = vld [vmem:[%s344 + $0xc0] sm:$0xf]
          %v400 = vld [vmem:[%s344 + $0xc4] sm:$0xf]
          %v401 = vld [vmem:[%s344 + $0xc8] sm:$0xf]
          %v402 = vld [vmem:[%s344 + $0xcc] sm:$0xf]
          %v403 = vld [vmem:[%s344 + $0xd0] sm:$0xf]
          %v404 = vld [vmem:[%s344 + $0xd4] sm:$0xf]
          %v405 = vld [vmem:[%s344 + $0xd8] sm:$0xf]
          %v406 = vld [vmem:[%s344 + $0xdc] sm:$0xf]
          %v407 = vld [vmem:[%s344 + $0xe0] sm:$0xf]
          %v408 = vld [vmem:[%s344 + $0xe4] sm:$0xf]
          %v409 = vld [vmem:[%s344 + $0xe8] sm:$0xf]
          %v410 = vld [vmem:[%s344 + $0xec] sm:$0xf]
          %v411 = vld [vmem:[%s344 + $0xf0] sm:$0xf]
          %v412 = vld [vmem:[%s344 + $0xf4] sm:$0xf]
          %v413 = vld [vmem:[%s344 + $0xf8] sm:$0xf]
          %v414 = vld [vmem:[%s344 + $0xfc] sm:$0xf]
          loop: start=0, step=1, limit=4
          $region61: #{tpu_custom_call.1} parent=59 // loop_pre_header
            _
          $region62: #{tpu_custom_call.1} parent=59 // loop_header
            %s416 = sphi 0, %s420
            %p417 = scmp.ge.s32.totalorder %s416, 4
          $region63: #{tpu_custom_call.1} parent=59 // loop_header_branch
            %419 = sbr.rel (%p417) target = $region67
          $region64: #{tpu_custom_call.1} parent=59 // loop_body
            %s421 = smul.u32 %s416, 16
            %s422 = smul.addr %s421, 4
            %s423 = scalar_lea.vmem %s2, %s422
            %v424 = vld [vmem:[%s423] sm:$0xf]
            %v425 = vld [vmem:[%s423 + $0x4] sm:$0xf]
            %v426 = vld [vmem:[%s423 + $0x8] sm:$0xf]
            %v427 = vld [vmem:[%s423 + $0xc] sm:$0xf]
            %v428 = vld [vmem:[%s423 + $0x10] sm:$0xf]
            %v429 = vld [vmem:[%s423 + $0x14] sm:$0xf]
            %v430 = vld [vmem:[%s423 + $0x18] sm:$0xf]
            %v431 = vld [vmem:[%s423 + $0x1c] sm:$0xf]
            %v432 = vld [vmem:[%s423 + $0x20] sm:$0xf]
            %v433 = vld [vmem:[%s423 + $0x24] sm:$0xf]
            %v434 = vld [vmem:[%s423 + $0x28] sm:$0xf]
            %v435 = vld [vmem:[%s423 + $0x2c] sm:$0xf]
            %v436 = vld [vmem:[%s423 + $0x30] sm:$0xf]
            %v437 = vld [vmem:[%s423 + $0x34] sm:$0xf]
            %v438 = vld [vmem:[%s423 + $0x38] sm:$0xf]
            %v439 = vld [vmem:[%s423 + $0x3c] sm:$0xf]
            %s440 = scalar_lea.vmem %s6, %s416
            %v441 = vld [vmem:[%s440] sm:$0x1]
            %v443 = vperm.slane %v441, 0
            %v509 = vunpack.c.l.b16 %v351
            %v510 = vunpack.c.l.b16 %v352
            %v511 = vunpack.c.l.b16 %v353
            %v512 = vunpack.c.l.b16 %v354
            %v513 = vunpack.c.l.b16 %v355
            %v514 = vunpack.c.l.b16 %v356
            %v515 = vunpack.c.l.b16 %v357
            %v516 = vunpack.c.l.b16 %v358
            %v517 = vunpack.c.l.b16 %v359
            %v518 = vunpack.c.l.b16 %v360
            %v519 = vunpack.c.l.b16 %v361
            %v520 = vunpack.c.l.b16 %v362
            %v521 = vunpack.c.l.b16 %v363
            %v522 = vunpack.c.l.b16 %v364
            %v523 = vunpack.c.l.b16 %v365
            %v524 = vunpack.c.l.b16 %v366
            %v525 = vunpack.c.l.b16 %v367
            %v526 = vunpack.c.l.b16 %v368
            %v527 = vunpack.c.l.b16 %v369
            %v528 = vunpack.c.l.b16 %v370
            %v529 = vunpack.c.l.b16 %v371
            %v530 = vunpack.c.l.b16 %v372
            %v531 = vunpack.c.l.b16 %v373
            %v532 = vunpack.c.l.b16 %v374
            %v533 = vunpack.c.l.b16 %v375
            %v534 = vunpack.c.l.b16 %v376
            %v535 = vunpack.c.l.b16 %v377
            %v536 = vunpack.c.l.b16 %v378
            %v537 = vunpack.c.l.b16 %v379
            %v538 = vunpack.c.l.b16 %v380
            %v539 = vunpack.c.l.b16 %v381
            %v540 = vunpack.c.l.b16 %v382
            %v541 = vunpack.c.l.b16 %v383
            %v542 = vunpack.c.l.b16 %v384
            %v543 = vunpack.c.l.b16 %v385
            %v544 = vunpack.c.l.b16 %v386
            %v545 = vunpack.c.l.b16 %v387
            %v546 = vunpack.c.l.b16 %v388
            %v547 = vunpack.c.l.b16 %v389
            %v548 = vunpack.c.l.b16 %v390
            %v549 = vunpack.c.l.b16 %v391
            %v550 = vunpack.c.l.b16 %v392
            %v551 = vunpack.c.l.b16 %v393
            %v552 = vunpack.c.l.b16 %v394
            %v553 = vunpack.c.l.b16 %v395
            %v554 = vunpack.c.l.b16 %v396
            %v555 = vunpack.c.l.b16 %v397
            %v556 = vunpack.c.l.b16 %v398
            %v557 = vunpack.c.l.b16 %v399
            %v558 = vunpack.c.l.b16 %v400
            %v559 = vunpack.c.l.b16 %v401
            %v560 = vunpack.c.l.b16 %v402
            %v561 = vunpack.c.l.b16 %v403
            %v562 = vunpack.c.l.b16 %v404
            %v563 = vunpack.c.l.b16 %v405
            %v564 = vunpack.c.l.b16 %v406
            %v565 = vunpack.c.l.b16 %v407
            %v566 = vunpack.c.l.b16 %v408
            %v567 = vunpack.c.l.b16 %v409
            %v568 = vunpack.c.l.b16 %v410
            %v569 = vunpack.c.l.b16 %v411
            %v570 = vunpack.c.l.b16 %v412
            %v571 = vunpack.c.l.b16 %v413
            %v572 = vunpack.c.l.b16 %v414
            %v573 = vpack.c.b16 %v510, %v509
            %v574 = vpack.c.b16 %v512, %v511
            %v575 = vpack.c.b16 %v514, %v513
            %v576 = vpack.c.b16 %v516, %v515
            %v577 = vpack.c.b16 %v518, %v517
            %v578 = vpack.c.b16 %v520, %v519
            %v579 = vpack.c.b16 %v522, %v521
            %v580 = vpack.c.b16 %v524, %v523
            %v581 = vpack.c.b16 %v526, %v525
            %v582 = vpack.c.b16 %v528, %v527
            %v583 = vpack.c.b16 %v530, %v529
            %v584 = vpack.c.b16 %v532, %v531
            %v585 = vpack.c.b16 %v534, %v533
            %v586 = vpack.c.b16 %v536, %v535
            %v587 = vpack.c.b16 %v538, %v537
            %v588 = vpack.c.b16 %v540, %v539
            %v589 = vpack.c.b16 %v542, %v541
            %v590 = vpack.c.b16 %v544, %v543
            %v591 = vpack.c.b16 %v546, %v545
            %v592 = vpack.c.b16 %v548, %v547
            %v593 = vpack.c.b16 %v550, %v549
            %v594 = vpack.c.b16 %v552, %v551
            %v595 = vpack.c.b16 %v554, %v553
            %v596 = vpack.c.b16 %v556, %v555
            %v597 = vpack.c.b16 %v558, %v557
            %v598 = vpack.c.b16 %v560, %v559
            %v599 = vpack.c.b16 %v562, %v561
            %v600 = vpack.c.b16 %v564, %v563
            %v601 = vpack.c.b16 %v566, %v565
            %v602 = vpack.c.b16 %v568, %v567
            %v603 = vpack.c.b16 %v570, %v569
            %v604 = vpack.c.b16 %v572, %v571
            %v653 = vunpack.c.l.b16 %v424
            %v654 = vunpack.c.l.b16 %v425
            %v655 = vunpack.c.l.b16 %v426
            %v656 = vunpack.c.l.b16 %v427
            %v657 = vunpack.c.l.b16 %v428
            %v658 = vunpack.c.l.b16 %v429
            %v659 = vunpack.c.l.b16 %v430
            %v660 = vunpack.c.l.b16 %v431
            %v661 = vunpack.c.l.b16 %v432
            %v662 = vunpack.c.l.b16 %v433
            %v663 = vunpack.c.l.b16 %v434
            %v664 = vunpack.c.l.b16 %v435
            %v665 = vunpack.c.l.b16 %v436
            %v666 = vunpack.c.l.b16 %v437
            %v667 = vunpack.c.l.b16 %v438
            %v668 = vunpack.c.l.b16 %v439
            %v669 = vpack.c.b16 %v654, %v653
            %v670 = vpack.c.b16 %v656, %v655
            %v671 = vpack.c.b16 %v658, %v657
            %v672 = vpack.c.b16 %v660, %v659
            %v673 = vpack.c.b16 %v662, %v661
            %v674 = vpack.c.b16 %v664, %v663
            %v675 = vpack.c.b16 %v666, %v665
            %v676 = vpack.c.b16 %v668, %v667
            %685 = vmatpush.bf16.msra.mxu0 %v676
            %686 = vmatpush.bf16.msra.mxu0 %v675
            %687 = vmatpush.bf16.msra.mxu0 %v674
            %688 = vmatpush.bf16.msra.mxu0 %v673
            %689 = vmatpush.bf16.msra.mxu0 %v672
            %690 = vmatpush.bf16.msra.mxu0 %v671
            %691 = vmatpush.bf16.msra.mxu0 %v670
            %692 = vmatpush.bf16.msra.mxu0 %v669
            %693 = vmatmul.bf16.gmra.mxu0 %v573
            %v694 = vpop.f32.mrf.mxu0
            %v695 = vadd.f32 %v443, %v694
            %v696 = vpop.f32.mrf.mxu0
            %v697 = vadd.f32 %v443, %v696
            %698 = vmatmul.bf16.gmra.mxu0 %v574
            %v699 = vpop.f32.mrf.mxu0
            %v700 = vadd.f32 %v443, %v699
            %v701 = vpop.f32.mrf.mxu0
            %v702 = vadd.f32 %v443, %v701
            %703 = vmatmul.bf16.gmra.mxu0 %v575
            %v704 = vpop.f32.mrf.mxu0
            %v705 = vadd.f32 %v443, %v704
            %v706 = vpop.f32.mrf.mxu0
            %v707 = vadd.f32 %v443, %v706
            %708 = vmatmul.bf16.gmra.mxu0 %v576
            %v709 = vpop.f32.mrf.mxu0
            %v710 = vadd.f32 %v443, %v709
            %v711 = vpop.f32.mrf.mxu0
            %v712 = vadd.f32 %v443, %v711
            %713 = vmatmul.bf16.gmra.mxu0 %v577
            %v714 = vpop.f32.mrf.mxu0
            %v715 = vadd.f32 %v443, %v714
            %v716 = vpop.f32.mrf.mxu0
            %v717 = vadd.f32 %v443, %v716
            %718 = vmatmul.bf16.gmra.mxu0 %v578
            %v719 = vpop.f32.mrf.mxu0
            %v720 = vadd.f32 %v443, %v719
            %v721 = vpop.f32.mrf.mxu0
            %v722 = vadd.f32 %v443, %v721
            %723 = vmatmul.bf16.gmra.mxu0 %v579
            %v724 = vpop.f32.mrf.mxu0
            %v725 = vadd.f32 %v443, %v724
            %v726 = vpop.f32.mrf.mxu0
            %v727 = vadd.f32 %v443, %v726
            %728 = vmatmul.bf16.gmra.mxu0 %v580
            %v729 = vpop.f32.mrf.mxu0
            %v730 = vadd.f32 %v443, %v729
            %v731 = vpop.f32.mrf.mxu0
            %v732 = vadd.f32 %v443, %v731
            %733 = vmatmul.bf16.gmra.mxu0 %v581
            %v734 = vpop.f32.mrf.mxu0
            %v735 = vadd.f32 %v443, %v734
            %v736 = vpop.f32.mrf.mxu0
            %v737 = vadd.f32 %v443, %v736
            %738 = vmatmul.bf16.gmra.mxu0 %v582
            %v739 = vpop.f32.mrf.mxu0
            %v740 = vadd.f32 %v443, %v739
            %v741 = vpop.f32.mrf.mxu0
            %v742 = vadd.f32 %v443, %v741
            %743 = vmatmul.bf16.gmra.mxu0 %v583
            %v744 = vpop.f32.mrf.mxu0
            %v745 = vadd.f32 %v443, %v744
            %v746 = vpop.f32.mrf.mxu0
            %v747 = vadd.f32 %v443, %v746
            %748 = vmatmul.bf16.gmra.mxu0 %v584
            %v749 = vpop.f32.mrf.mxu0
            %v750 = vadd.f32 %v443, %v749
            %v751 = vpop.f32.mrf.mxu0
            %v752 = vadd.f32 %v443, %v751
            %753 = vmatmul.bf16.gmra.mxu0 %v585
            %v754 = vpop.f32.mrf.mxu0
            %v755 = vadd.f32 %v443, %v754
            %v756 = vpop.f32.mrf.mxu0
            %v757 = vadd.f32 %v443, %v756
            %758 = vmatmul.bf16.gmra.mxu0 %v586
            %v759 = vpop.f32.mrf.mxu0
            %v760 = vadd.f32 %v443, %v759
            %v761 = vpop.f32.mrf.mxu0
            %v762 = vadd.f32 %v443, %v761
            %763 = vmatmul.bf16.gmra.mxu0 %v587
            %v764 = vpop.f32.mrf.mxu0
            %v765 = vadd.f32 %v443, %v764
            %v766 = vpop.f32.mrf.mxu0
            %v767 = vadd.f32 %v443, %v766
            %768 = vmatmul.bf16.gmra.mxu0 %v588
            %v769 = vpop.f32.mrf.mxu0
            %v770 = vadd.f32 %v443, %v769
            %v771 = vpop.f32.mrf.mxu0
            %v772 = vadd.f32 %v443, %v771
            %773 = vmatmul.bf16.gmra.mxu0 %v589
            %v774 = vpop.f32.mrf.mxu0
            %v775 = vadd.f32 %v443, %v774
            %v776 = vpop.f32.mrf.mxu0
            %v777 = vadd.f32 %v443, %v776
            %778 = vmatmul.bf16.gmra.mxu0 %v590
            %v779 = vpop.f32.mrf.mxu0
            %v780 = vadd.f32 %v443, %v779
            %v781 = vpop.f32.mrf.mxu0
            %v782 = vadd.f32 %v443, %v781
            %783 = vmatmul.bf16.gmra.mxu0 %v591
            %v784 = vpop.f32.mrf.mxu0
            %v785 = vadd.f32 %v443, %v784
            %v786 = vpop.f32.mrf.mxu0
            %v787 = vadd.f32 %v443, %v786
            %788 = vmatmul.bf16.gmra.mxu0 %v592
            %v789 = vpop.f32.mrf.mxu0
            %v790 = vadd.f32 %v443, %v789
            %v791 = vpop.f32.mrf.mxu0
            %v792 = vadd.f32 %v443, %v791
            %793 = vmatmul.bf16.gmra.mxu0 %v593
            %v794 = vpop.f32.mrf.mxu0
            %v795 = vadd.f32 %v443, %v794
            %v796 = vpop.f32.mrf.mxu0
            %v797 = vadd.f32 %v443, %v796
            %798 = vmatmul.bf16.gmra.mxu0 %v594
            %v799 = vpop.f32.mrf.mxu0
            %v800 = vadd.f32 %v443, %v799
            %v801 = vpop.f32.mrf.mxu0
            %v802 = vadd.f32 %v443, %v801
            %803 = vmatmul.bf16.gmra.mxu0 %v595
            %v804 = vpop.f32.mrf.mxu0
            %v805 = vadd.f32 %v443, %v804
            %v806 = vpop.f32.mrf.mxu0
            %v807 = vadd.f32 %v443, %v806
            %808 = vmatmul.bf16.gmra.mxu0 %v596
            %v809 = vpop.f32.mrf.mxu0
            %v810 = vadd.f32 %v443, %v809
            %v811 = vpop.f32.mrf.mxu0
            %v812 = vadd.f32 %v443, %v811
            %813 = vmatmul.bf16.gmra.mxu0 %v597
            %v814 = vpop.f32.mrf.mxu0
            %v815 = vadd.f32 %v443, %v814
            %v816 = vpop.f32.mrf.mxu0
            %v817 = vadd.f32 %v443, %v816
            %818 = vmatmul.bf16.gmra.mxu0 %v598
            %v819 = vpop.f32.mrf.mxu0
            %v820 = vadd.f32 %v443, %v819
            %v821 = vpop.f32.mrf.mxu0
            %v822 = vadd.f32 %v443, %v821
            %823 = vmatmul.bf16.gmra.mxu0 %v599
            %v824 = vpop.f32.mrf.mxu0
            %v825 = vadd.f32 %v443, %v824
            %v826 = vpop.f32.mrf.mxu0
            %v827 = vadd.f32 %v443, %v826
            %828 = vmatmul.bf16.gmra.mxu0 %v600
            %v829 = vpop.f32.mrf.mxu0
            %v830 = vadd.f32 %v443, %v829
            %v831 = vpop.f32.mrf.mxu0
            %v832 = vadd.f32 %v443, %v831
            %833 = vmatmul.bf16.gmra.mxu0 %v601
            %v834 = vpop.f32.mrf.mxu0
            %v835 = vadd.f32 %v443, %v834
            %v836 = vpop.f32.mrf.mxu0
            %v837 = vadd.f32 %v443, %v836
            %838 = vmatmul.bf16.gmra.mxu0 %v602
            %v839 = vpop.f32.mrf.mxu0
            %v840 = vadd.f32 %v443, %v839
            %v841 = vpop.f32.mrf.mxu0
            %v842 = vadd.f32 %v443, %v841
            %843 = vmatmul.bf16.gmra.mxu0 %v603
            %v844 = vpop.f32.mrf.mxu0
            %v845 = vadd.f32 %v443, %v844
            %v846 = vpop.f32.mrf.mxu0
            %v847 = vadd.f32 %v443, %v846
            %848 = vmatmul.bf16.gmra.mxu0 %v604
            %v849 = vpop.f32.mrf.mxu0
            %v850 = vadd.f32 %v443, %v849
            %v851 = vpop.f32.mrf.mxu0
            %v852 = vadd.f32 %v443, %v851
            %853 = vdwg.mxu0
            %s854 = smul.addr %s421, 4
            %s855 = scalar_lea.vmem %s3, %s854
            %v856 = vld [vmem:[%s855] sm:$0xf]
            %v857 = vld [vmem:[%s855 + $0x4] sm:$0xf]
            %v858 = vld [vmem:[%s855 + $0x8] sm:$0xf]
            %v859 = vld [vmem:[%s855 + $0xc] sm:$0xf]
            %v860 = vld [vmem:[%s855 + $0x10] sm:$0xf]
            %v861 = vld [vmem:[%s855 + $0x14] sm:$0xf]
            %v862 = vld [vmem:[%s855 + $0x18] sm:$0xf]
            %v863 = vld [vmem:[%s855 + $0x1c] sm:$0xf]
            %v864 = vld [vmem:[%s855 + $0x20] sm:$0xf]
            %v865 = vld [vmem:[%s855 + $0x24] sm:$0xf]
            %v866 = vld [vmem:[%s855 + $0x28] sm:$0xf]
            %v867 = vld [vmem:[%s855 + $0x2c] sm:$0xf]
            %v868 = vld [vmem:[%s855 + $0x30] sm:$0xf]
            %v869 = vld [vmem:[%s855 + $0x34] sm:$0xf]
            %v870 = vld [vmem:[%s855 + $0x38] sm:$0xf]
            %v871 = vld [vmem:[%s855 + $0x3c] sm:$0xf]
            %s872 = scalar_lea.vmem %s7, %s416
            %v873 = vld [vmem:[%s872] sm:$0x1]
            %v875 = vperm.slane %v873, 0
            %v893 = vunpack.c.l.b16 %v856
            %v894 = vunpack.c.l.b16 %v857
            %v895 = vunpack.c.l.b16 %v858
            %v896 = vunpack.c.l.b16 %v859
            %v897 = vunpack.c.l.b16 %v860
            %v898 = vunpack.c.l.b16 %v861
            %v899 = vunpack.c.l.b16 %v862
            %v900 = vunpack.c.l.b16 %v863
            %v901 = vunpack.c.l.b16 %v864
            %v902 = vunpack.c.l.b16 %v865
            %v903 = vunpack.c.l.b16 %v866
            %v904 = vunpack.c.l.b16 %v867
            %v905 = vunpack.c.l.b16 %v868
            %v906 = vunpack.c.l.b16 %v869
            %v907 = vunpack.c.l.b16 %v870
            %v908 = vunpack.c.l.b16 %v871
            %v909 = vpack.c.b16 %v894, %v893
            %v910 = vpack.c.b16 %v896, %v895
            %v911 = vpack.c.b16 %v898, %v897
            %v912 = vpack.c.b16 %v900, %v899
            %v913 = vpack.c.b16 %v902, %v901
            %v914 = vpack.c.b16 %v904, %v903
            %v915 = vpack.c.b16 %v906, %v905
            %v916 = vpack.c.b16 %v908, %v907
            %925 = vmatpush.bf16.msra.mxu0 %v916
            %926 = vmatpush.bf16.msra.mxu0 %v915
            %927 = vmatpush.bf16.msra.mxu0 %v914
            %928 = vmatpush.bf16.msra.mxu0 %v913
            %929 = vmatpush.bf16.msra.mxu0 %v912
            %930 = vmatpush.bf16.msra.mxu0 %v911
            %931 = vmatpush.bf16.msra.mxu0 %v910
            %932 = vmatpush.bf16.msra.mxu0 %v909
            %933 = vmatmul.bf16.gmra.mxu0 %v573
            %v934 = vpop.f32.mrf.mxu0
            %v935 = vadd.f32 %v875, %v934
            %v936 = vpop.f32.mrf.mxu0
            %v937 = vadd.f32 %v875, %v936
            %938 = vmatmul.bf16.gmra.mxu0 %v574
            %v939 = vpop.f32.mrf.mxu0
            %v940 = vadd.f32 %v875, %v939
            %v941 = vpop.f32.mrf.mxu0
            %v942 = vadd.f32 %v875, %v941
            %943 = vmatmul.bf16.gmra.mxu0 %v575
            %v944 = vpop.f32.mrf.mxu0
            %v945 = vadd.f32 %v875, %v944
            %v946 = vpop.f32.mrf.mxu0
            %v947 = vadd.f32 %v875, %v946
            %948 = vmatmul.bf16.gmra.mxu0 %v576
            %v949 = vpop.f32.mrf.mxu0
            %v950 = vadd.f32 %v875, %v949
            %v951 = vpop.f32.mrf.mxu0
            %v952 = vadd.f32 %v875, %v951
            %953 = vmatmul.bf16.gmra.mxu0 %v577
            %v954 = vpop.f32.mrf.mxu0
            %v955 = vadd.f32 %v875, %v954
            %v956 = vpop.f32.mrf.mxu0
            %v957 = vadd.f32 %v875, %v956
            %958 = vmatmul.bf16.gmra.mxu0 %v578
            %v959 = vpop.f32.mrf.mxu0
            %v960 = vadd.f32 %v875, %v959
            %v961 = vpop.f32.mrf.mxu0
            %v962 = vadd.f32 %v875, %v961
            %963 = vmatmul.bf16.gmra.mxu0 %v579
            %v964 = vpop.f32.mrf.mxu0
            %v965 = vadd.f32 %v875, %v964
            %v966 = vpop.f32.mrf.mxu0
            %v967 = vadd.f32 %v875, %v966
            %968 = vmatmul.bf16.gmra.mxu0 %v580
            %v969 = vpop.f32.mrf.mxu0
            %v970 = vadd.f32 %v875, %v969
            %v971 = vpop.f32.mrf.mxu0
            %v972 = vadd.f32 %v875, %v971
            %973 = vmatmul.bf16.gmra.mxu0 %v581
            %v974 = vpop.f32.mrf.mxu0
            %v975 = vadd.f32 %v875, %v974
            %v976 = vpop.f32.mrf.mxu0
            %v977 = vadd.f32 %v875, %v976
            %978 = vmatmul.bf16.gmra.mxu0 %v582
            %v979 = vpop.f32.mrf.mxu0
            %v980 = vadd.f32 %v875, %v979
            %v981 = vpop.f32.mrf.mxu0
            %v982 = vadd.f32 %v875, %v981
            %983 = vmatmul.bf16.gmra.mxu0 %v583
            %v984 = vpop.f32.mrf.mxu0
            %v985 = vadd.f32 %v875, %v984
            %v986 = vpop.f32.mrf.mxu0
            %v987 = vadd.f32 %v875, %v986
            %988 = vmatmul.bf16.gmra.mxu0 %v584
            %v989 = vpop.f32.mrf.mxu0
            %v990 = vadd.f32 %v875, %v989
            %v991 = vpop.f32.mrf.mxu0
            %v992 = vadd.f32 %v875, %v991
            %993 = vmatmul.bf16.gmra.mxu0 %v585
            %v994 = vpop.f32.mrf.mxu0
            %v995 = vadd.f32 %v875, %v994
            %v996 = vpop.f32.mrf.mxu0
            %v997 = vadd.f32 %v875, %v996
            %998 = vmatmul.bf16.gmra.mxu0 %v586
            %v999 = vpop.f32.mrf.mxu0
            %v1000 = vadd.f32 %v875, %v999
            %v1001 = vpop.f32.mrf.mxu0
            %v1002 = vadd.f32 %v875, %v1001
            %1003 = vmatmul.bf16.gmra.mxu0 %v587
            %v1004 = vpop.f32.mrf.mxu0
            %v1005 = vadd.f32 %v875, %v1004
            %v1006 = vpop.f32.mrf.mxu0
            %v1007 = vadd.f32 %v875, %v1006
            %1008 = vmatmul.bf16.gmra.mxu0 %v588
            %v1009 = vpop.f32.mrf.mxu0
            %v1010 = vadd.f32 %v875, %v1009
            %v1011 = vpop.f32.mrf.mxu0
            %v1012 = vadd.f32 %v875, %v1011
            %1013 = vmatmul.bf16.gmra.mxu0 %v589
            %v1014 = vpop.f32.mrf.mxu0
            %v1015 = vadd.f32 %v875, %v1014
            %v1016 = vpop.f32.mrf.mxu0
            %v1017 = vadd.f32 %v875, %v1016
            %1018 = vmatmul.bf16.gmra.mxu0 %v590
            %v1019 = vpop.f32.mrf.mxu0
            %v1020 = vadd.f32 %v875, %v1019
            %v1021 = vpop.f32.mrf.mxu0
            %v1022 = vadd.f32 %v875, %v1021
            %1023 = vmatmul.bf16.gmra.mxu0 %v591
            %v1024 = vpop.f32.mrf.mxu0
            %v1025 = vadd.f32 %v875, %v1024
            %v1026 = vpop.f32.mrf.mxu0
            %v1027 = vadd.f32 %v875, %v1026
            %1028 = vmatmul.bf16.gmra.mxu0 %v592
            %v1029 = vpop.f32.mrf.mxu0
            %v1030 = vadd.f32 %v875, %v1029
            %v1031 = vpop.f32.mrf.mxu0
            %v1032 = vadd.f32 %v875, %v1031
            %1033 = vmatmul.bf16.gmra.mxu0 %v593
            %v1034 = vpop.f32.mrf.mxu0
            %v1035 = vadd.f32 %v875, %v1034
            %v1036 = vpop.f32.mrf.mxu0
            %v1037 = vadd.f32 %v875, %v1036
            %1038 = vmatmul.bf16.gmra.mxu0 %v594
            %v1039 = vpop.f32.mrf.mxu0
            %v1040 = vadd.f32 %v875, %v1039
            %v1041 = vpop.f32.mrf.mxu0
            %v1042 = vadd.f32 %v875, %v1041
            %1043 = vmatmul.bf16.gmra.mxu0 %v595
            %v1044 = vpop.f32.mrf.mxu0
            %v1045 = vadd.f32 %v875, %v1044
            %v1046 = vpop.f32.mrf.mxu0
            %v1047 = vadd.f32 %v875, %v1046
            %1048 = vmatmul.bf16.gmra.mxu0 %v596
            %v1049 = vpop.f32.mrf.mxu0
            %v1050 = vadd.f32 %v875, %v1049
            %v1051 = vpop.f32.mrf.mxu0
            %v1052 = vadd.f32 %v875, %v1051
            %1053 = vmatmul.bf16.gmra.mxu0 %v597
            %v1054 = vpop.f32.mrf.mxu0
            %v1055 = vadd.f32 %v875, %v1054
            %v1056 = vpop.f32.mrf.mxu0
            %v1057 = vadd.f32 %v875, %v1056
            %1058 = vmatmul.bf16.gmra.mxu0 %v598
            %v1059 = vpop.f32.mrf.mxu0
            %v1060 = vadd.f32 %v875, %v1059
            %v1061 = vpop.f32.mrf.mxu0
            %v1062 = vadd.f32 %v875, %v1061
            %1063 = vmatmul.bf16.gmra.mxu0 %v599
            %v1064 = vpop.f32.mrf.mxu0
            %v1065 = vadd.f32 %v875, %v1064
            %v1066 = vpop.f32.mrf.mxu0
            %v1067 = vadd.f32 %v875, %v1066
            %1068 = vmatmul.bf16.gmra.mxu0 %v600
            %v1069 = vpop.f32.mrf.mxu0
            %v1070 = vadd.f32 %v875, %v1069
            %v1071 = vpop.f32.mrf.mxu0
            %v1072 = vadd.f32 %v875, %v1071
            %1073 = vmatmul.bf16.gmra.mxu0 %v601
            %v1074 = vpop.f32.mrf.mxu0
            %v1075 = vadd.f32 %v875, %v1074
            %v1076 = vpop.f32.mrf.mxu0
            %v1077 = vadd.f32 %v875, %v1076
            %1078 = vmatmul.bf16.gmra.mxu0 %v602
            %v1079 = vpop.f32.mrf.mxu0
            %v1080 = vadd.f32 %v875, %v1079
            %v1081 = vpop.f32.mrf.mxu0
            %v1082 = vadd.f32 %v875, %v1081
            %1083 = vmatmul.bf16.gmra.mxu0 %v603
            %v1084 = vpop.f32.mrf.mxu0
            %v1085 = vadd.f32 %v875, %v1084
            %v1086 = vpop.f32.mrf.mxu0
            %v1087 = vadd.f32 %v875, %v1086
            %1088 = vmatmul.bf16.gmra.mxu0 %v604
            %v1089 = vpop.f32.mrf.mxu0
            %v1090 = vadd.f32 %v875, %v1089
            %v1091 = vpop.f32.mrf.mxu0
            %v1092 = vadd.f32 %v875, %v1091
            %1093 = vdwg.mxu0
            %v1094 = vpack.c.bf16 %v695, %v695
            %v1095 = vpack.c.bf16 %v697, %v697
            %v1096 = vpack.c.bf16 %v700, %v700
            %v1097 = vpack.c.bf16 %v702, %v702
            %v1098 = vpack.c.bf16 %v705, %v705
            %v1099 = vpack.c.bf16 %v707, %v707
            %v1100 = vpack.c.bf16 %v710, %v710
            %v1101 = vpack.c.bf16 %v712, %v712
            %v1102 = vpack.c.bf16 %v715, %v715
            %v1103 = vpack.c.bf16 %v717, %v717
            %v1104 = vpack.c.bf16 %v720, %v720
            %v1105 = vpack.c.bf16 %v722, %v722
            %v1106 = vpack.c.bf16 %v725, %v725
            %v1107 = vpack.c.bf16 %v727, %v727
            %v1108 = vpack.c.bf16 %v730, %v730
            %v1109 = vpack.c.bf16 %v732, %v732
            %v1110 = vpack.c.bf16 %v735, %v735
            %v1111 = vpack.c.bf16 %v737, %v737
            %v1112 = vpack.c.bf16 %v740, %v740
            %v1113 = vpack.c.bf16 %v742, %v742
            %v1114 = vpack.c.bf16 %v745, %v745
            %v1115 = vpack.c.bf16 %v747, %v747
            %v1116 = vpack.c.bf16 %v750, %v750
            %v1117 = vpack.c.bf16 %v752, %v752
            %v1118 = vpack.c.bf16 %v755, %v755
            %v1119 = vpack.c.bf16 %v757, %v757
            %v1120 = vpack.c.bf16 %v760, %v760
            %v1121 = vpack.c.bf16 %v762, %v762
            %v1122 = vpack.c.bf16 %v765, %v765
            %v1123 = vpack.c.bf16 %v767, %v767
            %v1124 = vpack.c.bf16 %v770, %v770
            %v1125 = vpack.c.bf16 %v772, %v772
            %v1126 = vpack.c.bf16 %v775, %v775
            %v1127 = vpack.c.bf16 %v777, %v777
            %v1128 = vpack.c.bf16 %v780, %v780
            %v1129 = vpack.c.bf16 %v782, %v782
            %v1130 = vpack.c.bf16 %v785, %v785
            %v1131 = vpack.c.bf16 %v787, %v787
            %v1132 = vpack.c.bf16 %v790, %v790
            %v1133 = vpack.c.bf16 %v792, %v792
            %v1134 = vpack.c.bf16 %v795, %v795
            %v1135 = vpack.c.bf16 %v797, %v797
            %v1136 = vpack.c.bf16 %v800, %v800
            %v1137 = vpack.c.bf16 %v802, %v802
            %v1138 = vpack.c.bf16 %v805, %v805
            %v1139 = vpack.c.bf16 %v807, %v807
            %v1140 = vpack.c.bf16 %v810, %v810
            %v1141 = vpack.c.bf16 %v812, %v812
            %v1142 = vpack.c.bf16 %v815, %v815
            %v1143 = vpack.c.bf16 %v817, %v817
            %v1144 = vpack.c.bf16 %v820, %v820
            %v1145 = vpack.c.bf16 %v822, %v822
            %v1146 = vpack.c.bf16 %v825, %v825
            %v1147 = vpack.c.bf16 %v827, %v827
            %v1148 = vpack.c.bf16 %v830, %v830
            %v1149 = vpack.c.bf16 %v832, %v832
            %v1150 = vpack.c.bf16 %v835, %v835
            %v1151 = vpack.c.bf16 %v837, %v837
            %v1152 = vpack.c.bf16 %v840, %v840
            %v1153 = vpack.c.bf16 %v842, %v842
            %v1154 = vpack.c.bf16 %v845, %v845
            %v1155 = vpack.c.bf16 %v847, %v847
            %v1156 = vpack.c.bf16 %v850, %v850
            %v1157 = vpack.c.bf16 %v852, %v852
            %s1158 = smul.u32 %s416, 64
            %s1159 = smul.addr %s1158, 4
            %s1160 = scalar_lea.vmem [#allocation2], %s1159
            %vm1161 = vcmask 257024
            %1162 = vst.msk [vmem:[%s1160] sm:$0xf] %vm1161, %v1094
            %1163 = vst.msk [vmem:[%s1160 + $0x4] sm:$0xf] %vm1161, %v1095
            %1164 = vst.msk [vmem:[%s1160 + $0x8] sm:$0xf] %vm1161, %v1096
            %1165 = vst.msk [vmem:[%s1160 + $0xc] sm:$0xf] %vm1161, %v1097
            %1166 = vst.msk [vmem:[%s1160 + $0x10] sm:$0xf] %vm1161, %v1098
            %1167 = vst.msk [vmem:[%s1160 + $0x14] sm:$0xf] %vm1161, %v1099
            %1168 = vst.msk [vmem:[%s1160 + $0x18] sm:$0xf] %vm1161, %v1100
            %1169 = vst.msk [vmem:[%s1160 + $0x1c] sm:$0xf] %vm1161, %v1101
            %1170 = vst.msk [vmem:[%s1160 + $0x20] sm:$0xf] %vm1161, %v1102
            %1171 = vst.msk [vmem:[%s1160 + $0x24] sm:$0xf] %vm1161, %v1103
            %1172 = vst.msk [vmem:[%s1160 + $0x28] sm:$0xf] %vm1161, %v1104
            %1173 = vst.msk [vmem:[%s1160 + $0x2c] sm:$0xf] %vm1161, %v1105
            %1174 = vst.msk [vmem:[%s1160 + $0x30] sm:$0xf] %vm1161, %v1106
            %1175 = vst.msk [vmem:[%s1160 + $0x34] sm:$0xf] %vm1161, %v1107
            %1176 = vst.msk [vmem:[%s1160 + $0x38] sm:$0xf] %vm1161, %v1108
            %1177 = vst.msk [vmem:[%s1160 + $0x3c] sm:$0xf] %vm1161, %v1109
            %1178 = vst.msk [vmem:[%s1160 + $0x40] sm:$0xf] %vm1161, %v1110
            %1179 = vst.msk [vmem:[%s1160 + $0x44] sm:$0xf] %vm1161, %v1111
            %1180 = vst.msk [vmem:[%s1160 + $0x48] sm:$0xf] %vm1161, %v1112
            %1181 = vst.msk [vmem:[%s1160 + $0x4c] sm:$0xf] %vm1161, %v1113
            %1182 = vst.msk [vmem:[%s1160 + $0x50] sm:$0xf] %vm1161, %v1114
            %1183 = vst.msk [vmem:[%s1160 + $0x54] sm:$0xf] %vm1161, %v1115
            %1184 = vst.msk [vmem:[%s1160 + $0x58] sm:$0xf] %vm1161, %v1116
            %1185 = vst.msk [vmem:[%s1160 + $0x5c] sm:$0xf] %vm1161, %v1117
            %1186 = vst.msk [vmem:[%s1160 + $0x60] sm:$0xf] %vm1161, %v1118
            %1187 = vst.msk [vmem:[%s1160 + $0x64] sm:$0xf] %vm1161, %v1119
            %1188 = vst.msk [vmem:[%s1160 + $0x68] sm:$0xf] %vm1161, %v1120
            %1189 = vst.msk [vmem:[%s1160 + $0x6c] sm:$0xf] %vm1161, %v1121
            %1190 = vst.msk [vmem:[%s1160 + $0x70] sm:$0xf] %vm1161, %v1122
            %1191 = vst.msk [vmem:[%s1160 + $0x74] sm:$0xf] %vm1161, %v1123
            %1192 = vst.msk [vmem:[%s1160 + $0x78] sm:$0xf] %vm1161, %v1124
            %1193 = vst.msk [vmem:[%s1160 + $0x7c] sm:$0xf] %vm1161, %v1125
            %1194 = vst.msk [vmem:[%s1160 + $0x80] sm:$0xf] %vm1161, %v1126
            %1195 = vst.msk [vmem:[%s1160 + $0x84] sm:$0xf] %vm1161, %v1127
            %1196 = vst.msk [vmem:[%s1160 + $0x88] sm:$0xf] %vm1161, %v1128
            %1197 = vst.msk [vmem:[%s1160 + $0x8c] sm:$0xf] %vm1161, %v1129
            %1198 = vst.msk [vmem:[%s1160 + $0x90] sm:$0xf] %vm1161, %v1130
            %1199 = vst.msk [vmem:[%s1160 + $0x94] sm:$0xf] %vm1161, %v1131
            %1200 = vst.msk [vmem:[%s1160 + $0x98] sm:$0xf] %vm1161, %v1132
            %1201 = vst.msk [vmem:[%s1160 + $0x9c] sm:$0xf] %vm1161, %v1133
            %1202 = vst.msk [vmem:[%s1160 + $0xa0] sm:$0xf] %vm1161, %v1134
            %1203 = vst.msk [vmem:[%s1160 + $0xa4] sm:$0xf] %vm1161, %v1135
            %1204 = vst.msk [vmem:[%s1160 + $0xa8] sm:$0xf] %vm1161, %v1136
            %1205 = vst.msk [vmem:[%s1160 + $0xac] sm:$0xf] %vm1161, %v1137
            %1206 = vst.msk [vmem:[%s1160 + $0xb0] sm:$0xf] %vm1161, %v1138
            %1207 = vst.msk [vmem:[%s1160 + $0xb4] sm:$0xf] %vm1161, %v1139
            %1208 = vst.msk [vmem:[%s1160 + $0xb8] sm:$0xf] %vm1161, %v1140
            %1209 = vst.msk [vmem:[%s1160 + $0xbc] sm:$0xf] %vm1161, %v1141
            %1210 = vst.msk [vmem:[%s1160 + $0xc0] sm:$0xf] %vm1161, %v1142
            %1211 = vst.msk [vmem:[%s1160 + $0xc4] sm:$0xf] %vm1161, %v1143
            %1212 = vst.msk [vmem:[%s1160 + $0xc8] sm:$0xf] %vm1161, %v1144
            %1213 = vst.msk [vmem:[%s1160 + $0xcc] sm:$0xf] %vm1161, %v1145
            %1214 = vst.msk [vmem:[%s1160 + $0xd0] sm:$0xf] %vm1161, %v1146
            %1215 = vst.msk [vmem:[%s1160 + $0xd4] sm:$0xf] %vm1161, %v1147
            %1216 = vst.msk [vmem:[%s1160 + $0xd8] sm:$0xf] %vm1161, %v1148
            %1217 = vst.msk [vmem:[%s1160 + $0xdc] sm:$0xf] %vm1161, %v1149
            %1218 = vst.msk [vmem:[%s1160 + $0xe0] sm:$0xf] %vm1161, %v1150
            %1219 = vst.msk [vmem:[%s1160 + $0xe4] sm:$0xf] %vm1161, %v1151
            %1220 = vst.msk [vmem:[%s1160 + $0xe8] sm:$0xf] %vm1161, %v1152
            %1221 = vst.msk [vmem:[%s1160 + $0xec] sm:$0xf] %vm1161, %v1153
            %1222 = vst.msk [vmem:[%s1160 + $0xf0] sm:$0xf] %vm1161, %v1154
            %1223 = vst.msk [vmem:[%s1160 + $0xf4] sm:$0xf] %vm1161, %v1155
            %1224 = vst.msk [vmem:[%s1160 + $0xf8] sm:$0xf] %vm1161, %v1156
            %1225 = vst.msk [vmem:[%s1160 + $0xfc] sm:$0xf] %vm1161, %v1157
            %v1226 = vpack.c.bf16 %v935, %v935
            %v1227 = vpack.c.bf16 %v937, %v937
            %v1228 = vpack.c.bf16 %v940, %v940
            %v1229 = vpack.c.bf16 %v942, %v942
            %v1230 = vpack.c.bf16 %v945, %v945
            %v1231 = vpack.c.bf16 %v947, %v947
            %v1232 = vpack.c.bf16 %v950, %v950
            %v1233 = vpack.c.bf16 %v952, %v952
            %v1234 = vpack.c.bf16 %v955, %v955
            %v1235 = vpack.c.bf16 %v957, %v957
            %v1236 = vpack.c.bf16 %v960, %v960
            %v1237 = vpack.c.bf16 %v962, %v962
            %v1238 = vpack.c.bf16 %v965, %v965
            %v1239 = vpack.c.bf16 %v967, %v967
            %v1240 = vpack.c.bf16 %v970, %v970
            %v1241 = vpack.c.bf16 %v972, %v972
            %v1242 = vpack.c.bf16 %v975, %v975
            %v1243 = vpack.c.bf16 %v977, %v977
            %v1244 = vpack.c.bf16 %v980, %v980
            %v1245 = vpack.c.bf16 %v982, %v982
            %v1246 = vpack.c.bf16 %v985, %v985
            %v1247 = vpack.c.bf16 %v987, %v987
            %v1248 = vpack.c.bf16 %v990, %v990
            %v1249 = vpack.c.bf16 %v992, %v992
            %v1250 = vpack.c.bf16 %v995, %v995
            %v1251 = vpack.c.bf16 %v997, %v997
            %v1252 = vpack.c.bf16 %v1000, %v1000
            %v1253 = vpack.c.bf16 %v1002, %v1002
            %v1254 = vpack.c.bf16 %v1005, %v1005
            %v1255 = vpack.c.bf16 %v1007, %v1007
            %v1256 = vpack.c.bf16 %v1010, %v1010
            %v1257 = vpack.c.bf16 %v1012, %v1012
            %v1258 = vpack.c.bf16 %v1015, %v1015
            %v1259 = vpack.c.bf16 %v1017, %v1017
            %v1260 = vpack.c.bf16 %v1020, %v1020
            %v1261 = vpack.c.bf16 %v1022, %v1022
            %v1262 = vpack.c.bf16 %v1025, %v1025
            %v1263 = vpack.c.bf16 %v1027, %v1027
            %v1264 = vpack.c.bf16 %v1030, %v1030
            %v1265 = vpack.c.bf16 %v1032, %v1032
            %v1266 = vpack.c.bf16 %v1035, %v1035
            %v1267 = vpack.c.bf16 %v1037, %v1037
            %v1268 = vpack.c.bf16 %v1040, %v1040
            %v1269 = vpack.c.bf16 %v1042, %v1042
            %v1270 = vpack.c.bf16 %v1045, %v1045
            %v1271 = vpack.c.bf16 %v1047, %v1047
            %v1272 = vpack.c.bf16 %v1050, %v1050
            %v1273 = vpack.c.bf16 %v1052, %v1052
            %v1274 = vpack.c.bf16 %v1055, %v1055
            %v1275 = vpack.c.bf16 %v1057, %v1057
            %v1276 = vpack.c.bf16 %v1060, %v1060
            %v1277 = vpack.c.bf16 %v1062, %v1062
            %v1278 = vpack.c.bf16 %v1065, %v1065
            %v1279 = vpack.c.bf16 %v1067, %v1067
            %v1280 = vpack.c.bf16 %v1070, %v1070
            %v1281 = vpack.c.bf16 %v1072, %v1072
            %v1282 = vpack.c.bf16 %v1075, %v1075
            %v1283 = vpack.c.bf16 %v1077, %v1077
            %v1284 = vpack.c.bf16 %v1080, %v1080
            %v1285 = vpack.c.bf16 %v1082, %v1082
            %v1286 = vpack.c.bf16 %v1085, %v1085
            %v1287 = vpack.c.bf16 %v1087, %v1087
            %v1288 = vpack.c.bf16 %v1090, %v1090
            %v1289 = vpack.c.bf16 %v1092, %v1092
            %s1290 = smul.addr %s1158, 4
            %s1291 = scalar_lea.vmem [#allocation3], %s1290
            %1292 = vst.msk [vmem:[%s1291] sm:$0xf] %vm1161, %v1226
            %1293 = vst.msk [vmem:[%s1291 + $0x4] sm:$0xf] %vm1161, %v1227
            %1294 = vst.msk [vmem:[%s1291 + $0x8] sm:$0xf] %vm1161, %v1228
            %1295 = vst.msk [vmem:[%s1291 + $0xc] sm:$0xf] %vm1161, %v1229
            %1296 = vst.msk [vmem:[%s1291 + $0x10] sm:$0xf] %vm1161, %v1230
            %1297 = vst.msk [vmem:[%s1291 + $0x14] sm:$0xf] %vm1161, %v1231
            %1298 = vst.msk [vmem:[%s1291 + $0x18] sm:$0xf] %vm1161, %v1232
            %1299 = vst.msk [vmem:[%s1291 + $0x1c] sm:$0xf] %vm1161, %v1233
            %1300 = vst.msk [vmem:[%s1291 + $0x20] sm:$0xf] %vm1161, %v1234
            %1301 = vst.msk [vmem:[%s1291 + $0x24] sm:$0xf] %vm1161, %v1235
            %1302 = vst.msk [vmem:[%s1291 + $0x28] sm:$0xf] %vm1161, %v1236
            %1303 = vst.msk [vmem:[%s1291 + $0x2c] sm:$0xf] %vm1161, %v1237
            %1304 = vst.msk [vmem:[%s1291 + $0x30] sm:$0xf] %vm1161, %v1238
            %1305 = vst.msk [vmem:[%s1291 + $0x34] sm:$0xf] %vm1161, %v1239
            %1306 = vst.msk [vmem:[%s1291 + $0x38] sm:$0xf] %vm1161, %v1240
            %1307 = vst.msk [vmem:[%s1291 + $0x3c] sm:$0xf] %vm1161, %v1241
            %1308 = vst.msk [vmem:[%s1291 + $0x40] sm:$0xf] %vm1161, %v1242
            %1309 = vst.msk [vmem:[%s1291 + $0x44] sm:$0xf] %vm1161, %v1243
            %1310 = vst.msk [vmem:[%s1291 + $0x48] sm:$0xf] %vm1161, %v1244
            %1311 = vst.msk [vmem:[%s1291 + $0x4c] sm:$0xf] %vm1161, %v1245
            %1312 = vst.msk [vmem:[%s1291 + $0x50] sm:$0xf] %vm1161, %v1246
            %1313 = vst.msk [vmem:[%s1291 + $0x54] sm:$0xf] %vm1161, %v1247
            %1314 = vst.msk [vmem:[%s1291 + $0x58] sm:$0xf] %vm1161, %v1248
            %1315 = vst.msk [vmem:[%s1291 + $0x5c] sm:$0xf] %vm1161, %v1249
            %1316 = vst.msk [vmem:[%s1291 + $0x60] sm:$0xf] %vm1161, %v1250
            %1317 = vst.msk [vmem:[%s1291 + $0x64] sm:$0xf] %vm1161, %v1251
            %1318 = vst.msk [vmem:[%s1291 + $0x68] sm:$0xf] %vm1161, %v1252
            %1319 = vst.msk [vmem:[%s1291 + $0x6c] sm:$0xf] %vm1161, %v1253
            %1320 = vst.msk [vmem:[%s1291 + $0x70] sm:$0xf] %vm1161, %v1254
            %1321 = vst.msk [vmem:[%s1291 + $0x74] sm:$0xf] %vm1161, %v1255
            %1322 = vst.msk [vmem:[%s1291 + $0x78] sm:$0xf] %vm1161, %v1256
            %1323 = vst.msk [vmem:[%s1291 + $0x7c] sm:$0xf] %vm1161, %v1257
            %1324 = vst.msk [vmem:[%s1291 + $0x80] sm:$0xf] %vm1161, %v1258
            %1325 = vst.msk [vmem:[%s1291 + $0x84] sm:$0xf] %vm1161, %v1259
            %1326 = vst.msk [vmem:[%s1291 + $0x88] sm:$0xf] %vm1161, %v1260
            %1327 = vst.msk [vmem:[%s1291 + $0x8c] sm:$0xf] %vm1161, %v1261
            %1328 = vst.msk [vmem:[%s1291 + $0x90] sm:$0xf] %vm1161, %v1262
            %1329 = vst.msk [vmem:[%s1291 + $0x94] sm:$0xf] %vm1161, %v1263
            %1330 = vst.msk [vmem:[%s1291 + $0x98] sm:$0xf] %vm1161, %v1264
            %1331 = vst.msk [vmem:[%s1291 + $0x9c] sm:$0xf] %vm1161, %v1265
            %1332 = vst.msk [vmem:[%s1291 + $0xa0] sm:$0xf] %vm1161, %v1266
            %1333 = vst.msk [vmem:[%s1291 + $0xa4] sm:$0xf] %vm1161, %v1267
            %1334 = vst.msk [vmem:[%s1291 + $0xa8] sm:$0xf] %vm1161, %v1268
            %1335 = vst.msk [vmem:[%s1291 + $0xac] sm:$0xf] %vm1161, %v1269
            %1336 = vst.msk [vmem:[%s1291 + $0xb0] sm:$0xf] %vm1161, %v1270
            %1337 = vst.msk [vmem:[%s1291 + $0xb4] sm:$0xf] %vm1161, %v1271
            %1338 = vst.msk [vmem:[%s1291 + $0xb8] sm:$0xf] %vm1161, %v1272
            %1339 = vst.msk [vmem:[%s1291 + $0xbc] sm:$0xf] %vm1161, %v1273
            %1340 = vst.msk [vmem:[%s1291 + $0xc0] sm:$0xf] %vm1161, %v1274
            %1341 = vst.msk [vmem:[%s1291 + $0xc4] sm:$0xf] %vm1161, %v1275
            %1342 = vst.msk [vmem:[%s1291 + $0xc8] sm:$0xf] %vm1161, %v1276
            %1343 = vst.msk [vmem:[%s1291 + $0xcc] sm:$0xf] %vm1161, %v1277
            %1344 = vst.msk [vmem:[%s1291 + $0xd0] sm:$0xf] %vm1161, %v1278
            %1345 = vst.msk [vmem:[%s1291 + $0xd4] sm:$0xf] %vm1161, %v1279
            %1346 = vst.msk [vmem:[%s1291 + $0xd8] sm:$0xf] %vm1161, %v1280
            %1347 = vst.msk [vmem:[%s1291 + $0xdc] sm:$0xf] %vm1161, %v1281
            %1348 = vst.msk [vmem:[%s1291 + $0xe0] sm:$0xf] %vm1161, %v1282
            %1349 = vst.msk [vmem:[%s1291 + $0xe4] sm:$0xf] %vm1161, %v1283
            %1350 = vst.msk [vmem:[%s1291 + $0xe8] sm:$0xf] %vm1161, %v1284
            %1351 = vst.msk [vmem:[%s1291 + $0xec] sm:$0xf] %vm1161, %v1285
            %1352 = vst.msk [vmem:[%s1291 + $0xf0] sm:$0xf] %vm1161, %v1286
            %1353 = vst.msk [vmem:[%s1291 + $0xf4] sm:$0xf] %vm1161, %v1287
            %1354 = vst.msk [vmem:[%s1291 + $0xf8] sm:$0xf] %vm1161, %v1288
            %1355 = vst.msk [vmem:[%s1291 + $0xfc] sm:$0xf] %vm1161, %v1289
          $region65: #{tpu_custom_call.1} parent=59 // loop_footer
            %s420 = sadd.s32 1, %s416
          $region66: #{tpu_custom_call.1} parent=59 // loop_footer_branch
            %415 = sbr.rel target = $region62
          $region67: #{tpu_custom_call.1} parent=59 // loop_exit
            _
        $region60: #{tpu_custom_call.1} parent=55 // pred_fallthru
          _
        %s1356 = smul.u32 %s28, 256
        %s1357 = sshra.s32 %s1356, 3
        %s1358 = sand.u32 %s1356, 7
        %s1359 = smul.addr %s1357, 4
        %s1360 = scalar_lea.vmem %s344, %s1359
        %v1361 = vld [vmem:[%s1360] sm:$0xf]
        %v1362 = vld [vmem:[%s1360 + $0x4] sm:$0xf]
        %v1363 = vld [vmem:[%s1360 + $0x8] sm:$0xf]
        %v1364 = vld [vmem:[%s1360 + $0xc] sm:$0xf]
        %v1365 = vld [vmem:[%s1360 + $0x10] sm:$0xf]
        %v1366 = vld [vmem:[%s1360 + $0x14] sm:$0xf]
        %v1367 = vld [vmem:[%s1360 + $0x18] sm:$0xf]
        %v1368 = vld [vmem:[%s1360 + $0x1c] sm:$0xf]
        %v1369 = vld [vmem:[%s1360 + $0x20] sm:$0xf]
        %v1370 = vld [vmem:[%s1360 + $0x24] sm:$0xf]
        %v1371 = vld [vmem:[%s1360 + $0x28] sm:$0xf]
        %v1372 = vld [vmem:[%s1360 + $0x2c] sm:$0xf]
        %v1373 = vld [vmem:[%s1360 + $0x30] sm:$0xf]
        %v1374 = vld [vmem:[%s1360 + $0x34] sm:$0xf]
        %v1375 = vld [vmem:[%s1360 + $0x38] sm:$0xf]
        %v1376 = vld [vmem:[%s1360 + $0x3c] sm:$0xf]
        %v1377 = vld [vmem:[%s1360 + $0x40] sm:$0xf]
        %v1378 = vld [vmem:[%s1360 + $0x44] sm:$0xf]
        %v1379 = vld [vmem:[%s1360 + $0x48] sm:$0xf]
        %v1380 = vld [vmem:[%s1360 + $0x4c] sm:$0xf]
        %v1381 = vld [vmem:[%s1360 + $0x50] sm:$0xf]
        %v1382 = vld [vmem:[%s1360 + $0x54] sm:$0xf]
        %v1383 = vld [vmem:[%s1360 + $0x58] sm:$0xf]
        %v1384 = vld [vmem:[%s1360 + $0x5c] sm:$0xf]
        %v1385 = vld [vmem:[%s1360 + $0x60] sm:$0xf]
        %v1386 = vld [vmem:[%s1360 + $0x64] sm:$0xf]
        %v1387 = vld [vmem:[%s1360 + $0x68] sm:$0xf]
        %v1388 = vld [vmem:[%s1360 + $0x6c] sm:$0xf]
        %v1389 = vld [vmem:[%s1360 + $0x70] sm:$0xf]
        %v1390 = vld [vmem:[%s1360 + $0x74] sm:$0xf]
        %v1391 = vld [vmem:[%s1360 + $0x78] sm:$0xf]
        %v1392 = vld [vmem:[%s1360 + $0x7c] sm:$0xf]
        loop: start=0, step=1, limit=4
        $region68: #{tpu_custom_call.1} parent=55 // loop_pre_header
          _
        $region69: #{tpu_custom_call.1} parent=55 // loop_header
          %s1394 = sphi 0, %s1398
          %p1395 = scmp.ge.s32.totalorder %s1394, 4
          %v1399 = vphi 0.0, %v4050
          %v1400 = vphi 0.0, %v4051
          %v1401 = vphi 0.0, %v4052
          %v1402 = vphi 0.0, %v4053
          %v1403 = vphi 0.0, %v4054
          %v1404 = vphi 0.0, %v4055
          %v1405 = vphi 0.0, %v4056
          %v1406 = vphi 0.0, %v4057
          %v1407 = vphi 0.0, %v4058
          %v1408 = vphi 0.0, %v4059
          %v1409 = vphi 0.0, %v4060
          %v1410 = vphi 0.0, %v4061
          %v1411 = vphi 0.0, %v4062
          %v1412 = vphi 0.0, %v4063
          %v1413 = vphi 0.0, %v4064
          %v1414 = vphi 0.0, %v4065
          %v1415 = vphi 0.0, %v4066
          %v1416 = vphi 0.0, %v4067
          %v1417 = vphi 0.0, %v4068
          %v1418 = vphi 0.0, %v4069
          %v1419 = vphi 0.0, %v4070
          %v1420 = vphi 0.0, %v4071
          %v1421 = vphi 0.0, %v4072
          %v1422 = vphi 0.0, %v4073
          %v1423 = vphi 0.0, %v4074
          %v1424 = vphi 0.0, %v4075
          %v1425 = vphi 0.0, %v4076
          %v1426 = vphi 0.0, %v4077
          %v1427 = vphi 0.0, %v4078
          %v1428 = vphi 0.0, %v4079
          %v1429 = vphi 0.0, %v4080
          %v1430 = vphi 0.0, %v4081
        $region70: #{tpu_custom_call.1} parent=55 // loop_header_branch
          %1397 = sbr.rel (%p1395) target = $region74
        $region71: #{tpu_custom_call.1} parent=55 // loop_body
          %s1431 = smul.u32 %s1394, 16
          %s1432 = smul.addr %s1431, 4
          %s1433 = scalar_lea.vmem %s1, %s1432
          %v1434 = vld [vmem:[%s1433] sm:$0xf]
          %v1435 = vld [vmem:[%s1433 + $0x4] sm:$0xf]
          %v1436 = vld [vmem:[%s1433 + $0x8] sm:$0xf]
          %v1437 = vld [vmem:[%s1433 + $0xc] sm:$0xf]
          %v1438 = vld [vmem:[%s1433 + $0x10] sm:$0xf]
          %v1439 = vld [vmem:[%s1433 + $0x14] sm:$0xf]
          %v1440 = vld [vmem:[%s1433 + $0x18] sm:$0xf]
          %v1441 = vld [vmem:[%s1433 + $0x1c] sm:$0xf]
          %v1442 = vld [vmem:[%s1433 + $0x20] sm:$0xf]
          %v1443 = vld [vmem:[%s1433 + $0x24] sm:$0xf]
          %v1444 = vld [vmem:[%s1433 + $0x28] sm:$0xf]
          %v1445 = vld [vmem:[%s1433 + $0x2c] sm:$0xf]
          %v1446 = vld [vmem:[%s1433 + $0x30] sm:$0xf]
          %v1447 = vld [vmem:[%s1433 + $0x34] sm:$0xf]
          %v1448 = vld [vmem:[%s1433 + $0x38] sm:$0xf]
          %v1449 = vld [vmem:[%s1433 + $0x3c] sm:$0xf]
          %s1450 = scalar_lea.vmem %s5, %s1394
          %v1451 = vld [vmem:[%s1450] sm:$0x1]
          %v1453 = vperm.slane %v1451, 0
          %v1487 = vunpack.c.l.b16 %v1361
          %v1488 = vunpack.c.l.b16 %v1362
          %v1489 = vunpack.c.l.b16 %v1363
          %v1490 = vunpack.c.l.b16 %v1364
          %v1491 = vunpack.c.l.b16 %v1365
          %v1492 = vunpack.c.l.b16 %v1366
          %v1493 = vunpack.c.l.b16 %v1367
          %v1494 = vunpack.c.l.b16 %v1368
          %v1495 = vunpack.c.l.b16 %v1369
          %v1496 = vunpack.c.l.b16 %v1370
          %v1497 = vunpack.c.l.b16 %v1371
          %v1498 = vunpack.c.l.b16 %v1372
          %v1499 = vunpack.c.l.b16 %v1373
          %v1500 = vunpack.c.l.b16 %v1374
          %v1501 = vunpack.c.l.b16 %v1375
          %v1502 = vunpack.c.l.b16 %v1376
          %v1503 = vunpack.c.l.b16 %v1377
          %v1504 = vunpack.c.l.b16 %v1378
          %v1505 = vunpack.c.l.b16 %v1379
          %v1506 = vunpack.c.l.b16 %v1380
          %v1507 = vunpack.c.l.b16 %v1381
          %v1508 = vunpack.c.l.b16 %v1382
          %v1509 = vunpack.c.l.b16 %v1383
          %v1510 = vunpack.c.l.b16 %v1384
          %v1511 = vunpack.c.l.b16 %v1385
          %v1512 = vunpack.c.l.b16 %v1386
          %v1513 = vunpack.c.l.b16 %v1387
          %v1514 = vunpack.c.l.b16 %v1388
          %v1515 = vunpack.c.l.b16 %v1389
          %v1516 = vunpack.c.l.b16 %v1390
          %v1517 = vunpack.c.l.b16 %v1391
          %v1518 = vunpack.c.l.b16 %v1392
          %v1519 = vpack.c.b16 %v1488, %v1487
          %v1520 = vpack.c.b16 %v1490, %v1489
          %v1521 = vpack.c.b16 %v1492, %v1491
          %v1522 = vpack.c.b16 %v1494, %v1493
          %v1523 = vpack.c.b16 %v1496, %v1495
          %v1524 = vpack.c.b16 %v1498, %v1497
          %v1525 = vpack.c.b16 %v1500, %v1499
          %v1526 = vpack.c.b16 %v1502, %v1501
          %v1527 = vpack.c.b16 %v1504, %v1503
          %v1528 = vpack.c.b16 %v1506, %v1505
          %v1529 = vpack.c.b16 %v1508, %v1507
          %v1530 = vpack.c.b16 %v1510, %v1509
          %v1531 = vpack.c.b16 %v1512, %v1511
          %v1532 = vpack.c.b16 %v1514, %v1513
          %v1533 = vpack.c.b16 %v1516, %v1515
          %v1534 = vpack.c.b16 %v1518, %v1517
          %v1567 = vunpack.c.l.b16 %v1434
          %v1568 = vunpack.c.l.b16 %v1435
          %v1569 = vunpack.c.l.b16 %v1436
          %v1570 = vunpack.c.l.b16 %v1437
          %v1571 = vunpack.c.l.b16 %v1438
          %v1572 = vunpack.c.l.b16 %v1439
          %v1573 = vunpack.c.l.b16 %v1440
          %v1574 = vunpack.c.l.b16 %v1441
          %v1575 = vunpack.c.l.b16 %v1442
          %v1576 = vunpack.c.l.b16 %v1443
          %v1577 = vunpack.c.l.b16 %v1444
          %v1578 = vunpack.c.l.b16 %v1445
          %v1579 = vunpack.c.l.b16 %v1446
          %v1580 = vunpack.c.l.b16 %v1447
          %v1581 = vunpack.c.l.b16 %v1448
          %v1582 = vunpack.c.l.b16 %v1449
          %v1583 = vpack.c.b16 %v1568, %v1567
          %v1584 = vpack.c.b16 %v1570, %v1569
          %v1585 = vpack.c.b16 %v1572, %v1571
          %v1586 = vpack.c.b16 %v1574, %v1573
          %v1587 = vpack.c.b16 %v1576, %v1575
          %v1588 = vpack.c.b16 %v1578, %v1577
          %v1589 = vpack.c.b16 %v1580, %v1579
          %v1590 = vpack.c.b16 %v1582, %v1581
          %1599 = vmatpush.bf16.msra.mxu0 %v1590
          %1600 = vmatpush.bf16.msra.mxu0 %v1589
          %1601 = vmatpush.bf16.msra.mxu0 %v1588
          %1602 = vmatpush.bf16.msra.mxu0 %v1587
          %1603 = vmatpush.bf16.msra.mxu0 %v1586
          %1604 = vmatpush.bf16.msra.mxu0 %v1585
          %1605 = vmatpush.bf16.msra.mxu0 %v1584
          %1606 = vmatpush.bf16.msra.mxu0 %v1583
          %1607 = vmatmul.bf16.gmra.mxu0 %v1519
          %v1608 = vpop.f32.mrf.mxu0
          %v1609 = vadd.f32 %v1453, %v1608
          %v1610 = vpop.f32.mrf.mxu0
          %v1611 = vadd.f32 %v1453, %v1610
          %1612 = vmatmul.bf16.gmra.mxu0 %v1520
          %v1613 = vpop.f32.mrf.mxu0
          %v1614 = vadd.f32 %v1453, %v1613
          %v1615 = vpop.f32.mrf.mxu0
          %v1616 = vadd.f32 %v1453, %v1615
          %1617 = vmatmul.bf16.gmra.mxu0 %v1521
          %v1618 = vpop.f32.mrf.mxu0
          %v1619 = vadd.f32 %v1453, %v1618
          %v1620 = vpop.f32.mrf.mxu0
          %v1621 = vadd.f32 %v1453, %v1620
          %1622 = vmatmul.bf16.gmra.mxu0 %v1522
          %v1623 = vpop.f32.mrf.mxu0
          %v1624 = vadd.f32 %v1453, %v1623
          %v1625 = vpop.f32.mrf.mxu0
          %v1626 = vadd.f32 %v1453, %v1625
          %1627 = vmatmul.bf16.gmra.mxu0 %v1523
          %v1628 = vpop.f32.mrf.mxu0
          %v1629 = vadd.f32 %v1453, %v1628
          %v1630 = vpop.f32.mrf.mxu0
          %v1631 = vadd.f32 %v1453, %v1630
          %1632 = vmatmul.bf16.gmra.mxu0 %v1524
          %v1633 = vpop.f32.mrf.mxu0
          %v1634 = vadd.f32 %v1453, %v1633
          %v1635 = vpop.f32.mrf.mxu0
          %v1636 = vadd.f32 %v1453, %v1635
          %1637 = vmatmul.bf16.gmra.mxu0 %v1525
          %v1638 = vpop.f32.mrf.mxu0
          %v1639 = vadd.f32 %v1453, %v1638
          %v1640 = vpop.f32.mrf.mxu0
          %v1641 = vadd.f32 %v1453, %v1640
          %1642 = vmatmul.bf16.gmra.mxu0 %v1526
          %v1643 = vpop.f32.mrf.mxu0
          %v1644 = vadd.f32 %v1453, %v1643
          %v1645 = vpop.f32.mrf.mxu0
          %v1646 = vadd.f32 %v1453, %v1645
          %1647 = vmatmul.bf16.gmra.mxu0 %v1527
          %v1648 = vpop.f32.mrf.mxu0
          %v1649 = vadd.f32 %v1453, %v1648
          %v1650 = vpop.f32.mrf.mxu0
          %v1651 = vadd.f32 %v1453, %v1650
          %1652 = vmatmul.bf16.gmra.mxu0 %v1528
          %v1653 = vpop.f32.mrf.mxu0
          %v1654 = vadd.f32 %v1453, %v1653
          %v1655 = vpop.f32.mrf.mxu0
          %v1656 = vadd.f32 %v1453, %v1655
          %1657 = vmatmul.bf16.gmra.mxu0 %v1529
          %v1658 = vpop.f32.mrf.mxu0
          %v1659 = vadd.f32 %v1453, %v1658
          %v1660 = vpop.f32.mrf.mxu0
          %v1661 = vadd.f32 %v1453, %v1660
          %1662 = vmatmul.bf16.gmra.mxu0 %v1530
          %v1663 = vpop.f32.mrf.mxu0
          %v1664 = vadd.f32 %v1453, %v1663
          %v1665 = vpop.f32.mrf.mxu0
          %v1666 = vadd.f32 %v1453, %v1665
          %1667 = vmatmul.bf16.gmra.mxu0 %v1531
          %v1668 = vpop.f32.mrf.mxu0
          %v1669 = vadd.f32 %v1453, %v1668
          %v1670 = vpop.f32.mrf.mxu0
          %v1671 = vadd.f32 %v1453, %v1670
          %1672 = vmatmul.bf16.gmra.mxu0 %v1532
          %v1673 = vpop.f32.mrf.mxu0
          %v1674 = vadd.f32 %v1453, %v1673
          %v1675 = vpop.f32.mrf.mxu0
          %v1676 = vadd.f32 %v1453, %v1675
          %1677 = vmatmul.bf16.gmra.mxu0 %v1533
          %v1678 = vpop.f32.mrf.mxu0
          %v1679 = vadd.f32 %v1453, %v1678
          %v1680 = vpop.f32.mrf.mxu0
          %v1681 = vadd.f32 %v1453, %v1680
          %1682 = vmatmul.bf16.gmra.mxu0 %v1534
          %v1683 = vpop.f32.mrf.mxu0
          %v1684 = vadd.f32 %v1453, %v1683
          %v1685 = vpop.f32.mrf.mxu0
          %v1686 = vadd.f32 %v1453, %v1685
          %1687 = vdwg.mxu0
          %s1688 = smul.u32 %s1394, 64
          %s1689 = smul.addr %s1688, 4
          %s1690 = scalar_lea.vmem [#allocation2], %s1689
          %v1691 = vld [vmem:[%s1690] sm:$0xf]
          %v1692 = vld [vmem:[%s1690 + $0x4] sm:$0xf]
          %v1693 = vld [vmem:[%s1690 + $0x8] sm:$0xf]
          %v1694 = vld [vmem:[%s1690 + $0xc] sm:$0xf]
          %v1695 = vld [vmem:[%s1690 + $0x10] sm:$0xf]
          %v1696 = vld [vmem:[%s1690 + $0x14] sm:$0xf]
          %v1697 = vld [vmem:[%s1690 + $0x18] sm:$0xf]
          %v1698 = vld [vmem:[%s1690 + $0x1c] sm:$0xf]
          %v1699 = vld [vmem:[%s1690 + $0x20] sm:$0xf]
          %v1700 = vld [vmem:[%s1690 + $0x24] sm:$0xf]
          %v1701 = vld [vmem:[%s1690 + $0x28] sm:$0xf]
          %v1702 = vld [vmem:[%s1690 + $0x2c] sm:$0xf]
          %v1703 = vld [vmem:[%s1690 + $0x30] sm:$0xf]
          %v1704 = vld [vmem:[%s1690 + $0x34] sm:$0xf]
          %v1705 = vld [vmem:[%s1690 + $0x38] sm:$0xf]
          %v1706 = vld [vmem:[%s1690 + $0x3c] sm:$0xf]
          %v1707 = vld [vmem:[%s1690 + $0x40] sm:$0xf]
          %v1708 = vld [vmem:[%s1690 + $0x44] sm:$0xf]
          %v1709 = vld [vmem:[%s1690 + $0x48] sm:$0xf]
          %v1710 = vld [vmem:[%s1690 + $0x4c] sm:$0xf]
          %v1711 = vld [vmem:[%s1690 + $0x50] sm:$0xf]
          %v1712 = vld [vmem:[%s1690 + $0x54] sm:$0xf]
          %v1713 = vld [vmem:[%s1690 + $0x58] sm:$0xf]
          %v1714 = vld [vmem:[%s1690 + $0x5c] sm:$0xf]
          %v1715 = vld [vmem:[%s1690 + $0x60] sm:$0xf]
          %v1716 = vld [vmem:[%s1690 + $0x64] sm:$0xf]
          %v1717 = vld [vmem:[%s1690 + $0x68] sm:$0xf]
          %v1718 = vld [vmem:[%s1690 + $0x6c] sm:$0xf]
          %v1719 = vld [vmem:[%s1690 + $0x70] sm:$0xf]
          %v1720 = vld [vmem:[%s1690 + $0x74] sm:$0xf]
          %v1721 = vld [vmem:[%s1690 + $0x78] sm:$0xf]
          %v1722 = vld [vmem:[%s1690 + $0x7c] sm:$0xf]
          %v1723 = vld [vmem:[%s1690 + $0x80] sm:$0xf]
          %v1724 = vld [vmem:[%s1690 + $0x84] sm:$0xf]
          %v1725 = vld [vmem:[%s1690 + $0x88] sm:$0xf]
          %v1726 = vld [vmem:[%s1690 + $0x8c] sm:$0xf]
          %v1727 = vld [vmem:[%s1690 + $0x90] sm:$0xf]
          %v1728 = vld [vmem:[%s1690 + $0x94] sm:$0xf]
          %v1729 = vld [vmem:[%s1690 + $0x98] sm:$0xf]
          %v1730 = vld [vmem:[%s1690 + $0x9c] sm:$0xf]
          %v1731 = vld [vmem:[%s1690 + $0xa0] sm:$0xf]
          %v1732 = vld [vmem:[%s1690 + $0xa4] sm:$0xf]
          %v1733 = vld [vmem:[%s1690 + $0xa8] sm:$0xf]
          %v1734 = vld [vmem:[%s1690 + $0xac] sm:$0xf]
          %v1735 = vld [vmem:[%s1690 + $0xb0] sm:$0xf]
          %v1736 = vld [vmem:[%s1690 + $0xb4] sm:$0xf]
          %v1737 = vld [vmem:[%s1690 + $0xb8] sm:$0xf]
          %v1738 = vld [vmem:[%s1690 + $0xbc] sm:$0xf]
          %v1739 = vld [vmem:[%s1690 + $0xc0] sm:$0xf]
          %v1740 = vld [vmem:[%s1690 + $0xc4] sm:$0xf]
          %v1741 = vld [vmem:[%s1690 + $0xc8] sm:$0xf]
          %v1742 = vld [vmem:[%s1690 + $0xcc] sm:$0xf]
          %v1743 = vld [vmem:[%s1690 + $0xd0] sm:$0xf]
          %v1744 = vld [vmem:[%s1690 + $0xd4] sm:$0xf]
          %v1745 = vld [vmem:[%s1690 + $0xd8] sm:$0xf]
          %v1746 = vld [vmem:[%s1690 + $0xdc] sm:$0xf]
          %v1747 = vld [vmem:[%s1690 + $0xe0] sm:$0xf]
          %v1748 = vld [vmem:[%s1690 + $0xe4] sm:$0xf]
          %v1749 = vld [vmem:[%s1690 + $0xe8] sm:$0xf]
          %v1750 = vld [vmem:[%s1690 + $0xec] sm:$0xf]
          %v1751 = vld [vmem:[%s1690 + $0xf0] sm:$0xf]
          %v1752 = vld [vmem:[%s1690 + $0xf4] sm:$0xf]
          %v1753 = vld [vmem:[%s1690 + $0xf8] sm:$0xf]
          %v1754 = vld [vmem:[%s1690 + $0xfc] sm:$0xf]
          %s1755 = smul.addr %s1688, 4
          %s1756 = scalar_lea.vmem [#allocation3], %s1755
          %v1757 = vld [vmem:[%s1756] sm:$0xf]
          %v1758 = vld [vmem:[%s1756 + $0x4] sm:$0xf]
          %v1759 = vld [vmem:[%s1756 + $0x8] sm:$0xf]
          %v1760 = vld [vmem:[%s1756 + $0xc] sm:$0xf]
          %v1761 = vld [vmem:[%s1756 + $0x10] sm:$0xf]
          %v1762 = vld [vmem:[%s1756 + $0x14] sm:$0xf]
          %v1763 = vld [vmem:[%s1756 + $0x18] sm:$0xf]
          %v1764 = vld [vmem:[%s1756 + $0x1c] sm:$0xf]
          %v1765 = vld [vmem:[%s1756 + $0x20] sm:$0xf]
          %v1766 = vld [vmem:[%s1756 + $0x24] sm:$0xf]
          %v1767 = vld [vmem:[%s1756 + $0x28] sm:$0xf]
          %v1768 = vld [vmem:[%s1756 + $0x2c] sm:$0xf]
          %v1769 = vld [vmem:[%s1756 + $0x30] sm:$0xf]
          %v1770 = vld [vmem:[%s1756 + $0x34] sm:$0xf]
          %v1771 = vld [vmem:[%s1756 + $0x38] sm:$0xf]
          %v1772 = vld [vmem:[%s1756 + $0x3c] sm:$0xf]
          %v1773 = vld [vmem:[%s1756 + $0x40] sm:$0xf]
          %v1774 = vld [vmem:[%s1756 + $0x44] sm:$0xf]
          %v1775 = vld [vmem:[%s1756 + $0x48] sm:$0xf]
          %v1776 = vld [vmem:[%s1756 + $0x4c] sm:$0xf]
          %v1777 = vld [vmem:[%s1756 + $0x50] sm:$0xf]
          %v1778 = vld [vmem:[%s1756 + $0x54] sm:$0xf]
          %v1779 = vld [vmem:[%s1756 + $0x58] sm:$0xf]
          %v1780 = vld [vmem:[%s1756 + $0x5c] sm:$0xf]
          %v1781 = vld [vmem:[%s1756 + $0x60] sm:$0xf]
          %v1782 = vld [vmem:[%s1756 + $0x64] sm:$0xf]
          %v1783 = vld [vmem:[%s1756 + $0x68] sm:$0xf]
          %v1784 = vld [vmem:[%s1756 + $0x6c] sm:$0xf]
          %v1785 = vld [vmem:[%s1756 + $0x70] sm:$0xf]
          %v1786 = vld [vmem:[%s1756 + $0x74] sm:$0xf]
          %v1787 = vld [vmem:[%s1756 + $0x78] sm:$0xf]
          %v1788 = vld [vmem:[%s1756 + $0x7c] sm:$0xf]
          %v1789 = vld [vmem:[%s1756 + $0x80] sm:$0xf]
          %v1790 = vld [vmem:[%s1756 + $0x84] sm:$0xf]
          %v1791 = vld [vmem:[%s1756 + $0x88] sm:$0xf]
          %v1792 = vld [vmem:[%s1756 + $0x8c] sm:$0xf]
          %v1793 = vld [vmem:[%s1756 + $0x90] sm:$0xf]
          %v1794 = vld [vmem:[%s1756 + $0x94] sm:$0xf]
          %v1795 = vld [vmem:[%s1756 + $0x98] sm:$0xf]
          %v1796 = vld [vmem:[%s1756 + $0x9c] sm:$0xf]
          %v1797 = vld [vmem:[%s1756 + $0xa0] sm:$0xf]
          %v1798 = vld [vmem:[%s1756 + $0xa4] sm:$0xf]
          %v1799 = vld [vmem:[%s1756 + $0xa8] sm:$0xf]
          %v1800 = vld [vmem:[%s1756 + $0xac] sm:$0xf]
          %v1801 = vld [vmem:[%s1756 + $0xb0] sm:$0xf]
          %v1802 = vld [vmem:[%s1756 + $0xb4] sm:$0xf]
          %v1803 = vld [vmem:[%s1756 + $0xb8] sm:$0xf]
          %v1804 = vld [vmem:[%s1756 + $0xbc] sm:$0xf]
          %v1805 = vld [vmem:[%s1756 + $0xc0] sm:$0xf]
          %v1806 = vld [vmem:[%s1756 + $0xc4] sm:$0xf]
          %v1807 = vld [vmem:[%s1756 + $0xc8] sm:$0xf]
          %v1808 = vld [vmem:[%s1756 + $0xcc] sm:$0xf]
          %v1809 = vld [vmem:[%s1756 + $0xd0] sm:$0xf]
          %v1810 = vld [vmem:[%s1756 + $0xd4] sm:$0xf]
          %v1811 = vld [vmem:[%s1756 + $0xd8] sm:$0xf]
          %v1812 = vld [vmem:[%s1756 + $0xdc] sm:$0xf]
          %v1813 = vld [vmem:[%s1756 + $0xe0] sm:$0xf]
          %v1814 = vld [vmem:[%s1756 + $0xe4] sm:$0xf]
          %v1815 = vld [vmem:[%s1756 + $0xe8] sm:$0xf]
          %v1816 = vld [vmem:[%s1756 + $0xec] sm:$0xf]
          %v1817 = vld [vmem:[%s1756 + $0xf0] sm:$0xf]
          %v1818 = vld [vmem:[%s1756 + $0xf4] sm:$0xf]
          %v1819 = vld [vmem:[%s1756 + $0xf8] sm:$0xf]
          %v1820 = vld [vmem:[%s1756 + $0xfc] sm:$0xf]
          %v1821 = vpack.c.bf16 %v1611, %v1609
          %v1822 = vpack.c.bf16 %v1616, %v1614
          %v1823 = vpack.c.bf16 %v1621, %v1619
          %v1824 = vpack.c.bf16 %v1626, %v1624
          %v1825 = vpack.c.bf16 %v1631, %v1629
          %v1826 = vpack.c.bf16 %v1636, %v1634
          %v1827 = vpack.c.bf16 %v1641, %v1639
          %v1828 = vpack.c.bf16 %v1646, %v1644
          %v1829 = vpack.c.bf16 %v1651, %v1649
          %v1830 = vpack.c.bf16 %v1656, %v1654
          %v1831 = vpack.c.bf16 %v1661, %v1659
          %v1832 = vpack.c.bf16 %v1666, %v1664
          %v1833 = vpack.c.bf16 %v1671, %v1669
          %v1834 = vpack.c.bf16 %v1676, %v1674
          %v1835 = vpack.c.bf16 %v1681, %v1679
          %v1836 = vpack.c.bf16 %v1686, %v1684
          %v1901 = vunpack.c.l.b16 %v1691
          %v1902 = vunpack.c.l.b16 %v1692
          %v1903 = vunpack.c.l.b16 %v1693
          %v1904 = vunpack.c.l.b16 %v1694
          %v1905 = vunpack.c.l.b16 %v1695
          %v1906 = vunpack.c.l.b16 %v1696
          %v1907 = vunpack.c.l.b16 %v1697
          %v1908 = vunpack.c.l.b16 %v1698
          %v1909 = vunpack.c.l.b16 %v1699
          %v1910 = vunpack.c.l.b16 %v1700
          %v1911 = vunpack.c.l.b16 %v1701
          %v1912 = vunpack.c.l.b16 %v1702
          %v1913 = vunpack.c.l.b16 %v1703
          %v1914 = vunpack.c.l.b16 %v1704
          %v1915 = vunpack.c.l.b16 %v1705
          %v1916 = vunpack.c.l.b16 %v1706
          %v1917 = vunpack.c.l.b16 %v1707
          %v1918 = vunpack.c.l.b16 %v1708
          %v1919 = vunpack.c.l.b16 %v1709
          %v1920 = vunpack.c.l.b16 %v1710
          %v1921 = vunpack.c.l.b16 %v1711
          %v1922 = vunpack.c.l.b16 %v1712
          %v1923 = vunpack.c.l.b16 %v1713
          %v1924 = vunpack.c.l.b16 %v1714
          %v1925 = vunpack.c.l.b16 %v1715
          %v1926 = vunpack.c.l.b16 %v1716
          %v1927 = vunpack.c.l.b16 %v1717
          %v1928 = vunpack.c.l.b16 %v1718
          %v1929 = vunpack.c.l.b16 %v1719
          %v1930 = vunpack.c.l.b16 %v1720
          %v1931 = vunpack.c.l.b16 %v1721
          %v1932 = vunpack.c.l.b16 %v1722
          %v1933 = vunpack.c.l.b16 %v1723
          %v1934 = vunpack.c.l.b16 %v1724
          %v1935 = vunpack.c.l.b16 %v1725
          %v1936 = vunpack.c.l.b16 %v1726
          %v1937 = vunpack.c.l.b16 %v1727
          %v1938 = vunpack.c.l.b16 %v1728
          %v1939 = vunpack.c.l.b16 %v1729
          %v1940 = vunpack.c.l.b16 %v1730
          %v1941 = vunpack.c.l.b16 %v1731
          %v1942 = vunpack.c.l.b16 %v1732
          %v1943 = vunpack.c.l.b16 %v1733
          %v1944 = vunpack.c.l.b16 %v1734
          %v1945 = vunpack.c.l.b16 %v1735
          %v1946 = vunpack.c.l.b16 %v1736
          %v1947 = vunpack.c.l.b16 %v1737
          %v1948 = vunpack.c.l.b16 %v1738
          %v1949 = vunpack.c.l.b16 %v1739
          %v1950 = vunpack.c.l.b16 %v1740
          %v1951 = vunpack.c.l.b16 %v1741
          %v1952 = vunpack.c.l.b16 %v1742
          %v1953 = vunpack.c.l.b16 %v1743
          %v1954 = vunpack.c.l.b16 %v1744
          %v1955 = vunpack.c.l.b16 %v1745
          %v1956 = vunpack.c.l.b16 %v1746
          %v1957 = vunpack.c.l.b16 %v1747
          %v1958 = vunpack.c.l.b16 %v1748
          %v1959 = vunpack.c.l.b16 %v1749
          %v1960 = vunpack.c.l.b16 %v1750
          %v1961 = vunpack.c.l.b16 %v1751
          %v1962 = vunpack.c.l.b16 %v1752
          %v1963 = vunpack.c.l.b16 %v1753
          %v1964 = vunpack.c.l.b16 %v1754
          %v1965 = vpack.c.b16 %v1902, %v1901
          %v1966 = vpack.c.b16 %v1904, %v1903
          %v1967 = vpack.c.b16 %v1906, %v1905
          %v1968 = vpack.c.b16 %v1908, %v1907
          %v1969 = vpack.c.b16 %v1910, %v1909
          %v1970 = vpack.c.b16 %v1912, %v1911
          %v1971 = vpack.c.b16 %v1914, %v1913
          %v1972 = vpack.c.b16 %v1916, %v1915
          %v1973 = vpack.c.b16 %v1918, %v1917
          %v1974 = vpack.c.b16 %v1920, %v1919
          %v1975 = vpack.c.b16 %v1922, %v1921
          %v1976 = vpack.c.b16 %v1924, %v1923
          %v1977 = vpack.c.b16 %v1926, %v1925
          %v1978 = vpack.c.b16 %v1928, %v1927
          %v1979 = vpack.c.b16 %v1930, %v1929
          %v1980 = vpack.c.b16 %v1932, %v1931
          %v1981 = vpack.c.b16 %v1934, %v1933
          %v1982 = vpack.c.b16 %v1936, %v1935
          %v1983 = vpack.c.b16 %v1938, %v1937
          %v1984 = vpack.c.b16 %v1940, %v1939
          %v1985 = vpack.c.b16 %v1942, %v1941
          %v1986 = vpack.c.b16 %v1944, %v1943
          %v1987 = vpack.c.b16 %v1946, %v1945
          %v1988 = vpack.c.b16 %v1948, %v1947
          %v1989 = vpack.c.b16 %v1950, %v1949
          %v1990 = vpack.c.b16 %v1952, %v1951
          %v1991 = vpack.c.b16 %v1954, %v1953
          %v1992 = vpack.c.b16 %v1956, %v1955
          %v1993 = vpack.c.b16 %v1958, %v1957
          %v1994 = vpack.c.b16 %v1960, %v1959
          %v1995 = vpack.c.b16 %v1962, %v1961
          %v1996 = vpack.c.b16 %v1964, %v1963
          %vm1997 = vcmask 261120
          %v1999 = vsel %vm1997, %v1821, 0
          %v2002 = vsel %vm1997, %v1822, 0
          %v2005 = vsel %vm1997, %v1823, 0
          %v2008 = vsel %vm1997, %v1824, 0
          %v2011 = vsel %vm1997, %v1825, 0
          %v2014 = vsel %vm1997, %v1826, 0
          %v2017 = vsel %vm1997, %v1827, 0
          %v2020 = vsel %vm1997, %v1828, 0
          %v2023 = vsel %vm1997, %v1829, 0
          %v2026 = vsel %vm1997, %v1830, 0
          %v2029 = vsel %vm1997, %v1831, 0
          %v2032 = vsel %vm1997, %v1832, 0
          %v2035 = vsel %vm1997, %v1833, 0
          %v2038 = vsel %vm1997, %v1834, 0
          %v2041 = vsel %vm1997, %v1835, 0
          %v2044 = vsel %vm1997, %v1836, 0
          %v2047 = vsel %vm1997, %v1965, 0
          %v2050 = vsel %vm1997, %v1966, 0
          %v2053 = vsel %vm1997, %v1967, 0
          %v2056 = vsel %vm1997, %v1968, 0
          %v2059 = vsel %vm1997, %v1969, 0
          %v2062 = vsel %vm1997, %v1970, 0
          %v2065 = vsel %vm1997, %v1971, 0
          %v2068 = vsel %vm1997, %v1972, 0
          %v2071 = vsel %vm1997, %v1973, 0
          %v2074 = vsel %vm1997, %v1974, 0
          %v2077 = vsel %vm1997, %v1975, 0
          %v2080 = vsel %vm1997, %v1976, 0
          %v2083 = vsel %vm1997, %v1977, 0
          %v2086 = vsel %vm1997, %v1978, 0
          %v2089 = vsel %vm1997, %v1979, 0
          %v2092 = vsel %vm1997, %v1980, 0
          %v2095 = vsel %vm1997, %v1981, 0
          %v2098 = vsel %vm1997, %v1982, 0
          %v2101 = vsel %vm1997, %v1983, 0
          %v2104 = vsel %vm1997, %v1984, 0
          %v2107 = vsel %vm1997, %v1985, 0
          %v2110 = vsel %vm1997, %v1986, 0
          %v2113 = vsel %vm1997, %v1987, 0
          %v2116 = vsel %vm1997, %v1988, 0
          %v2119 = vsel %vm1997, %v1989, 0
          %v2122 = vsel %vm1997, %v1990, 0
          %v2125 = vsel %vm1997, %v1991, 0
          %v2128 = vsel %vm1997, %v1992, 0
          %v2131 = vsel %vm1997, %v1993, 0
          %v2134 = vsel %vm1997, %v1994, 0
          %v2137 = vsel %vm1997, %v1995, 0
          %v2140 = vsel %vm1997, %v1996, 0
          %2142 = vmatpush.bf16.xpose.msra.mxu0 %v2068
          %2143 = vmatpush.bf16.xpose.msra.mxu0 %v2065
          %2144 = vmatpush.bf16.xpose.msra.mxu0 %v2062
          %2145 = vmatpush.bf16.xpose.msra.mxu0 %v2059
          %2146 = vmatpush.bf16.xpose.msra.mxu0 %v2056
          %2147 = vmatpush.bf16.xpose.msra.mxu0 %v2053
          %2148 = vmatpush.bf16.xpose.msra.mxu0 %v2050
          %2149 = vmatpush.bf16.xpose.msra.mxu0 %v2047
          %2150 = vmatmul.bf16.gmra.mxu0 %v1999
          %v2151 = vpop.f32.mrf.mxu0
          %v2152 = vadd.f32 0.0, %v2151
          %v2153 = vpop.f32.mrf.mxu0
          %v2154 = vadd.f32 0.0, %v2153
          %2155 = vmatmul.bf16.gmra.mxu0 %v2002
          %v2156 = vpop.f32.mrf.mxu0
          %v2157 = vadd.f32 0.0, %v2156
          %v2158 = vpop.f32.mrf.mxu0
          %v2159 = vadd.f32 0.0, %v2158
          %2160 = vmatmul.bf16.gmra.mxu0 %v2005
          %v2161 = vpop.f32.mrf.mxu0
          %v2162 = vadd.f32 0.0, %v2161
          %v2163 = vpop.f32.mrf.mxu0
          %v2164 = vadd.f32 0.0, %v2163
          %2165 = vmatmul.bf16.gmra.mxu0 %v2008
          %v2166 = vpop.f32.mrf.mxu0
          %v2167 = vadd.f32 0.0, %v2166
          %v2168 = vpop.f32.mrf.mxu0
          %v2169 = vadd.f32 0.0, %v2168
          %2170 = vmatmul.bf16.gmra.mxu0 %v2011
          %v2171 = vpop.f32.mrf.mxu0
          %v2172 = vadd.f32 0.0, %v2171
          %v2173 = vpop.f32.mrf.mxu0
          %v2174 = vadd.f32 0.0, %v2173
          %2175 = vmatmul.bf16.gmra.mxu0 %v2014
          %v2176 = vpop.f32.mrf.mxu0
          %v2177 = vadd.f32 0.0, %v2176
          %v2178 = vpop.f32.mrf.mxu0
          %v2179 = vadd.f32 0.0, %v2178
          %2180 = vmatmul.bf16.gmra.mxu0 %v2017
          %v2181 = vpop.f32.mrf.mxu0
          %v2182 = vadd.f32 0.0, %v2181
          %v2183 = vpop.f32.mrf.mxu0
          %v2184 = vadd.f32 0.0, %v2183
          %2185 = vmatmul.bf16.gmra.mxu0 %v2020
          %v2186 = vpop.f32.mrf.mxu0
          %v2187 = vadd.f32 0.0, %v2186
          %v2188 = vpop.f32.mrf.mxu0
          %v2189 = vadd.f32 0.0, %v2188
          %2190 = vmatmul.bf16.gmra.mxu0 %v2023
          %v2191 = vpop.f32.mrf.mxu0
          %v2192 = vadd.f32 0.0, %v2191
          %v2193 = vpop.f32.mrf.mxu0
          %v2194 = vadd.f32 0.0, %v2193
          %2195 = vmatmul.bf16.gmra.mxu0 %v2026
          %v2196 = vpop.f32.mrf.mxu0
          %v2197 = vadd.f32 0.0, %v2196
          %v2198 = vpop.f32.mrf.mxu0
          %v2199 = vadd.f32 0.0, %v2198
          %2200 = vmatmul.bf16.gmra.mxu0 %v2029
          %v2201 = vpop.f32.mrf.mxu0
          %v2202 = vadd.f32 0.0, %v2201
          %v2203 = vpop.f32.mrf.mxu0
          %v2204 = vadd.f32 0.0, %v2203
          %2205 = vmatmul.bf16.gmra.mxu0 %v2032
          %v2206 = vpop.f32.mrf.mxu0
          %v2207 = vadd.f32 0.0, %v2206
          %v2208 = vpop.f32.mrf.mxu0
          %v2209 = vadd.f32 0.0, %v2208
          %2210 = vmatmul.bf16.gmra.mxu0 %v2035
          %v2211 = vpop.f32.mrf.mxu0
          %v2212 = vadd.f32 0.0, %v2211
          %v2213 = vpop.f32.mrf.mxu0
          %v2214 = vadd.f32 0.0, %v2213
          %2215 = vmatmul.bf16.gmra.mxu0 %v2038
          %v2216 = vpop.f32.mrf.mxu0
          %v2217 = vadd.f32 0.0, %v2216
          %v2218 = vpop.f32.mrf.mxu0
          %v2219 = vadd.f32 0.0, %v2218
          %2220 = vmatmul.bf16.gmra.mxu0 %v2041
          %v2221 = vpop.f32.mrf.mxu0
          %v2222 = vadd.f32 0.0, %v2221
          %v2223 = vpop.f32.mrf.mxu0
          %v2224 = vadd.f32 0.0, %v2223
          %2225 = vmatmul.bf16.gmra.mxu0 %v2044
          %v2226 = vpop.f32.mrf.mxu0
          %v2227 = vadd.f32 0.0, %v2226
          %v2228 = vpop.f32.mrf.mxu0
          %v2229 = vadd.f32 0.0, %v2228
          %2230 = vdwg.mxu0
          %2231 = vmatpush.bf16.xpose.msra.mxu0 %v2092
          %2232 = vmatpush.bf16.xpose.msra.mxu0 %v2089
          %2233 = vmatpush.bf16.xpose.msra.mxu0 %v2086
          %2234 = vmatpush.bf16.xpose.msra.mxu0 %v2083
          %2235 = vmatpush.bf16.xpose.msra.mxu0 %v2080
          %2236 = vmatpush.bf16.xpose.msra.mxu0 %v2077
          %2237 = vmatpush.bf16.xpose.msra.mxu0 %v2074
          %2238 = vmatpush.bf16.xpose.msra.mxu0 %v2071
          %2239 = vmatmul.bf16.gmra.mxu0 %v1999
          %v2240 = vpop.f32.mrf.mxu0
          %v2241 = vadd.f32 0.0, %v2240
          %v2242 = vpop.f32.mrf.mxu0
          %v2243 = vadd.f32 0.0, %v2242
          %2244 = vmatmul.bf16.gmra.mxu0 %v2002
          %v2245 = vpop.f32.mrf.mxu0
          %v2246 = vadd.f32 0.0, %v2245
          %v2247 = vpop.f32.mrf.mxu0
          %v2248 = vadd.f32 0.0, %v2247
          %2249 = vmatmul.bf16.gmra.mxu0 %v2005
          %v2250 = vpop.f32.mrf.mxu0
          %v2251 = vadd.f32 0.0, %v2250
          %v2252 = vpop.f32.mrf.mxu0
          %v2253 = vadd.f32 0.0, %v2252
          %2254 = vmatmul.bf16.gmra.mxu0 %v2008
          %v2255 = vpop.f32.mrf.mxu0
          %v2256 = vadd.f32 0.0, %v2255
          %v2257 = vpop.f32.mrf.mxu0
          %v2258 = vadd.f32 0.0, %v2257
          %2259 = vmatmul.bf16.gmra.mxu0 %v2011
          %v2260 = vpop.f32.mrf.mxu0
          %v2261 = vadd.f32 0.0, %v2260
          %v2262 = vpop.f32.mrf.mxu0
          %v2263 = vadd.f32 0.0, %v2262
          %2264 = vmatmul.bf16.gmra.mxu0 %v2014
          %v2265 = vpop.f32.mrf.mxu0
          %v2266 = vadd.f32 0.0, %v2265
          %v2267 = vpop.f32.mrf.mxu0
          %v2268 = vadd.f32 0.0, %v2267
          %2269 = vmatmul.bf16.gmra.mxu0 %v2017
          %v2270 = vpop.f32.mrf.mxu0
          %v2271 = vadd.f32 0.0, %v2270
          %v2272 = vpop.f32.mrf.mxu0
          %v2273 = vadd.f32 0.0, %v2272
          %2274 = vmatmul.bf16.gmra.mxu0 %v2020
          %v2275 = vpop.f32.mrf.mxu0
          %v2276 = vadd.f32 0.0, %v2275
          %v2277 = vpop.f32.mrf.mxu0
          %v2278 = vadd.f32 0.0, %v2277
          %2279 = vmatmul.bf16.gmra.mxu0 %v2023
          %v2280 = vpop.f32.mrf.mxu0
          %v2281 = vadd.f32 0.0, %v2280
          %v2282 = vpop.f32.mrf.mxu0
          %v2283 = vadd.f32 0.0, %v2282
          %2284 = vmatmul.bf16.gmra.mxu0 %v2026
          %v2285 = vpop.f32.mrf.mxu0
          %v2286 = vadd.f32 0.0, %v2285
          %v2287 = vpop.f32.mrf.mxu0
          %v2288 = vadd.f32 0.0, %v2287
          %2289 = vmatmul.bf16.gmra.mxu0 %v2029
          %v2290 = vpop.f32.mrf.mxu0
          %v2291 = vadd.f32 0.0, %v2290
          %v2292 = vpop.f32.mrf.mxu0
          %v2293 = vadd.f32 0.0, %v2292
          %2294 = vmatmul.bf16.gmra.mxu0 %v2032
          %v2295 = vpop.f32.mrf.mxu0
          %v2296 = vadd.f32 0.0, %v2295
          %v2297 = vpop.f32.mrf.mxu0
          %v2298 = vadd.f32 0.0, %v2297
          %2299 = vmatmul.bf16.gmra.mxu0 %v2035
          %v2300 = vpop.f32.mrf.mxu0
          %v2301 = vadd.f32 0.0, %v2300
          %v2302 = vpop.f32.mrf.mxu0
          %v2303 = vadd.f32 0.0, %v2302
          %2304 = vmatmul.bf16.gmra.mxu0 %v2038
          %v2305 = vpop.f32.mrf.mxu0
          %v2306 = vadd.f32 0.0, %v2305
          %v2307 = vpop.f32.mrf.mxu0
          %v2308 = vadd.f32 0.0, %v2307
          %2309 = vmatmul.bf16.gmra.mxu0 %v2041
          %v2310 = vpop.f32.mrf.mxu0
          %v2311 = vadd.f32 0.0, %v2310
          %v2312 = vpop.f32.mrf.mxu0
          %v2313 = vadd.f32 0.0, %v2312
          %2314 = vmatmul.bf16.gmra.mxu0 %v2044
          %v2315 = vpop.f32.mrf.mxu0
          %v2316 = vadd.f32 0.0, %v2315
          %v2317 = vpop.f32.mrf.mxu0
          %v2318 = vadd.f32 0.0, %v2317
          %2319 = vdwg.mxu0
          %2320 = vmatpush.bf16.xpose.msra.mxu0 %v2116
          %2321 = vmatpush.bf16.xpose.msra.mxu0 %v2113
          %2322 = vmatpush.bf16.xpose.msra.mxu0 %v2110
          %2323 = vmatpush.bf16.xpose.msra.mxu0 %v2107
          %2324 = vmatpush.bf16.xpose.msra.mxu0 %v2104
          %2325 = vmatpush.bf16.xpose.msra.mxu0 %v2101
          %2326 = vmatpush.bf16.xpose.msra.mxu0 %v2098
          %2327 = vmatpush.bf16.xpose.msra.mxu0 %v2095
          %2328 = vmatmul.bf16.gmra.mxu0 %v1999
          %v2329 = vpop.f32.mrf.mxu0
          %v2330 = vadd.f32 0.0, %v2329
          %v2331 = vpop.f32.mrf.mxu0
          %v2332 = vadd.f32 0.0, %v2331
          %2333 = vmatmul.bf16.gmra.mxu0 %v2002
          %v2334 = vpop.f32.mrf.mxu0
          %v2335 = vadd.f32 0.0, %v2334
          %v2336 = vpop.f32.mrf.mxu0
          %v2337 = vadd.f32 0.0, %v2336
          %2338 = vmatmul.bf16.gmra.mxu0 %v2005
          %v2339 = vpop.f32.mrf.mxu0
          %v2340 = vadd.f32 0.0, %v2339
          %v2341 = vpop.f32.mrf.mxu0
          %v2342 = vadd.f32 0.0, %v2341
          %2343 = vmatmul.bf16.gmra.mxu0 %v2008
          %v2344 = vpop.f32.mrf.mxu0
          %v2345 = vadd.f32 0.0, %v2344
          %v2346 = vpop.f32.mrf.mxu0
          %v2347 = vadd.f32 0.0, %v2346
          %2348 = vmatmul.bf16.gmra.mxu0 %v2011
          %v2349 = vpop.f32.mrf.mxu0
          %v2350 = vadd.f32 0.0, %v2349
          %v2351 = vpop.f32.mrf.mxu0
          %v2352 = vadd.f32 0.0, %v2351
          %2353 = vmatmul.bf16.gmra.mxu0 %v2014
          %v2354 = vpop.f32.mrf.mxu0
          %v2355 = vadd.f32 0.0, %v2354
          %v2356 = vpop.f32.mrf.mxu0
          %v2357 = vadd.f32 0.0, %v2356
          %2358 = vmatmul.bf16.gmra.mxu0 %v2017
          %v2359 = vpop.f32.mrf.mxu0
          %v2360 = vadd.f32 0.0, %v2359
          %v2361 = vpop.f32.mrf.mxu0
          %v2362 = vadd.f32 0.0, %v2361
          %2363 = vmatmul.bf16.gmra.mxu0 %v2020
          %v2364 = vpop.f32.mrf.mxu0
          %v2365 = vadd.f32 0.0, %v2364
          %v2366 = vpop.f32.mrf.mxu0
          %v2367 = vadd.f32 0.0, %v2366
          %2368 = vmatmul.bf16.gmra.mxu0 %v2023
          %v2369 = vpop.f32.mrf.mxu0
          %v2370 = vadd.f32 0.0, %v2369
          %v2371 = vpop.f32.mrf.mxu0
          %v2372 = vadd.f32 0.0, %v2371
          %2373 = vmatmul.bf16.gmra.mxu0 %v2026
          %v2374 = vpop.f32.mrf.mxu0
          %v2375 = vadd.f32 0.0, %v2374
          %v2376 = vpop.f32.mrf.mxu0
          %v2377 = vadd.f32 0.0, %v2376
          %2378 = vmatmul.bf16.gmra.mxu0 %v2029
          %v2379 = vpop.f32.mrf.mxu0
          %v2380 = vadd.f32 0.0, %v2379
          %v2381 = vpop.f32.mrf.mxu0
          %v2382 = vadd.f32 0.0, %v2381
          %2383 = vmatmul.bf16.gmra.mxu0 %v2032
          %v2384 = vpop.f32.mrf.mxu0
          %v2385 = vadd.f32 0.0, %v2384
          %v2386 = vpop.f32.mrf.mxu0
          %v2387 = vadd.f32 0.0, %v2386
          %2388 = vmatmul.bf16.gmra.mxu0 %v2035
          %v2389 = vpop.f32.mrf.mxu0
          %v2390 = vadd.f32 0.0, %v2389
          %v2391 = vpop.f32.mrf.mxu0
          %v2392 = vadd.f32 0.0, %v2391
          %2393 = vmatmul.bf16.gmra.mxu0 %v2038
          %v2394 = vpop.f32.mrf.mxu0
          %v2395 = vadd.f32 0.0, %v2394
          %v2396 = vpop.f32.mrf.mxu0
          %v2397 = vadd.f32 0.0, %v2396
          %2398 = vmatmul.bf16.gmra.mxu0 %v2041
          %v2399 = vpop.f32.mrf.mxu0
          %v2400 = vadd.f32 0.0, %v2399
          %v2401 = vpop.f32.mrf.mxu0
          %v2402 = vadd.f32 0.0, %v2401
          %2403 = vmatmul.bf16.gmra.mxu0 %v2044
          %v2404 = vpop.f32.mrf.mxu0
          %v2405 = vadd.f32 0.0, %v2404
          %v2406 = vpop.f32.mrf.mxu0
          %v2407 = vadd.f32 0.0, %v2406
          %2408 = vdwg.mxu0
          %2409 = vmatpush.bf16.xpose.msra.mxu0 %v2140
          %2410 = vmatpush.bf16.xpose.msra.mxu0 %v2137
          %2411 = vmatpush.bf16.xpose.msra.mxu0 %v2134
          %2412 = vmatpush.bf16.xpose.msra.mxu0 %v2131
          %2413 = vmatpush.bf16.xpose.msra.mxu0 %v2128
          %2414 = vmatpush.bf16.xpose.msra.mxu0 %v2125
          %2415 = vmatpush.bf16.xpose.msra.mxu0 %v2122
          %2416 = vmatpush.bf16.xpose.msra.mxu0 %v2119
          %2417 = vmatmul.bf16.gmra.mxu0 %v1999
          %v2418 = vpop.f32.mrf.mxu0
          %v2419 = vadd.f32 0.0, %v2418
          %v2420 = vpop.f32.mrf.mxu0
          %v2421 = vadd.f32 0.0, %v2420
          %2422 = vmatmul.bf16.gmra.mxu0 %v2002
          %v2423 = vpop.f32.mrf.mxu0
          %v2424 = vadd.f32 0.0, %v2423
          %v2425 = vpop.f32.mrf.mxu0
          %v2426 = vadd.f32 0.0, %v2425
          %2427 = vmatmul.bf16.gmra.mxu0 %v2005
          %v2428 = vpop.f32.mrf.mxu0
          %v2429 = vadd.f32 0.0, %v2428
          %v2430 = vpop.f32.mrf.mxu0
          %v2431 = vadd.f32 0.0, %v2430
          %2432 = vmatmul.bf16.gmra.mxu0 %v2008
          %v2433 = vpop.f32.mrf.mxu0
          %v2434 = vadd.f32 0.0, %v2433
          %v2435 = vpop.f32.mrf.mxu0
          %v2436 = vadd.f32 0.0, %v2435
          %2437 = vmatmul.bf16.gmra.mxu0 %v2011
          %v2438 = vpop.f32.mrf.mxu0
          %v2439 = vadd.f32 0.0, %v2438
          %v2440 = vpop.f32.mrf.mxu0
          %v2441 = vadd.f32 0.0, %v2440
          %2442 = vmatmul.bf16.gmra.mxu0 %v2014
          %v2443 = vpop.f32.mrf.mxu0
          %v2444 = vadd.f32 0.0, %v2443
          %v2445 = vpop.f32.mrf.mxu0
          %v2446 = vadd.f32 0.0, %v2445
          %2447 = vmatmul.bf16.gmra.mxu0 %v2017
          %v2448 = vpop.f32.mrf.mxu0
          %v2449 = vadd.f32 0.0, %v2448
          %v2450 = vpop.f32.mrf.mxu0
          %v2451 = vadd.f32 0.0, %v2450
          %2452 = vmatmul.bf16.gmra.mxu0 %v2020
          %v2453 = vpop.f32.mrf.mxu0
          %v2454 = vadd.f32 0.0, %v2453
          %v2455 = vpop.f32.mrf.mxu0
          %v2456 = vadd.f32 0.0, %v2455
          %2457 = vmatmul.bf16.gmra.mxu0 %v2023
          %v2458 = vpop.f32.mrf.mxu0
          %v2459 = vadd.f32 0.0, %v2458
          %v2460 = vpop.f32.mrf.mxu0
          %v2461 = vadd.f32 0.0, %v2460
          %2462 = vmatmul.bf16.gmra.mxu0 %v2026
          %v2463 = vpop.f32.mrf.mxu0
          %v2464 = vadd.f32 0.0, %v2463
          %v2465 = vpop.f32.mrf.mxu0
          %v2466 = vadd.f32 0.0, %v2465
          %2467 = vmatmul.bf16.gmra.mxu0 %v2029
          %v2468 = vpop.f32.mrf.mxu0
          %v2469 = vadd.f32 0.0, %v2468
          %v2470 = vpop.f32.mrf.mxu0
          %v2471 = vadd.f32 0.0, %v2470
          %2472 = vmatmul.bf16.gmra.mxu0 %v2032
          %v2473 = vpop.f32.mrf.mxu0
          %v2474 = vadd.f32 0.0, %v2473
          %v2475 = vpop.f32.mrf.mxu0
          %v2476 = vadd.f32 0.0, %v2475
          %2477 = vmatmul.bf16.gmra.mxu0 %v2035
          %v2478 = vpop.f32.mrf.mxu0
          %v2479 = vadd.f32 0.0, %v2478
          %v2480 = vpop.f32.mrf.mxu0
          %v2481 = vadd.f32 0.0, %v2480
          %2482 = vmatmul.bf16.gmra.mxu0 %v2038
          %v2483 = vpop.f32.mrf.mxu0
          %v2484 = vadd.f32 0.0, %v2483
          %v2485 = vpop.f32.mrf.mxu0
          %v2486 = vadd.f32 0.0, %v2485
          %2487 = vmatmul.bf16.gmra.mxu0 %v2041
          %v2488 = vpop.f32.mrf.mxu0
          %v2489 = vadd.f32 0.0, %v2488
          %v2490 = vpop.f32.mrf.mxu0
          %v2491 = vadd.f32 0.0, %v2490
          %2492 = vmatmul.bf16.gmra.mxu0 %v2044
          %v2493 = vpop.f32.mrf.mxu0
          %v2494 = vadd.f32 0.0, %v2493
          %v2495 = vpop.f32.mrf.mxu0
          %v2496 = vadd.f32 0.0, %v2495
          %2497 = vdwg.mxu0
          %v2498 = vmax.f32 %v2152, %v2241
          %v2499 = vmax.f32 %v2498, %v2330
          %v2500 = vmax.f32 %v2499, %v2419
          %2501 = vmax.xlane.f32.xlu0 %v2500
          %v2502 = vpop.xlane.xlu0 %2501
          %v2503 = vmax.f32 %v2154, %v2243
          %v2504 = vmax.f32 %v2503, %v2332
          %v2505 = vmax.f32 %v2504, %v2421
          %2506 = vmax.xlane.f32.xlu0 %v2505
          %v2507 = vpop.xlane.xlu0 %2506
          %v2508 = vmax.f32 %v2157, %v2246
          %v2509 = vmax.f32 %v2508, %v2335
          %v2510 = vmax.f32 %v2509, %v2424
          %2511 = vmax.xlane.f32.xlu0 %v2510
          %v2512 = vpop.xlane.xlu0 %2511
          %v2513 = vmax.f32 %v2159, %v2248
          %v2514 = vmax.f32 %v2513, %v2337
          %v2515 = vmax.f32 %v2514, %v2426
          %2516 = vmax.xlane.f32.xlu0 %v2515
          %v2517 = vpop.xlane.xlu0 %2516
          %v2518 = vmax.f32 %v2162, %v2251
          %v2519 = vmax.f32 %v2518, %v2340
          %v2520 = vmax.f32 %v2519, %v2429
          %2521 = vmax.xlane.f32.xlu0 %v2520
          %v2522 = vpop.xlane.xlu0 %2521
          %v2523 = vmax.f32 %v2164, %v2253
          %v2524 = vmax.f32 %v2523, %v2342
          %v2525 = vmax.f32 %v2524, %v2431
          %2526 = vmax.xlane.f32.xlu0 %v2525
          %v2527 = vpop.xlane.xlu0 %2526
          %v2528 = vmax.f32 %v2167, %v2256
          %v2529 = vmax.f32 %v2528, %v2345
          %v2530 = vmax.f32 %v2529, %v2434
          %2531 = vmax.xlane.f32.xlu0 %v2530
          %v2532 = vpop.xlane.xlu0 %2531
          %v2533 = vmax.f32 %v2169, %v2258
          %v2534 = vmax.f32 %v2533, %v2347
          %v2535 = vmax.f32 %v2534, %v2436
          %2536 = vmax.xlane.f32.xlu0 %v2535
          %v2537 = vpop.xlane.xlu0 %2536
          %v2538 = vmax.f32 %v2172, %v2261
          %v2539 = vmax.f32 %v2538, %v2350
          %v2540 = vmax.f32 %v2539, %v2439
          %2541 = vmax.xlane.f32.xlu0 %v2540
          %v2542 = vpop.xlane.xlu0 %2541
          %v2543 = vmax.f32 %v2174, %v2263
          %v2544 = vmax.f32 %v2543, %v2352
          %v2545 = vmax.f32 %v2544, %v2441
          %2546 = vmax.xlane.f32.xlu0 %v2545
          %v2547 = vpop.xlane.xlu0 %2546
          %v2548 = vmax.f32 %v2177, %v2266
          %v2549 = vmax.f32 %v2548, %v2355
          %v2550 = vmax.f32 %v2549, %v2444
          %2551 = vmax.xlane.f32.xlu0 %v2550
          %v2552 = vpop.xlane.xlu0 %2551
          %v2553 = vmax.f32 %v2179, %v2268
          %v2554 = vmax.f32 %v2553, %v2357
          %v2555 = vmax.f32 %v2554, %v2446
          %2556 = vmax.xlane.f32.xlu0 %v2555
          %v2557 = vpop.xlane.xlu0 %2556
          %v2558 = vmax.f32 %v2182, %v2271
          %v2559 = vmax.f32 %v2558, %v2360
          %v2560 = vmax.f32 %v2559, %v2449
          %2561 = vmax.xlane.f32.xlu0 %v2560
          %v2562 = vpop.xlane.xlu0 %2561
          %v2563 = vmax.f32 %v2184, %v2273
          %v2564 = vmax.f32 %v2563, %v2362
          %v2565 = vmax.f32 %v2564, %v2451
          %2566 = vmax.xlane.f32.xlu0 %v2565
          %v2567 = vpop.xlane.xlu0 %2566
          %v2568 = vmax.f32 %v2187, %v2276
          %v2569 = vmax.f32 %v2568, %v2365
          %v2570 = vmax.f32 %v2569, %v2454
          %2571 = vmax.xlane.f32.xlu0 %v2570
          %v2572 = vpop.xlane.xlu0 %2571
          %v2573 = vmax.f32 %v2189, %v2278
          %v2574 = vmax.f32 %v2573, %v2367
          %v2575 = vmax.f32 %v2574, %v2456
          %2576 = vmax.xlane.f32.xlu0 %v2575
          %v2577 = vpop.xlane.xlu0 %2576
          %v2578 = vmax.f32 %v2192, %v2281
          %v2579 = vmax.f32 %v2578, %v2370
          %v2580 = vmax.f32 %v2579, %v2459
          %2581 = vmax.xlane.f32.xlu0 %v2580
          %v2582 = vpop.xlane.xlu0 %2581
          %v2583 = vmax.f32 %v2194, %v2283
          %v2584 = vmax.f32 %v2583, %v2372
          %v2585 = vmax.f32 %v2584, %v2461
          %2586 = vmax.xlane.f32.xlu0 %v2585
          %v2587 = vpop.xlane.xlu0 %2586
          %v2588 = vmax.f32 %v2197, %v2286
          %v2589 = vmax.f32 %v2588, %v2375
          %v2590 = vmax.f32 %v2589, %v2464
          %2591 = vmax.xlane.f32.xlu0 %v2590
          %v2592 = vpop.xlane.xlu0 %2591
          %v2593 = vmax.f32 %v2199, %v2288
          %v2594 = vmax.f32 %v2593, %v2377
          %v2595 = vmax.f32 %v2594, %v2466
          %2596 = vmax.xlane.f32.xlu0 %v2595
          %v2597 = vpop.xlane.xlu0 %2596
          %v2598 = vmax.f32 %v2202, %v2291
          %v2599 = vmax.f32 %v2598, %v2380
          %v2600 = vmax.f32 %v2599, %v2469
          %2601 = vmax.xlane.f32.xlu0 %v2600
          %v2602 = vpop.xlane.xlu0 %2601
          %v2603 = vmax.f32 %v2204, %v2293
          %v2604 = vmax.f32 %v2603, %v2382
          %v2605 = vmax.f32 %v2604, %v2471
          %2606 = vmax.xlane.f32.xlu0 %v2605
          %v2607 = vpop.xlane.xlu0 %2606
          %v2608 = vmax.f32 %v2207, %v2296
          %v2609 = vmax.f32 %v2608, %v2385
          %v2610 = vmax.f32 %v2609, %v2474
          %2611 = vmax.xlane.f32.xlu0 %v2610
          %v2612 = vpop.xlane.xlu0 %2611
          %v2613 = vmax.f32 %v2209, %v2298
          %v2614 = vmax.f32 %v2613, %v2387
          %v2615 = vmax.f32 %v2614, %v2476
          %2616 = vmax.xlane.f32.xlu0 %v2615
          %v2617 = vpop.xlane.xlu0 %2616
          %v2618 = vmax.f32 %v2212, %v2301
          %v2619 = vmax.f32 %v2618, %v2390
          %v2620 = vmax.f32 %v2619, %v2479
          %2621 = vmax.xlane.f32.xlu0 %v2620
          %v2622 = vpop.xlane.xlu0 %2621
          %v2623 = vmax.f32 %v2214, %v2303
          %v2624 = vmax.f32 %v2623, %v2392
          %v2625 = vmax.f32 %v2624, %v2481
          %2626 = vmax.xlane.f32.xlu0 %v2625
          %v2627 = vpop.xlane.xlu0 %2626
          %v2628 = vmax.f32 %v2217, %v2306
          %v2629 = vmax.f32 %v2628, %v2395
          %v2630 = vmax.f32 %v2629, %v2484
          %2631 = vmax.xlane.f32.xlu0 %v2630
          %v2632 = vpop.xlane.xlu0 %2631
          %v2633 = vmax.f32 %v2219, %v2308
          %v2634 = vmax.f32 %v2633, %v2397
          %v2635 = vmax.f32 %v2634, %v2486
          %2636 = vmax.xlane.f32.xlu0 %v2635
          %v2637 = vpop.xlane.xlu0 %2636
          %v2638 = vmax.f32 %v2222, %v2311
          %v2639 = vmax.f32 %v2638, %v2400
          %v2640 = vmax.f32 %v2639, %v2489
          %2641 = vmax.xlane.f32.xlu0 %v2640
          %v2642 = vpop.xlane.xlu0 %2641
          %v2643 = vmax.f32 %v2224, %v2313
          %v2644 = vmax.f32 %v2643, %v2402
          %v2645 = vmax.f32 %v2644, %v2491
          %2646 = vmax.xlane.f32.xlu0 %v2645
          %v2647 = vpop.xlane.xlu0 %2646
          %v2648 = vmax.f32 %v2227, %v2316
          %v2649 = vmax.f32 %v2648, %v2405
          %v2650 = vmax.f32 %v2649, %v2494
          %2651 = vmax.xlane.f32.xlu0 %v2650
          %v2652 = vpop.xlane.xlu0 %2651
          %v2653 = vmax.f32 %v2229, %v2318
          %v2654 = vmax.f32 %v2653, %v2407
          %v2655 = vmax.f32 %v2654, %v2496
          %2656 = vmax.xlane.f32.xlu0 %v2655
          %v2657 = vpop.xlane.xlu0 %2656
          %v2658 = vsub.f32 %v2152, %v2502
          %v2659 = vsub.f32 %v2241, %v2502
          %v2660 = vsub.f32 %v2330, %v2502
          %v2661 = vsub.f32 %v2419, %v2502
          %v2662 = vsub.f32 %v2154, %v2507
          %v2663 = vsub.f32 %v2243, %v2507
          %v2664 = vsub.f32 %v2332, %v2507
          %v2665 = vsub.f32 %v2421, %v2507
          %v2666 = vsub.f32 %v2157, %v2512
          %v2667 = vsub.f32 %v2246, %v2512
          %v2668 = vsub.f32 %v2335, %v2512
          %v2669 = vsub.f32 %v2424, %v2512
          %v2670 = vsub.f32 %v2159, %v2517
          %v2671 = vsub.f32 %v2248, %v2517
          %v2672 = vsub.f32 %v2337, %v2517
          %v2673 = vsub.f32 %v2426, %v2517
          %v2674 = vsub.f32 %v2162, %v2522
          %v2675 = vsub.f32 %v2251, %v2522
          %v2676 = vsub.f32 %v2340, %v2522
          %v2677 = vsub.f32 %v2429, %v2522
          %v2678 = vsub.f32 %v2164, %v2527
          %v2679 = vsub.f32 %v2253, %v2527
          %v2680 = vsub.f32 %v2342, %v2527
          %v2681 = vsub.f32 %v2431, %v2527
          %v2682 = vsub.f32 %v2167, %v2532
          %v2683 = vsub.f32 %v2256, %v2532
          %v2684 = vsub.f32 %v2345, %v2532
          %v2685 = vsub.f32 %v2434, %v2532
          %v2686 = vsub.f32 %v2169, %v2537
          %v2687 = vsub.f32 %v2258, %v2537
          %v2688 = vsub.f32 %v2347, %v2537
          %v2689 = vsub.f32 %v2436, %v2537
          %v2690 = vsub.f32 %v2172, %v2542
          %v2691 = vsub.f32 %v2261, %v2542
          %v2692 = vsub.f32 %v2350, %v2542
          %v2693 = vsub.f32 %v2439, %v2542
          %v2694 = vsub.f32 %v2174, %v2547
          %v2695 = vsub.f32 %v2263, %v2547
          %v2696 = vsub.f32 %v2352, %v2547
          %v2697 = vsub.f32 %v2441, %v2547
          %v2698 = vsub.f32 %v2177, %v2552
          %v2699 = vsub.f32 %v2266, %v2552
          %v2700 = vsub.f32 %v2355, %v2552
          %v2701 = vsub.f32 %v2444, %v2552
          %v2702 = vsub.f32 %v2179, %v2557
          %v2703 = vsub.f32 %v2268, %v2557
          %v2704 = vsub.f32 %v2357, %v2557
          %v2705 = vsub.f32 %v2446, %v2557
          %v2706 = vsub.f32 %v2182, %v2562
          %v2707 = vsub.f32 %v2271, %v2562
          %v2708 = vsub.f32 %v2360, %v2562
          %v2709 = vsub.f32 %v2449, %v2562
          %v2710 = vsub.f32 %v2184, %v2567
          %v2711 = vsub.f32 %v2273, %v2567
          %v2712 = vsub.f32 %v2362, %v2567
          %v2713 = vsub.f32 %v2451, %v2567
          %v2714 = vsub.f32 %v2187, %v2572
          %v2715 = vsub.f32 %v2276, %v2572
          %v2716 = vsub.f32 %v2365, %v2572
          %v2717 = vsub.f32 %v2454, %v2572
          %v2718 = vsub.f32 %v2189, %v2577
          %v2719 = vsub.f32 %v2278, %v2577
          %v2720 = vsub.f32 %v2367, %v2577
          %v2721 = vsub.f32 %v2456, %v2577
          %v2722 = vsub.f32 %v2192, %v2582
          %v2723 = vsub.f32 %v2281, %v2582
          %v2724 = vsub.f32 %v2370, %v2582
          %v2725 = vsub.f32 %v2459, %v2582
          %v2726 = vsub.f32 %v2194, %v2587
          %v2727 = vsub.f32 %v2283, %v2587
          %v2728 = vsub.f32 %v2372, %v2587
          %v2729 = vsub.f32 %v2461, %v2587
          %v2730 = vsub.f32 %v2197, %v2592
          %v2731 = vsub.f32 %v2286, %v2592
          %v2732 = vsub.f32 %v2375, %v2592
          %v2733 = vsub.f32 %v2464, %v2592
          %v2734 = vsub.f32 %v2199, %v2597
          %v2735 = vsub.f32 %v2288, %v2597
          %v2736 = vsub.f32 %v2377, %v2597
          %v2737 = vsub.f32 %v2466, %v2597
          %v2738 = vsub.f32 %v2202, %v2602
          %v2739 = vsub.f32 %v2291, %v2602
          %v2740 = vsub.f32 %v2380, %v2602
          %v2741 = vsub.f32 %v2469, %v2602
          %v2742 = vsub.f32 %v2204, %v2607
          %v2743 = vsub.f32 %v2293, %v2607
          %v2744 = vsub.f32 %v2382, %v2607
          %v2745 = vsub.f32 %v2471, %v2607
          %v2746 = vsub.f32 %v2207, %v2612
          %v2747 = vsub.f32 %v2296, %v2612
          %v2748 = vsub.f32 %v2385, %v2612
          %v2749 = vsub.f32 %v2474, %v2612
          %v2750 = vsub.f32 %v2209, %v2617
          %v2751 = vsub.f32 %v2298, %v2617
          %v2752 = vsub.f32 %v2387, %v2617
          %v2753 = vsub.f32 %v2476, %v2617
          %v2754 = vsub.f32 %v2212, %v2622
          %v2755 = vsub.f32 %v2301, %v2622
          %v2756 = vsub.f32 %v2390, %v2622
          %v2757 = vsub.f32 %v2479, %v2622
          %v2758 = vsub.f32 %v2214, %v2627
          %v2759 = vsub.f32 %v2303, %v2627
          %v2760 = vsub.f32 %v2392, %v2627
          %v2761 = vsub.f32 %v2481, %v2627
          %v2762 = vsub.f32 %v2217, %v2632
          %v2763 = vsub.f32 %v2306, %v2632
          %v2764 = vsub.f32 %v2395, %v2632
          %v2765 = vsub.f32 %v2484, %v2632
          %v2766 = vsub.f32 %v2219, %v2637
          %v2767 = vsub.f32 %v2308, %v2637
          %v2768 = vsub.f32 %v2397, %v2637
          %v2769 = vsub.f32 %v2486, %v2637
          %v2770 = vsub.f32 %v2222, %v2642
          %v2771 = vsub.f32 %v2311, %v2642
          %v2772 = vsub.f32 %v2400, %v2642
          %v2773 = vsub.f32 %v2489, %v2642
          %v2774 = vsub.f32 %v2224, %v2647
          %v2775 = vsub.f32 %v2313, %v2647
          %v2776 = vsub.f32 %v2402, %v2647
          %v2777 = vsub.f32 %v2491, %v2647
          %v2778 = vsub.f32 %v2227, %v2652
          %v2779 = vsub.f32 %v2316, %v2652
          %v2780 = vsub.f32 %v2405, %v2652
          %v2781 = vsub.f32 %v2494, %v2652
          %v2782 = vsub.f32 %v2229, %v2657
          %v2783 = vsub.f32 %v2318, %v2657
          %v2784 = vsub.f32 %v2407, %v2657
          %v2785 = vsub.f32 %v2496, %v2657
          %v2786 = vmul.f32 %v2658, 1.442695
          %v2787 = vpow.pop %v2786
          %v2788 = vmul.f32 %v2659, 1.442695
          %v2789 = vpow.pop %v2788
          %v2790 = vmul.f32 %v2660, 1.442695
          %v2791 = vpow.pop %v2790
          %v2792 = vmul.f32 %v2661, 1.442695
          %v2793 = vpow.pop %v2792
          %v2794 = vmul.f32 %v2662, 1.442695
          %v2795 = vpow.pop %v2794
          %v2796 = vmul.f32 %v2663, 1.442695
          %v2797 = vpow.pop %v2796
          %v2798 = vmul.f32 %v2664, 1.442695
          %v2799 = vpow.pop %v2798
          %v2800 = vmul.f32 %v2665, 1.442695
          %v2801 = vpow.pop %v2800
          %v2802 = vmul.f32 %v2666, 1.442695
          %v2803 = vpow.pop %v2802
          %v2804 = vmul.f32 %v2667, 1.442695
          %v2805 = vpow.pop %v2804
          %v2806 = vmul.f32 %v2668, 1.442695
          %v2807 = vpow.pop %v2806
          %v2808 = vmul.f32 %v2669, 1.442695
          %v2809 = vpow.pop %v2808
          %v2810 = vmul.f32 %v2670, 1.442695
          %v2811 = vpow.pop %v2810
          %v2812 = vmul.f32 %v2671, 1.442695
          %v2813 = vpow.pop %v2812
          %v2814 = vmul.f32 %v2672, 1.442695
          %v2815 = vpow.pop %v2814
          %v2816 = vmul.f32 %v2673, 1.442695
          %v2817 = vpow.pop %v2816
          %v2818 = vmul.f32 %v2674, 1.442695
          %v2819 = vpow.pop %v2818
          %v2820 = vmul.f32 %v2675, 1.442695
          %v2821 = vpow.pop %v2820
          %v2822 = vmul.f32 %v2676, 1.442695
          %v2823 = vpow.pop %v2822
          %v2824 = vmul.f32 %v2677, 1.442695
          %v2825 = vpow.pop %v2824
          %v2826 = vmul.f32 %v2678, 1.442695
          %v2827 = vpow.pop %v2826
          %v2828 = vmul.f32 %v2679, 1.442695
          %v2829 = vpow.pop %v2828
          %v2830 = vmul.f32 %v2680, 1.442695
          %v2831 = vpow.pop %v2830
          %v2832 = vmul.f32 %v2681, 1.442695
          %v2833 = vpow.pop %v2832
          %v2834 = vmul.f32 %v2682, 1.442695
          %v2835 = vpow.pop %v2834
          %v2836 = vmul.f32 %v2683, 1.442695
          %v2837 = vpow.pop %v2836
          %v2838 = vmul.f32 %v2684, 1.442695
          %v2839 = vpow.pop %v2838
          %v2840 = vmul.f32 %v2685, 1.442695
          %v2841 = vpow.pop %v2840
          %v2842 = vmul.f32 %v2686, 1.442695
          %v2843 = vpow.pop %v2842
          %v2844 = vmul.f32 %v2687, 1.442695
          %v2845 = vpow.pop %v2844
          %v2846 = vmul.f32 %v2688, 1.442695
          %v2847 = vpow.pop %v2846
          %v2848 = vmul.f32 %v2689, 1.442695
          %v2849 = vpow.pop %v2848
          %v2850 = vmul.f32 %v2690, 1.442695
          %v2851 = vpow.pop %v2850
          %v2852 = vmul.f32 %v2691, 1.442695
          %v2853 = vpow.pop %v2852
          %v2854 = vmul.f32 %v2692, 1.442695
          %v2855 = vpow.pop %v2854
          %v2856 = vmul.f32 %v2693, 1.442695
          %v2857 = vpow.pop %v2856
          %v2858 = vmul.f32 %v2694, 1.442695
          %v2859 = vpow.pop %v2858
          %v2860 = vmul.f32 %v2695, 1.442695
          %v2861 = vpow.pop %v2860
          %v2862 = vmul.f32 %v2696, 1.442695
          %v2863 = vpow.pop %v2862
          %v2864 = vmul.f32 %v2697, 1.442695
          %v2865 = vpow.pop %v2864
          %v2866 = vmul.f32 %v2698, 1.442695
          %v2867 = vpow.pop %v2866
          %v2868 = vmul.f32 %v2699, 1.442695
          %v2869 = vpow.pop %v2868
          %v2870 = vmul.f32 %v2700, 1.442695
          %v2871 = vpow.pop %v2870
          %v2872 = vmul.f32 %v2701, 1.442695
          %v2873 = vpow.pop %v2872
          %v2874 = vmul.f32 %v2702, 1.442695
          %v2875 = vpow.pop %v2874
          %v2876 = vmul.f32 %v2703, 1.442695
          %v2877 = vpow.pop %v2876
          %v2878 = vmul.f32 %v2704, 1.442695
          %v2879 = vpow.pop %v2878
          %v2880 = vmul.f32 %v2705, 1.442695
          %v2881 = vpow.pop %v2880
          %v2882 = vmul.f32 %v2706, 1.442695
          %v2883 = vpow.pop %v2882
          %v2884 = vmul.f32 %v2707, 1.442695
          %v2885 = vpow.pop %v2884
          %v2886 = vmul.f32 %v2708, 1.442695
          %v2887 = vpow.pop %v2886
          %v2888 = vmul.f32 %v2709, 1.442695
          %v2889 = vpow.pop %v2888
          %v2890 = vmul.f32 %v2710, 1.442695
          %v2891 = vpow.pop %v2890
          %v2892 = vmul.f32 %v2711, 1.442695
          %v2893 = vpow.pop %v2892
          %v2894 = vmul.f32 %v2712, 1.442695
          %v2895 = vpow.pop %v2894
          %v2896 = vmul.f32 %v2713, 1.442695
          %v2897 = vpow.pop %v2896
          %v2898 = vmul.f32 %v2714, 1.442695
          %v2899 = vpow.pop %v2898
          %v2900 = vmul.f32 %v2715, 1.442695
          %v2901 = vpow.pop %v2900
          %v2902 = vmul.f32 %v2716, 1.442695
          %v2903 = vpow.pop %v2902
          %v2904 = vmul.f32 %v2717, 1.442695
          %v2905 = vpow.pop %v2904
          %v2906 = vmul.f32 %v2718, 1.442695
          %v2907 = vpow.pop %v2906
          %v2908 = vmul.f32 %v2719, 1.442695
          %v2909 = vpow.pop %v2908
          %v2910 = vmul.f32 %v2720, 1.442695
          %v2911 = vpow.pop %v2910
          %v2912 = vmul.f32 %v2721, 1.442695
          %v2913 = vpow.pop %v2912
          %v2914 = vmul.f32 %v2722, 1.442695
          %v2915 = vpow.pop %v2914
          %v2916 = vmul.f32 %v2723, 1.442695
          %v2917 = vpow.pop %v2916
          %v2918 = vmul.f32 %v2724, 1.442695
          %v2919 = vpow.pop %v2918
          %v2920 = vmul.f32 %v2725, 1.442695
          %v2921 = vpow.pop %v2920
          %v2922 = vmul.f32 %v2726, 1.442695
          %v2923 = vpow.pop %v2922
          %v2924 = vmul.f32 %v2727, 1.442695
          %v2925 = vpow.pop %v2924
          %v2926 = vmul.f32 %v2728, 1.442695
          %v2927 = vpow.pop %v2926
          %v2928 = vmul.f32 %v2729, 1.442695
          %v2929 = vpow.pop %v2928
          %v2930 = vmul.f32 %v2730, 1.442695
          %v2931 = vpow.pop %v2930
          %v2932 = vmul.f32 %v2731, 1.442695
          %v2933 = vpow.pop %v2932
          %v2934 = vmul.f32 %v2732, 1.442695
          %v2935 = vpow.pop %v2934
          %v2936 = vmul.f32 %v2733, 1.442695
          %v2937 = vpow.pop %v2936
          %v2938 = vmul.f32 %v2734, 1.442695
          %v2939 = vpow.pop %v2938
          %v2940 = vmul.f32 %v2735, 1.442695
          %v2941 = vpow.pop %v2940
          %v2942 = vmul.f32 %v2736, 1.442695
          %v2943 = vpow.pop %v2942
          %v2944 = vmul.f32 %v2737, 1.442695
          %v2945 = vpow.pop %v2944
          %v2946 = vmul.f32 %v2738, 1.442695
          %v2947 = vpow.pop %v2946
          %v2948 = vmul.f32 %v2739, 1.442695
          %v2949 = vpow.pop %v2948
          %v2950 = vmul.f32 %v2740, 1.442695
          %v2951 = vpow.pop %v2950
          %v2952 = vmul.f32 %v2741, 1.442695
          %v2953 = vpow.pop %v2952
          %v2954 = vmul.f32 %v2742, 1.442695
          %v2955 = vpow.pop %v2954
          %v2956 = vmul.f32 %v2743, 1.442695
          %v2957 = vpow.pop %v2956
          %v2958 = vmul.f32 %v2744, 1.442695
          %v2959 = vpow.pop %v2958
          %v2960 = vmul.f32 %v2745, 1.442695
          %v2961 = vpow.pop %v2960
          %v2962 = vmul.f32 %v2746, 1.442695
          %v2963 = vpow.pop %v2962
          %v2964 = vmul.f32 %v2747, 1.442695
          %v2965 = vpow.pop %v2964
          %v2966 = vmul.f32 %v2748, 1.442695
          %v2967 = vpow.pop %v2966
          %v2968 = vmul.f32 %v2749, 1.442695
          %v2969 = vpow.pop %v2968
          %v2970 = vmul.f32 %v2750, 1.442695
          %v2971 = vpow.pop %v2970
          %v2972 = vmul.f32 %v2751, 1.442695
          %v2973 = vpow.pop %v2972
          %v2974 = vmul.f32 %v2752, 1.442695
          %v2975 = vpow.pop %v2974
          %v2976 = vmul.f32 %v2753, 1.442695
          %v2977 = vpow.pop %v2976
          %v2978 = vmul.f32 %v2754, 1.442695
          %v2979 = vpow.pop %v2978
          %v2980 = vmul.f32 %v2755, 1.442695
          %v2981 = vpow.pop %v2980
          %v2982 = vmul.f32 %v2756, 1.442695
          %v2983 = vpow.pop %v2982
          %v2984 = vmul.f32 %v2757, 1.442695
          %v2985 = vpow.pop %v2984
          %v2986 = vmul.f32 %v2758, 1.442695
          %v2987 = vpow.pop %v2986
          %v2988 = vmul.f32 %v2759, 1.442695
          %v2989 = vpow.pop %v2988
          %v2990 = vmul.f32 %v2760, 1.442695
          %v2991 = vpow.pop %v2990
          %v2992 = vmul.f32 %v2761, 1.442695
          %v2993 = vpow.pop %v2992
          %v2994 = vmul.f32 %v2762, 1.442695
          %v2995 = vpow.pop %v2994
          %v2996 = vmul.f32 %v2763, 1.442695
          %v2997 = vpow.pop %v2996
          %v2998 = vmul.f32 %v2764, 1.442695
          %v2999 = vpow.pop %v2998
          %v3000 = vmul.f32 %v2765, 1.442695
          %v3001 = vpow.pop %v3000
          %v3002 = vmul.f32 %v2766, 1.442695
          %v3003 = vpow.pop %v3002
          %v3004 = vmul.f32 %v2767, 1.442695
          %v3005 = vpow.pop %v3004
          %v3006 = vmul.f32 %v2768, 1.442695
          %v3007 = vpow.pop %v3006
          %v3008 = vmul.f32 %v2769, 1.442695
          %v3009 = vpow.pop %v3008
          %v3010 = vmul.f32 %v2770, 1.442695
          %v3011 = vpow.pop %v3010
          %v3012 = vmul.f32 %v2771, 1.442695
          %v3013 = vpow.pop %v3012
          %v3014 = vmul.f32 %v2772, 1.442695
          %v3015 = vpow.pop %v3014
          %v3016 = vmul.f32 %v2773, 1.442695
          %v3017 = vpow.pop %v3016
          %v3018 = vmul.f32 %v2774, 1.442695
          %v3019 = vpow.pop %v3018
          %v3020 = vmul.f32 %v2775, 1.442695
          %v3021 = vpow.pop %v3020
          %v3022 = vmul.f32 %v2776, 1.442695
          %v3023 = vpow.pop %v3022
          %v3024 = vmul.f32 %v2777, 1.442695
          %v3025 = vpow.pop %v3024
          %v3026 = vmul.f32 %v2778, 1.442695
          %v3027 = vpow.pop %v3026
          %v3028 = vmul.f32 %v2779, 1.442695
          %v3029 = vpow.pop %v3028
          %v3030 = vmul.f32 %v2780, 1.442695
          %v3031 = vpow.pop %v3030
          %v3032 = vmul.f32 %v2781, 1.442695
          %v3033 = vpow.pop %v3032
          %v3034 = vmul.f32 %v2782, 1.442695
          %v3035 = vpow.pop %v3034
          %v3036 = vmul.f32 %v2783, 1.442695
          %v3037 = vpow.pop %v3036
          %v3038 = vmul.f32 %v2784, 1.442695
          %v3039 = vpow.pop %v3038
          %v3040 = vmul.f32 %v2785, 1.442695
          %v3041 = vpow.pop %v3040
          %v3042 = vadd.f32 %v2787, %v2789
          %v3043 = vadd.f32 %v3042, %v2791
          %v3044 = vadd.f32 %v3043, %v2793
          %3045 = vadd.xlane.f32.xlu0 %v3044
          %v3046 = vpop.xlane.xlu0 %3045
          %v3047 = vadd.f32 %v2795, %v2797
          %v3048 = vadd.f32 %v3047, %v2799
          %v3049 = vadd.f32 %v3048, %v2801
          %3050 = vadd.xlane.f32.xlu0 %v3049
          %v3051 = vpop.xlane.xlu0 %3050
          %v3052 = vadd.f32 %v2803, %v2805
          %v3053 = vadd.f32 %v3052, %v2807
          %v3054 = vadd.f32 %v3053, %v2809
          %3055 = vadd.xlane.f32.xlu0 %v3054
          %v3056 = vpop.xlane.xlu0 %3055
          %v3057 = vadd.f32 %v2811, %v2813
          %v3058 = vadd.f32 %v3057, %v2815
          %v3059 = vadd.f32 %v3058, %v2817
          %3060 = vadd.xlane.f32.xlu0 %v3059
          %v3061 = vpop.xlane.xlu0 %3060
          %v3062 = vadd.f32 %v2819, %v2821
          %v3063 = vadd.f32 %v3062, %v2823
          %v3064 = vadd.f32 %v3063, %v2825
          %3065 = vadd.xlane.f32.xlu0 %v3064
          %v3066 = vpop.xlane.xlu0 %3065
          %v3067 = vadd.f32 %v2827, %v2829
          %v3068 = vadd.f32 %v3067, %v2831
          %v3069 = vadd.f32 %v3068, %v2833
          %3070 = vadd.xlane.f32.xlu0 %v3069
          %v3071 = vpop.xlane.xlu0 %3070
          %v3072 = vadd.f32 %v2835, %v2837
          %v3073 = vadd.f32 %v3072, %v2839
          %v3074 = vadd.f32 %v3073, %v2841
          %3075 = vadd.xlane.f32.xlu0 %v3074
          %v3076 = vpop.xlane.xlu0 %3075
          %v3077 = vadd.f32 %v2843, %v2845
          %v3078 = vadd.f32 %v3077, %v2847
          %v3079 = vadd.f32 %v3078, %v2849
          %3080 = vadd.xlane.f32.xlu0 %v3079
          %v3081 = vpop.xlane.xlu0 %3080
          %v3082 = vadd.f32 %v2851, %v2853
          %v3083 = vadd.f32 %v3082, %v2855
          %v3084 = vadd.f32 %v3083, %v2857
          %3085 = vadd.xlane.f32.xlu0 %v3084
          %v3086 = vpop.xlane.xlu0 %3085
          %v3087 = vadd.f32 %v2859, %v2861
          %v3088 = vadd.f32 %v3087, %v2863
          %v3089 = vadd.f32 %v3088, %v2865
          %3090 = vadd.xlane.f32.xlu0 %v3089
          %v3091 = vpop.xlane.xlu0 %3090
          %v3092 = vadd.f32 %v2867, %v2869
          %v3093 = vadd.f32 %v3092, %v2871
          %v3094 = vadd.f32 %v3093, %v2873
          %3095 = vadd.xlane.f32.xlu0 %v3094
          %v3096 = vpop.xlane.xlu0 %3095
          %v3097 = vadd.f32 %v2875, %v2877
          %v3098 = vadd.f32 %v3097, %v2879
          %v3099 = vadd.f32 %v3098, %v2881
          %3100 = vadd.xlane.f32.xlu0 %v3099
          %v3101 = vpop.xlane.xlu0 %3100
          %v3102 = vadd.f32 %v2883, %v2885
          %v3103 = vadd.f32 %v3102, %v2887
          %v3104 = vadd.f32 %v3103, %v2889
          %3105 = vadd.xlane.f32.xlu0 %v3104
          %v3106 = vpop.xlane.xlu0 %3105
          %v3107 = vadd.f32 %v2891, %v2893
          %v3108 = vadd.f32 %v3107, %v2895
          %v3109 = vadd.f32 %v3108, %v2897
          %3110 = vadd.xlane.f32.xlu0 %v3109
          %v3111 = vpop.xlane.xlu0 %3110
          %v3112 = vadd.f32 %v2899, %v2901
          %v3113 = vadd.f32 %v3112, %v2903
          %v3114 = vadd.f32 %v3113, %v2905
          %3115 = vadd.xlane.f32.xlu0 %v3114
          %v3116 = vpop.xlane.xlu0 %3115
          %v3117 = vadd.f32 %v2907, %v2909
          %v3118 = vadd.f32 %v3117, %v2911
          %v3119 = vadd.f32 %v3118, %v2913
          %3120 = vadd.xlane.f32.xlu0 %v3119
          %v3121 = vpop.xlane.xlu0 %3120
          %v3122 = vadd.f32 %v2915, %v2917
          %v3123 = vadd.f32 %v3122, %v2919
          %v3124 = vadd.f32 %v3123, %v2921
          %3125 = vadd.xlane.f32.xlu0 %v3124
          %v3126 = vpop.xlane.xlu0 %3125
          %v3127 = vadd.f32 %v2923, %v2925
          %v3128 = vadd.f32 %v3127, %v2927
          %v3129 = vadd.f32 %v3128, %v2929
          %3130 = vadd.xlane.f32.xlu0 %v3129
          %v3131 = vpop.xlane.xlu0 %3130
          %v3132 = vadd.f32 %v2931, %v2933
          %v3133 = vadd.f32 %v3132, %v2935
          %v3134 = vadd.f32 %v3133, %v2937
          %3135 = vadd.xlane.f32.xlu0 %v3134
          %v3136 = vpop.xlane.xlu0 %3135
          %v3137 = vadd.f32 %v2939, %v2941
          %v3138 = vadd.f32 %v3137, %v2943
          %v3139 = vadd.f32 %v3138, %v2945
          %3140 = vadd.xlane.f32.xlu0 %v3139
          %v3141 = vpop.xlane.xlu0 %3140
          %v3142 = vadd.f32 %v2947, %v2949
          %v3143 = vadd.f32 %v3142, %v2951
          %v3144 = vadd.f32 %v3143, %v2953
          %3145 = vadd.xlane.f32.xlu0 %v3144
          %v3146 = vpop.xlane.xlu0 %3145
          %v3147 = vadd.f32 %v2955, %v2957
          %v3148 = vadd.f32 %v3147, %v2959
          %v3149 = vadd.f32 %v3148, %v2961
          %3150 = vadd.xlane.f32.xlu0 %v3149
          %v3151 = vpop.xlane.xlu0 %3150
          %v3152 = vadd.f32 %v2963, %v2965
          %v3153 = vadd.f32 %v3152, %v2967
          %v3154 = vadd.f32 %v3153, %v2969
          %3155 = vadd.xlane.f32.xlu0 %v3154
          %v3156 = vpop.xlane.xlu0 %3155
          %v3157 = vadd.f32 %v2971, %v2973
          %v3158 = vadd.f32 %v3157, %v2975
          %v3159 = vadd.f32 %v3158, %v2977
          %3160 = vadd.xlane.f32.xlu0 %v3159
          %v3161 = vpop.xlane.xlu0 %3160
          %v3162 = vadd.f32 %v2979, %v2981
          %v3163 = vadd.f32 %v3162, %v2983
          %v3164 = vadd.f32 %v3163, %v2985
          %3165 = vadd.xlane.f32.xlu0 %v3164
          %v3166 = vpop.xlane.xlu0 %3165
          %v3167 = vadd.f32 %v2987, %v2989
          %v3168 = vadd.f32 %v3167, %v2991
          %v3169 = vadd.f32 %v3168, %v2993
          %3170 = vadd.xlane.f32.xlu0 %v3169
          %v3171 = vpop.xlane.xlu0 %3170
          %v3172 = vadd.f32 %v2995, %v2997
          %v3173 = vadd.f32 %v3172, %v2999
          %v3174 = vadd.f32 %v3173, %v3001
          %3175 = vadd.xlane.f32.xlu0 %v3174
          %v3176 = vpop.xlane.xlu0 %3175
          %v3177 = vadd.f32 %v3003, %v3005
          %v3178 = vadd.f32 %v3177, %v3007
          %v3179 = vadd.f32 %v3178, %v3009
          %3180 = vadd.xlane.f32.xlu0 %v3179
          %v3181 = vpop.xlane.xlu0 %3180
          %v3182 = vadd.f32 %v3011, %v3013
          %v3183 = vadd.f32 %v3182, %v3015
          %v3184 = vadd.f32 %v3183, %v3017
          %3185 = vadd.xlane.f32.xlu0 %v3184
          %v3186 = vpop.xlane.xlu0 %3185
          %v3187 = vadd.f32 %v3019, %v3021
          %v3188 = vadd.f32 %v3187, %v3023
          %v3189 = vadd.f32 %v3188, %v3025
          %3190 = vadd.xlane.f32.xlu0 %v3189
          %v3191 = vpop.xlane.xlu0 %3190
          %v3192 = vadd.f32 %v3027, %v3029
          %v3193 = vadd.f32 %v3192, %v3031
          %v3194 = vadd.f32 %v3193, %v3033
          %3195 = vadd.xlane.f32.xlu0 %v3194
          %v3196 = vpop.xlane.xlu0 %3195
          %v3197 = vadd.f32 %v3035, %v3037
          %v3198 = vadd.f32 %v3197, %v3039
          %v3199 = vadd.f32 %v3198, %v3041
          %3200 = vadd.xlane.f32.xlu0 %v3199
          %v3201 = vpop.xlane.xlu0 %3200
          %v3202 = vpack.c.bf16 %v2795, %v2787
          %v3203 = vpack.c.bf16 %v2797, %v2789
          %v3204 = vpack.c.bf16 %v2799, %v2791
          %v3205 = vpack.c.bf16 %v2801, %v2793
          %v3206 = vpack.c.bf16 %v2811, %v2803
          %v3207 = vpack.c.bf16 %v2813, %v2805
          %v3208 = vpack.c.bf16 %v2815, %v2807
          %v3209 = vpack.c.bf16 %v2817, %v2809
          %v3210 = vpack.c.bf16 %v2827, %v2819
          %v3211 = vpack.c.bf16 %v2829, %v2821
          %v3212 = vpack.c.bf16 %v2831, %v2823
          %v3213 = vpack.c.bf16 %v2833, %v2825
          %v3214 = vpack.c.bf16 %v2843, %v2835
          %v3215 = vpack.c.bf16 %v2845, %v2837
          %v3216 = vpack.c.bf16 %v2847, %v2839
          %v3217 = vpack.c.bf16 %v2849, %v2841
          %v3218 = vpack.c.bf16 %v2859, %v2851
          %v3219 = vpack.c.bf16 %v2861, %v2853
          %v3220 = vpack.c.bf16 %v2863, %v2855
          %v3221 = vpack.c.bf16 %v2865, %v2857
          %v3222 = vpack.c.bf16 %v2875, %v2867
          %v3223 = vpack.c.bf16 %v2877, %v2869
          %v3224 = vpack.c.bf16 %v2879, %v2871
          %v3225 = vpack.c.bf16 %v2881, %v2873
          %v3226 = vpack.c.bf16 %v2891, %v2883
          %v3227 = vpack.c.bf16 %v2893, %v2885
          %v3228 = vpack.c.bf16 %v2895, %v2887
          %v3229 = vpack.c.bf16 %v2897, %v2889
          %v3230 = vpack.c.bf16 %v2907, %v2899
          %v3231 = vpack.c.bf16 %v2909, %v2901
          %v3232 = vpack.c.bf16 %v2911, %v2903
          %v3233 = vpack.c.bf16 %v2913, %v2905
          %v3234 = vpack.c.bf16 %v2923, %v2915
          %v3235 = vpack.c.bf16 %v2925, %v2917
          %v3236 = vpack.c.bf16 %v2927, %v2919
          %v3237 = vpack.c.bf16 %v2929, %v2921
          %v3238 = vpack.c.bf16 %v2939, %v2931
          %v3239 = vpack.c.bf16 %v2941, %v2933
          %v3240 = vpack.c.bf16 %v2943, %v2935
          %v3241 = vpack.c.bf16 %v2945, %v2937
          %v3242 = vpack.c.bf16 %v2955, %v2947
          %v3243 = vpack.c.bf16 %v2957, %v2949
          %v3244 = vpack.c.bf16 %v2959, %v2951
          %v3245 = vpack.c.bf16 %v2961, %v2953
          %v3246 = vpack.c.bf16 %v2971, %v2963
          %v3247 = vpack.c.bf16 %v2973, %v2965
          %v3248 = vpack.c.bf16 %v2975, %v2967
          %v3249 = vpack.c.bf16 %v2977, %v2969
          %v3250 = vpack.c.bf16 %v2987, %v2979
          %v3251 = vpack.c.bf16 %v2989, %v2981
          %v3252 = vpack.c.bf16 %v2991, %v2983
          %v3253 = vpack.c.bf16 %v2993, %v2985
          %v3254 = vpack.c.bf16 %v3003, %v2995
          %v3255 = vpack.c.bf16 %v3005, %v2997
          %v3256 = vpack.c.bf16 %v3007, %v2999
          %v3257 = vpack.c.bf16 %v3009, %v3001
          %v3258 = vpack.c.bf16 %v3019, %v3011
          %v3259 = vpack.c.bf16 %v3021, %v3013
          %v3260 = vpack.c.bf16 %v3023, %v3015
          %v3261 = vpack.c.bf16 %v3025, %v3017
          %v3262 = vpack.c.bf16 %v3035, %v3027
          %v3263 = vpack.c.bf16 %v3037, %v3029
          %v3264 = vpack.c.bf16 %v3039, %v3031
          %v3265 = vpack.c.bf16 %v3041, %v3033
          %v3330 = vunpack.c.l.b16 %v1757
          %v3331 = vunpack.c.l.b16 %v1758
          %v3332 = vunpack.c.l.b16 %v1759
          %v3333 = vunpack.c.l.b16 %v1760
          %v3334 = vunpack.c.l.b16 %v1761
          %v3335 = vunpack.c.l.b16 %v1762
          %v3336 = vunpack.c.l.b16 %v1763
          %v3337 = vunpack.c.l.b16 %v1764
          %v3338 = vunpack.c.l.b16 %v1765
          %v3339 = vunpack.c.l.b16 %v1766
          %v3340 = vunpack.c.l.b16 %v1767
          %v3341 = vunpack.c.l.b16 %v1768
          %v3342 = vunpack.c.l.b16 %v1769
          %v3343 = vunpack.c.l.b16 %v1770
          %v3344 = vunpack.c.l.b16 %v1771
          %v3345 = vunpack.c.l.b16 %v1772
          %v3346 = vunpack.c.l.b16 %v1773
          %v3347 = vunpack.c.l.b16 %v1774
          %v3348 = vunpack.c.l.b16 %v1775
          %v3349 = vunpack.c.l.b16 %v1776
          %v3350 = vunpack.c.l.b16 %v1777
          %v3351 = vunpack.c.l.b16 %v1778
          %v3352 = vunpack.c.l.b16 %v1779
          %v3353 = vunpack.c.l.b16 %v1780
          %v3354 = vunpack.c.l.b16 %v1781
          %v3355 = vunpack.c.l.b16 %v1782
          %v3356 = vunpack.c.l.b16 %v1783
          %v3357 = vunpack.c.l.b16 %v1784
          %v3358 = vunpack.c.l.b16 %v1785
          %v3359 = vunpack.c.l.b16 %v1786
          %v3360 = vunpack.c.l.b16 %v1787
          %v3361 = vunpack.c.l.b16 %v1788
          %v3362 = vunpack.c.l.b16 %v1789
          %v3363 = vunpack.c.l.b16 %v1790
          %v3364 = vunpack.c.l.b16 %v1791
          %v3365 = vunpack.c.l.b16 %v1792
          %v3366 = vunpack.c.l.b16 %v1793
          %v3367 = vunpack.c.l.b16 %v1794
          %v3368 = vunpack.c.l.b16 %v1795
          %v3369 = vunpack.c.l.b16 %v1796
          %v3370 = vunpack.c.l.b16 %v1797
          %v3371 = vunpack.c.l.b16 %v1798
          %v3372 = vunpack.c.l.b16 %v1799
          %v3373 = vunpack.c.l.b16 %v1800
          %v3374 = vunpack.c.l.b16 %v1801
          %v3375 = vunpack.c.l.b16 %v1802
          %v3376 = vunpack.c.l.b16 %v1803
          %v3377 = vunpack.c.l.b16 %v1804
          %v3378 = vunpack.c.l.b16 %v1805
          %v3379 = vunpack.c.l.b16 %v1806
          %v3380 = vunpack.c.l.b16 %v1807
          %v3381 = vunpack.c.l.b16 %v1808
          %v3382 = vunpack.c.l.b16 %v1809
          %v3383 = vunpack.c.l.b16 %v1810
          %v3384 = vunpack.c.l.b16 %v1811
          %v3385 = vunpack.c.l.b16 %v1812
          %v3386 = vunpack.c.l.b16 %v1813
          %v3387 = vunpack.c.l.b16 %v1814
          %v3388 = vunpack.c.l.b16 %v1815
          %v3389 = vunpack.c.l.b16 %v1816
          %v3390 = vunpack.c.l.b16 %v1817
          %v3391 = vunpack.c.l.b16 %v1818
          %v3392 = vunpack.c.l.b16 %v1819
          %v3393 = vunpack.c.l.b16 %v1820
          %v3394 = vpack.c.b16 %v3331, %v3330
          %v3395 = vpack.c.b16 %v3333, %v3332
          %v3396 = vpack.c.b16 %v3335, %v3334
          %v3397 = vpack.c.b16 %v3337, %v3336
          %v3398 = vpack.c.b16 %v3339, %v3338
          %v3399 = vpack.c.b16 %v3341, %v3340
          %v3400 = vpack.c.b16 %v3343, %v3342
          %v3401 = vpack.c.b16 %v3345, %v3344
          %v3402 = vpack.c.b16 %v3347, %v3346
          %v3403 = vpack.c.b16 %v3349, %v3348
          %v3404 = vpack.c.b16 %v3351, %v3350
          %v3405 = vpack.c.b16 %v3353, %v3352
          %v3406 = vpack.c.b16 %v3355, %v3354
          %v3407 = vpack.c.b16 %v3357, %v3356
          %v3408 = vpack.c.b16 %v3359, %v3358
          %v3409 = vpack.c.b16 %v3361, %v3360
          %v3410 = vpack.c.b16 %v3363, %v3362
          %v3411 = vpack.c.b16 %v3365, %v3364
          %v3412 = vpack.c.b16 %v3367, %v3366
          %v3413 = vpack.c.b16 %v3369, %v3368
          %v3414 = vpack.c.b16 %v3371, %v3370
          %v3415 = vpack.c.b16 %v3373, %v3372
          %v3416 = vpack.c.b16 %v3375, %v3374
          %v3417 = vpack.c.b16 %v3377, %v3376
          %v3418 = vpack.c.b16 %v3379, %v3378
          %v3419 = vpack.c.b16 %v3381, %v3380
          %v3420 = vpack.c.b16 %v3383, %v3382
          %v3421 = vpack.c.b16 %v3385, %v3384
          %v3422 = vpack.c.b16 %v3387, %v3386
          %v3423 = vpack.c.b16 %v3389, %v3388
          %v3424 = vpack.c.b16 %v3391, %v3390
          %v3425 = vpack.c.b16 %v3393, %v3392
          %3458 = vmatpush.bf16.msra.mxu0 %v3401
          %3459 = vmatpush.bf16.msra.mxu0 %v3400
          %3460 = vmatpush.bf16.msra.mxu0 %v3399
          %3461 = vmatpush.bf16.msra.mxu0 %v3398
          %3462 = vmatpush.bf16.msra.mxu0 %v3397
          %3463 = vmatpush.bf16.msra.mxu0 %v3396
          %3464 = vmatpush.bf16.msra.mxu0 %v3395
          %3465 = vmatpush.bf16.msra.mxu0 %v3394
          %3466 = vmatmul.bf16.gmra.mxu0 %v3202
          %v3467 = vpop.f32.mrf.mxu0
          %v3468 = vadd.f32 0.0, %v3467
          %v3469 = vpop.f32.mrf.mxu0
          %v3470 = vadd.f32 0.0, %v3469
          %3471 = vmatmul.bf16.gmra.mxu0 %v3206
          %v3472 = vpop.f32.mrf.mxu0
          %v3473 = vadd.f32 0.0, %v3472
          %v3474 = vpop.f32.mrf.mxu0
          %v3475 = vadd.f32 0.0, %v3474
          %3476 = vmatmul.bf16.gmra.mxu0 %v3210
          %v3477 = vpop.f32.mrf.mxu0
          %v3478 = vadd.f32 0.0, %v3477
          %v3479 = vpop.f32.mrf.mxu0
          %v3480 = vadd.f32 0.0, %v3479
          %3481 = vmatmul.bf16.gmra.mxu0 %v3214
          %v3482 = vpop.f32.mrf.mxu0
          %v3483 = vadd.f32 0.0, %v3482
          %v3484 = vpop.f32.mrf.mxu0
          %v3485 = vadd.f32 0.0, %v3484
          %3486 = vmatmul.bf16.gmra.mxu0 %v3218
          %v3487 = vpop.f32.mrf.mxu0
          %v3488 = vadd.f32 0.0, %v3487
          %v3489 = vpop.f32.mrf.mxu0
          %v3490 = vadd.f32 0.0, %v3489
          %3491 = vmatmul.bf16.gmra.mxu0 %v3222
          %v3492 = vpop.f32.mrf.mxu0
          %v3493 = vadd.f32 0.0, %v3492
          %v3494 = vpop.f32.mrf.mxu0
          %v3495 = vadd.f32 0.0, %v3494
          %3496 = vmatmul.bf16.gmra.mxu0 %v3226
          %v3497 = vpop.f32.mrf.mxu0
          %v3498 = vadd.f32 0.0, %v3497
          %v3499 = vpop.f32.mrf.mxu0
          %v3500 = vadd.f32 0.0, %v3499
          %3501 = vmatmul.bf16.gmra.mxu0 %v3230
          %v3502 = vpop.f32.mrf.mxu0
          %v3503 = vadd.f32 0.0, %v3502
          %v3504 = vpop.f32.mrf.mxu0
          %v3505 = vadd.f32 0.0, %v3504
          %3506 = vmatmul.bf16.gmra.mxu0 %v3234
          %v3507 = vpop.f32.mrf.mxu0
          %v3508 = vadd.f32 0.0, %v3507
          %v3509 = vpop.f32.mrf.mxu0
          %v3510 = vadd.f32 0.0, %v3509
          %3511 = vmatmul.bf16.gmra.mxu0 %v3238
          %v3512 = vpop.f32.mrf.mxu0
          %v3513 = vadd.f32 0.0, %v3512
          %v3514 = vpop.f32.mrf.mxu0
          %v3515 = vadd.f32 0.0, %v3514
          %3516 = vmatmul.bf16.gmra.mxu0 %v3242
          %v3517 = vpop.f32.mrf.mxu0
          %v3518 = vadd.f32 0.0, %v3517
          %v3519 = vpop.f32.mrf.mxu0
          %v3520 = vadd.f32 0.0, %v3519
          %3521 = vmatmul.bf16.gmra.mxu0 %v3246
          %v3522 = vpop.f32.mrf.mxu0
          %v3523 = vadd.f32 0.0, %v3522
          %v3524 = vpop.f32.mrf.mxu0
          %v3525 = vadd.f32 0.0, %v3524
          %3526 = vmatmul.bf16.gmra.mxu0 %v3250
          %v3527 = vpop.f32.mrf.mxu0
          %v3528 = vadd.f32 0.0, %v3527
          %v3529 = vpop.f32.mrf.mxu0
          %v3530 = vadd.f32 0.0, %v3529
          %3531 = vmatmul.bf16.gmra.mxu0 %v3254
          %v3532 = vpop.f32.mrf.mxu0
          %v3533 = vadd.f32 0.0, %v3532
          %v3534 = vpop.f32.mrf.mxu0
          %v3535 = vadd.f32 0.0, %v3534
          %3536 = vmatmul.bf16.gmra.mxu0 %v3258
          %v3537 = vpop.f32.mrf.mxu0
          %v3538 = vadd.f32 0.0, %v3537
          %v3539 = vpop.f32.mrf.mxu0
          %v3540 = vadd.f32 0.0, %v3539
          %3541 = vmatmul.bf16.gmra.mxu0 %v3262
          %v3542 = vpop.f32.mrf.mxu0
          %v3543 = vadd.f32 0.0, %v3542
          %v3544 = vpop.f32.mrf.mxu0
          %v3545 = vadd.f32 0.0, %v3544
          %3546 = vdwg.mxu0
          %3547 = vmatpush.bf16.msra.mxu0 %v3409
          %3548 = vmatpush.bf16.msra.mxu0 %v3408
          %3549 = vmatpush.bf16.msra.mxu0 %v3407
          %3550 = vmatpush.bf16.msra.mxu0 %v3406
          %3551 = vmatpush.bf16.msra.mxu0 %v3405
          %3552 = vmatpush.bf16.msra.mxu0 %v3404
          %3553 = vmatpush.bf16.msra.mxu0 %v3403
          %3554 = vmatpush.bf16.msra.mxu0 %v3402
          %3555 = vmatmul.bf16.gmra.mxu0 %v3203
          %v3556 = vpop.f32.mrf.mxu0
          %v3557 = vadd.f32 %v3468, %v3556
          %v3558 = vpop.f32.mrf.mxu0
          %v3559 = vadd.f32 %v3470, %v3558
          %3560 = vmatmul.bf16.gmra.mxu0 %v3207
          %v3561 = vpop.f32.mrf.mxu0
          %v3562 = vadd.f32 %v3473, %v3561
          %v3563 = vpop.f32.mrf.mxu0
          %v3564 = vadd.f32 %v3475, %v3563
          %3565 = vmatmul.bf16.gmra.mxu0 %v3211
          %v3566 = vpop.f32.mrf.mxu0
          %v3567 = vadd.f32 %v3478, %v3566
          %v3568 = vpop.f32.mrf.mxu0
          %v3569 = vadd.f32 %v3480, %v3568
          %3570 = vmatmul.bf16.gmra.mxu0 %v3215
          %v3571 = vpop.f32.mrf.mxu0
          %v3572 = vadd.f32 %v3483, %v3571
          %v3573 = vpop.f32.mrf.mxu0
          %v3574 = vadd.f32 %v3485, %v3573
          %3575 = vmatmul.bf16.gmra.mxu0 %v3219
          %v3576 = vpop.f32.mrf.mxu0
          %v3577 = vadd.f32 %v3488, %v3576
          %v3578 = vpop.f32.mrf.mxu0
          %v3579 = vadd.f32 %v3490, %v3578
          %3580 = vmatmul.bf16.gmra.mxu0 %v3223
          %v3581 = vpop.f32.mrf.mxu0
          %v3582 = vadd.f32 %v3493, %v3581
          %v3583 = vpop.f32.mrf.mxu0
          %v3584 = vadd.f32 %v3495, %v3583
          %3585 = vmatmul.bf16.gmra.mxu0 %v3227
          %v3586 = vpop.f32.mrf.mxu0
          %v3587 = vadd.f32 %v3498, %v3586
          %v3588 = vpop.f32.mrf.mxu0
          %v3589 = vadd.f32 %v3500, %v3588
          %3590 = vmatmul.bf16.gmra.mxu0 %v3231
          %v3591 = vpop.f32.mrf.mxu0
          %v3592 = vadd.f32 %v3503, %v3591
          %v3593 = vpop.f32.mrf.mxu0
          %v3594 = vadd.f32 %v3505, %v3593
          %3595 = vmatmul.bf16.gmra.mxu0 %v3235
          %v3596 = vpop.f32.mrf.mxu0
          %v3597 = vadd.f32 %v3508, %v3596
          %v3598 = vpop.f32.mrf.mxu0
          %v3599 = vadd.f32 %v3510, %v3598
          %3600 = vmatmul.bf16.gmra.mxu0 %v3239
          %v3601 = vpop.f32.mrf.mxu0
          %v3602 = vadd.f32 %v3513, %v3601
          %v3603 = vpop.f32.mrf.mxu0
          %v3604 = vadd.f32 %v3515, %v3603
          %3605 = vmatmul.bf16.gmra.mxu0 %v3243
          %v3606 = vpop.f32.mrf.mxu0
          %v3607 = vadd.f32 %v3518, %v3606
          %v3608 = vpop.f32.mrf.mxu0
          %v3609 = vadd.f32 %v3520, %v3608
          %3610 = vmatmul.bf16.gmra.mxu0 %v3247
          %v3611 = vpop.f32.mrf.mxu0
          %v3612 = vadd.f32 %v3523, %v3611
          %v3613 = vpop.f32.mrf.mxu0
          %v3614 = vadd.f32 %v3525, %v3613
          %3615 = vmatmul.bf16.gmra.mxu0 %v3251
          %v3616 = vpop.f32.mrf.mxu0
          %v3617 = vadd.f32 %v3528, %v3616
          %v3618 = vpop.f32.mrf.mxu0
          %v3619 = vadd.f32 %v3530, %v3618
          %3620 = vmatmul.bf16.gmra.mxu0 %v3255
          %v3621 = vpop.f32.mrf.mxu0
          %v3622 = vadd.f32 %v3533, %v3621
          %v3623 = vpop.f32.mrf.mxu0
          %v3624 = vadd.f32 %v3535, %v3623
          %3625 = vmatmul.bf16.gmra.mxu0 %v3259
          %v3626 = vpop.f32.mrf.mxu0
          %v3627 = vadd.f32 %v3538, %v3626
          %v3628 = vpop.f32.mrf.mxu0
          %v3629 = vadd.f32 %v3540, %v3628
          %3630 = vmatmul.bf16.gmra.mxu0 %v3263
          %v3631 = vpop.f32.mrf.mxu0
          %v3632 = vadd.f32 %v3543, %v3631
          %v3633 = vpop.f32.mrf.mxu0
          %v3634 = vadd.f32 %v3545, %v3633
          %3635 = vdwg.mxu0
          %3636 = vmatpush.bf16.msra.mxu0 %v3417
          %3637 = vmatpush.bf16.msra.mxu0 %v3416
          %3638 = vmatpush.bf16.msra.mxu0 %v3415
          %3639 = vmatpush.bf16.msra.mxu0 %v3414
          %3640 = vmatpush.bf16.msra.mxu0 %v3413
          %3641 = vmatpush.bf16.msra.mxu0 %v3412
          %3642 = vmatpush.bf16.msra.mxu0 %v3411
          %3643 = vmatpush.bf16.msra.mxu0 %v3410
          %3644 = vmatmul.bf16.gmra.mxu0 %v3204
          %v3645 = vpop.f32.mrf.mxu0
          %v3646 = vadd.f32 %v3557, %v3645
          %v3647 = vpop.f32.mrf.mxu0
          %v3648 = vadd.f32 %v3559, %v3647
          %3649 = vmatmul.bf16.gmra.mxu0 %v3208
          %v3650 = vpop.f32.mrf.mxu0
          %v3651 = vadd.f32 %v3562, %v3650
          %v3652 = vpop.f32.mrf.mxu0
          %v3653 = vadd.f32 %v3564, %v3652
          %3654 = vmatmul.bf16.gmra.mxu0 %v3212
          %v3655 = vpop.f32.mrf.mxu0
          %v3656 = vadd.f32 %v3567, %v3655
          %v3657 = vpop.f32.mrf.mxu0
          %v3658 = vadd.f32 %v3569, %v3657
          %3659 = vmatmul.bf16.gmra.mxu0 %v3216
          %v3660 = vpop.f32.mrf.mxu0
          %v3661 = vadd.f32 %v3572, %v3660
          %v3662 = vpop.f32.mrf.mxu0
          %v3663 = vadd.f32 %v3574, %v3662
          %3664 = vmatmul.bf16.gmra.mxu0 %v3220
          %v3665 = vpop.f32.mrf.mxu0
          %v3666 = vadd.f32 %v3577, %v3665
          %v3667 = vpop.f32.mrf.mxu0
          %v3668 = vadd.f32 %v3579, %v3667
          %3669 = vmatmul.bf16.gmra.mxu0 %v3224
          %v3670 = vpop.f32.mrf.mxu0
          %v3671 = vadd.f32 %v3582, %v3670
          %v3672 = vpop.f32.mrf.mxu0
          %v3673 = vadd.f32 %v3584, %v3672
          %3674 = vmatmul.bf16.gmra.mxu0 %v3228
          %v3675 = vpop.f32.mrf.mxu0
          %v3676 = vadd.f32 %v3587, %v3675
          %v3677 = vpop.f32.mrf.mxu0
          %v3678 = vadd.f32 %v3589, %v3677
          %3679 = vmatmul.bf16.gmra.mxu0 %v3232
          %v3680 = vpop.f32.mrf.mxu0
          %v3681 = vadd.f32 %v3592, %v3680
          %v3682 = vpop.f32.mrf.mxu0
          %v3683 = vadd.f32 %v3594, %v3682
          %3684 = vmatmul.bf16.gmra.mxu0 %v3236
          %v3685 = vpop.f32.mrf.mxu0
          %v3686 = vadd.f32 %v3597, %v3685
          %v3687 = vpop.f32.mrf.mxu0
          %v3688 = vadd.f32 %v3599, %v3687
          %3689 = vmatmul.bf16.gmra.mxu0 %v3240
          %v3690 = vpop.f32.mrf.mxu0
          %v3691 = vadd.f32 %v3602, %v3690
          %v3692 = vpop.f32.mrf.mxu0
          %v3693 = vadd.f32 %v3604, %v3692
          %3694 = vmatmul.bf16.gmra.mxu0 %v3244
          %v3695 = vpop.f32.mrf.mxu0
          %v3696 = vadd.f32 %v3607, %v3695
          %v3697 = vpop.f32.mrf.mxu0
          %v3698 = vadd.f32 %v3609, %v3697
          %3699 = vmatmul.bf16.gmra.mxu0 %v3248
          %v3700 = vpop.f32.mrf.mxu0
          %v3701 = vadd.f32 %v3612, %v3700
          %v3702 = vpop.f32.mrf.mxu0
          %v3703 = vadd.f32 %v3614, %v3702
          %3704 = vmatmul.bf16.gmra.mxu0 %v3252
          %v3705 = vpop.f32.mrf.mxu0
          %v3706 = vadd.f32 %v3617, %v3705
          %v3707 = vpop.f32.mrf.mxu0
          %v3708 = vadd.f32 %v3619, %v3707
          %3709 = vmatmul.bf16.gmra.mxu0 %v3256
          %v3710 = vpop.f32.mrf.mxu0
          %v3711 = vadd.f32 %v3622, %v3710
          %v3712 = vpop.f32.mrf.mxu0
          %v3713 = vadd.f32 %v3624, %v3712
          %3714 = vmatmul.bf16.gmra.mxu0 %v3260
          %v3715 = vpop.f32.mrf.mxu0
          %v3716 = vadd.f32 %v3627, %v3715
          %v3717 = vpop.f32.mrf.mxu0
          %v3718 = vadd.f32 %v3629, %v3717
          %3719 = vmatmul.bf16.gmra.mxu0 %v3264
          %v3720 = vpop.f32.mrf.mxu0
          %v3721 = vadd.f32 %v3632, %v3720
          %v3722 = vpop.f32.mrf.mxu0
          %v3723 = vadd.f32 %v3634, %v3722
          %3724 = vdwg.mxu0
          %3725 = vmatpush.bf16.msra.mxu0 %v3425
          %3726 = vmatpush.bf16.msra.mxu0 %v3424
          %3727 = vmatpush.bf16.msra.mxu0 %v3423
          %3728 = vmatpush.bf16.msra.mxu0 %v3422
          %3729 = vmatpush.bf16.msra.mxu0 %v3421
          %3730 = vmatpush.bf16.msra.mxu0 %v3420
          %3731 = vmatpush.bf16.msra.mxu0 %v3419
          %3732 = vmatpush.bf16.msra.mxu0 %v3418
          %3733 = vmatmul.bf16.gmra.mxu0 %v3205
          %v3734 = vpop.f32.mrf.mxu0
          %v3735 = vadd.f32 %v3646, %v3734
          %v3736 = vpop.f32.mrf.mxu0
          %v3737 = vadd.f32 %v3648, %v3736
          %3738 = vmatmul.bf16.gmra.mxu0 %v3209
          %v3739 = vpop.f32.mrf.mxu0
          %v3740 = vadd.f32 %v3651, %v3739
          %v3741 = vpop.f32.mrf.mxu0
          %v3742 = vadd.f32 %v3653, %v3741
          %3743 = vmatmul.bf16.gmra.mxu0 %v3213
          %v3744 = vpop.f32.mrf.mxu0
          %v3745 = vadd.f32 %v3656, %v3744
          %v3746 = vpop.f32.mrf.mxu0
          %v3747 = vadd.f32 %v3658, %v3746
          %3748 = vmatmul.bf16.gmra.mxu0 %v3217
          %v3749 = vpop.f32.mrf.mxu0
          %v3750 = vadd.f32 %v3661, %v3749
          %v3751 = vpop.f32.mrf.mxu0
          %v3752 = vadd.f32 %v3663, %v3751
          %3753 = vmatmul.bf16.gmra.mxu0 %v3221
          %v3754 = vpop.f32.mrf.mxu0
          %v3755 = vadd.f32 %v3666, %v3754
          %v3756 = vpop.f32.mrf.mxu0
          %v3757 = vadd.f32 %v3668, %v3756
          %3758 = vmatmul.bf16.gmra.mxu0 %v3225
          %v3759 = vpop.f32.mrf.mxu0
          %v3760 = vadd.f32 %v3671, %v3759
          %v3761 = vpop.f32.mrf.mxu0
          %v3762 = vadd.f32 %v3673, %v3761
          %3763 = vmatmul.bf16.gmra.mxu0 %v3229
          %v3764 = vpop.f32.mrf.mxu0
          %v3765 = vadd.f32 %v3676, %v3764
          %v3766 = vpop.f32.mrf.mxu0
          %v3767 = vadd.f32 %v3678, %v3766
          %3768 = vmatmul.bf16.gmra.mxu0 %v3233
          %v3769 = vpop.f32.mrf.mxu0
          %v3770 = vadd.f32 %v3681, %v3769
          %v3771 = vpop.f32.mrf.mxu0
          %v3772 = vadd.f32 %v3683, %v3771
          %3773 = vmatmul.bf16.gmra.mxu0 %v3237
          %v3774 = vpop.f32.mrf.mxu0
          %v3775 = vadd.f32 %v3686, %v3774
          %v3776 = vpop.f32.mrf.mxu0
          %v3777 = vadd.f32 %v3688, %v3776
          %3778 = vmatmul.bf16.gmra.mxu0 %v3241
          %v3779 = vpop.f32.mrf.mxu0
          %v3780 = vadd.f32 %v3691, %v3779
          %v3781 = vpop.f32.mrf.mxu0
          %v3782 = vadd.f32 %v3693, %v3781
          %3783 = vmatmul.bf16.gmra.mxu0 %v3245
          %v3784 = vpop.f32.mrf.mxu0
          %v3785 = vadd.f32 %v3696, %v3784
          %v3786 = vpop.f32.mrf.mxu0
          %v3787 = vadd.f32 %v3698, %v3786
          %3788 = vmatmul.bf16.gmra.mxu0 %v3249
          %v3789 = vpop.f32.mrf.mxu0
          %v3790 = vadd.f32 %v3701, %v3789
          %v3791 = vpop.f32.mrf.mxu0
          %v3792 = vadd.f32 %v3703, %v3791
          %3793 = vmatmul.bf16.gmra.mxu0 %v3253
          %v3794 = vpop.f32.mrf.mxu0
          %v3795 = vadd.f32 %v3706, %v3794
          %v3796 = vpop.f32.mrf.mxu0
          %v3797 = vadd.f32 %v3708, %v3796
          %3798 = vmatmul.bf16.gmra.mxu0 %v3257
          %v3799 = vpop.f32.mrf.mxu0
          %v3800 = vadd.f32 %v3711, %v3799
          %v3801 = vpop.f32.mrf.mxu0
          %v3802 = vadd.f32 %v3713, %v3801
          %3803 = vmatmul.bf16.gmra.mxu0 %v3261
          %v3804 = vpop.f32.mrf.mxu0
          %v3805 = vadd.f32 %v3716, %v3804
          %v3806 = vpop.f32.mrf.mxu0
          %v3807 = vadd.f32 %v3718, %v3806
          %3808 = vmatmul.bf16.gmra.mxu0 %v3265
          %v3809 = vpop.f32.mrf.mxu0
          %v3810 = vadd.f32 %v3721, %v3809
          %v3811 = vpop.f32.mrf.mxu0
          %v3812 = vadd.f32 %v3723, %v3811
          %3813 = vdwg.mxu0
          %v3814 = vrcp.pop %v3046
          %v3815 = vrcp.pop %v3051
          %v3816 = vrcp.pop %v3056
          %v3817 = vrcp.pop %v3061
          %v3818 = vrcp.pop %v3066
          %v3819 = vrcp.pop %v3071
          %v3820 = vrcp.pop %v3076
          %v3821 = vrcp.pop %v3081
          %v3822 = vrcp.pop %v3086
          %v3823 = vrcp.pop %v3091
          %v3824 = vrcp.pop %v3096
          %v3825 = vrcp.pop %v3101
          %v3826 = vrcp.pop %v3106
          %v3827 = vrcp.pop %v3111
          %v3828 = vrcp.pop %v3116
          %v3829 = vrcp.pop %v3121
          %v3830 = vrcp.pop %v3126
          %v3831 = vrcp.pop %v3131
          %v3832 = vrcp.pop %v3136
          %v3833 = vrcp.pop %v3141
          %v3834 = vrcp.pop %v3146
          %v3835 = vrcp.pop %v3151
          %v3836 = vrcp.pop %v3156
          %v3837 = vrcp.pop %v3161
          %v3838 = vrcp.pop %v3166
          %v3839 = vrcp.pop %v3171
          %v3840 = vrcp.pop %v3176
          %v3841 = vrcp.pop %v3181
          %v3842 = vrcp.pop %v3186
          %v3843 = vrcp.pop %v3191
          %v3844 = vrcp.pop %v3196
          %v3845 = vrcp.pop %v3201
          %v3846 = vmul.f32 %v3735, %v3814
          %v3847 = vmul.f32 %v3737, %v3815
          %v3848 = vmul.f32 %v3740, %v3816
          %v3849 = vmul.f32 %v3742, %v3817
          %v3850 = vmul.f32 %v3745, %v3818
          %v3851 = vmul.f32 %v3747, %v3819
          %v3852 = vmul.f32 %v3750, %v3820
          %v3853 = vmul.f32 %v3752, %v3821
          %v3854 = vmul.f32 %v3755, %v3822
          %v3855 = vmul.f32 %v3757, %v3823
          %v3856 = vmul.f32 %v3760, %v3824
          %v3857 = vmul.f32 %v3762, %v3825
          %v3858 = vmul.f32 %v3765, %v3826
          %v3859 = vmul.f32 %v3767, %v3827
          %v3860 = vmul.f32 %v3770, %v3828
          %v3861 = vmul.f32 %v3772, %v3829
          %v3862 = vmul.f32 %v3775, %v3830
          %v3863 = vmul.f32 %v3777, %v3831
          %v3864 = vmul.f32 %v3780, %v3832
          %v3865 = vmul.f32 %v3782, %v3833
          %v3866 = vmul.f32 %v3785, %v3834
          %v3867 = vmul.f32 %v3787, %v3835
          %v3868 = vmul.f32 %v3790, %v3836
          %v3869 = vmul.f32 %v3792, %v3837
          %v3870 = vmul.f32 %v3795, %v3838
          %v3871 = vmul.f32 %v3797, %v3839
          %v3872 = vmul.f32 %v3800, %v3840
          %v3873 = vmul.f32 %v3802, %v3841
          %v3874 = vmul.f32 %v3805, %v3842
          %v3875 = vmul.f32 %v3807, %v3843
          %v3876 = vmul.f32 %v3810, %v3844
          %v3877 = vmul.f32 %v3812, %v3845
          %v3878 = vpack.c.bf16 %v3847, %v3846
          %v3879 = vpack.c.bf16 %v3849, %v3848
          %v3880 = vpack.c.bf16 %v3851, %v3850
          %v3881 = vpack.c.bf16 %v3853, %v3852
          %v3882 = vpack.c.bf16 %v3855, %v3854
          %v3883 = vpack.c.bf16 %v3857, %v3856
          %v3884 = vpack.c.bf16 %v3859, %v3858
          %v3885 = vpack.c.bf16 %v3861, %v3860
          %v3886 = vpack.c.bf16 %v3863, %v3862
          %v3887 = vpack.c.bf16 %v3865, %v3864
          %v3888 = vpack.c.bf16 %v3867, %v3866
          %v3889 = vpack.c.bf16 %v3869, %v3868
          %v3890 = vpack.c.bf16 %v3871, %v3870
          %v3891 = vpack.c.bf16 %v3873, %v3872
          %v3892 = vpack.c.bf16 %v3875, %v3874
          %v3893 = vpack.c.bf16 %v3877, %v3876
          %s3894 = smul.u32 %s1394, 4
          %s3895 = smul.addr %s3894, 4
          %s3896 = scalar_lea.vmem %s4, %s3895
          %v3897 = vld [vmem:[%s3896] sm:$0xf]
          %v3898 = vld [vmem:[%s3896 + $0x4] sm:$0xf]
          %v3899 = vld [vmem:[%s3896 + $0x8] sm:$0xf]
          %v3900 = vld [vmem:[%s3896 + $0xc] sm:$0xf]
          %v3905 = vunpack.c.l.b16 %v3897
          %v3906 = vunpack.c.l.b16 %v3898
          %v3907 = vunpack.c.l.b16 %v3899
          %v3908 = vunpack.c.l.b16 %v3900
          %v3909 = vpack.c.b16 %v3906, %v3905
          %v3910 = vpack.c.b16 %v3908, %v3907
          %v3914 = vsel %vm1997, %v3878, 0
          %v3917 = vsel %vm1997, %v3879, 0
          %v3920 = vsel %vm1997, %v3880, 0
          %v3923 = vsel %vm1997, %v3881, 0
          %v3926 = vsel %vm1997, %v3882, 0
          %v3929 = vsel %vm1997, %v3883, 0
          %v3932 = vsel %vm1997, %v3884, 0
          %v3935 = vsel %vm1997, %v3885, 0
          %v3938 = vsel %vm1997, %v3886, 0
          %v3941 = vsel %vm1997, %v3887, 0
          %v3944 = vsel %vm1997, %v3888, 0
          %v3947 = vsel %vm1997, %v3889, 0
          %v3950 = vsel %vm1997, %v3890, 0
          %v3953 = vsel %vm1997, %v3891, 0
          %v3956 = vsel %vm1997, %v3892, 0
          %v3959 = vsel %vm1997, %v3893, 0
          %3961 = vmatpush.bf16.msra.mxu0 0
          %3962 = vmatpush.bf16.msra.mxu0 0
          %3963 = vmatpush.bf16.msra.mxu0 0
          %3964 = vmatpush.bf16.msra.mxu0 0
          %3965 = vmatpush.bf16.msra.mxu0 0
          %3966 = vmatpush.bf16.msra.mxu0 0
          %3967 = vmatpush.bf16.msra.mxu0 %v3910
          %3968 = vmatpush.bf16.msra.mxu0 %v3909
          %3969 = vmatmul.bf16.gmra.mxu0 %v3914
          %v3970 = vpop.f32.mrf.mxu0
          %v3971 = vadd.f32 0.0, %v3970
          %v3972 = vpop.f32.mrf.mxu0
          %v3973 = vadd.f32 0.0, %v3972
          %3974 = vmatmul.bf16.gmra.mxu0 %v3917
          %v3975 = vpop.f32.mrf.mxu0
          %v3976 = vadd.f32 0.0, %v3975
          %v3977 = vpop.f32.mrf.mxu0
          %v3978 = vadd.f32 0.0, %v3977
          %3979 = vmatmul.bf16.gmra.mxu0 %v3920
          %v3980 = vpop.f32.mrf.mxu0
          %v3981 = vadd.f32 0.0, %v3980
          %v3982 = vpop.f32.mrf.mxu0
          %v3983 = vadd.f32 0.0, %v3982
          %3984 = vmatmul.bf16.gmra.mxu0 %v3923
          %v3985 = vpop.f32.mrf.mxu0
          %v3986 = vadd.f32 0.0, %v3985
          %v3987 = vpop.f32.mrf.mxu0
          %v3988 = vadd.f32 0.0, %v3987
          %3989 = vmatmul.bf16.gmra.mxu0 %v3926
          %v3990 = vpop.f32.mrf.mxu0
          %v3991 = vadd.f32 0.0, %v3990
          %v3992 = vpop.f32.mrf.mxu0
          %v3993 = vadd.f32 0.0, %v3992
          %3994 = vmatmul.bf16.gmra.mxu0 %v3929
          %v3995 = vpop.f32.mrf.mxu0
          %v3996 = vadd.f32 0.0, %v3995
          %v3997 = vpop.f32.mrf.mxu0
          %v3998 = vadd.f32 0.0, %v3997
          %3999 = vmatmul.bf16.gmra.mxu0 %v3932
          %v4000 = vpop.f32.mrf.mxu0
          %v4001 = vadd.f32 0.0, %v4000
          %v4002 = vpop.f32.mrf.mxu0
          %v4003 = vadd.f32 0.0, %v4002
          %4004 = vmatmul.bf16.gmra.mxu0 %v3935
          %v4005 = vpop.f32.mrf.mxu0
          %v4006 = vadd.f32 0.0, %v4005
          %v4007 = vpop.f32.mrf.mxu0
          %v4008 = vadd.f32 0.0, %v4007
          %4009 = vmatmul.bf16.gmra.mxu0 %v3938
          %v4010 = vpop.f32.mrf.mxu0
          %v4011 = vadd.f32 0.0, %v4010
          %v4012 = vpop.f32.mrf.mxu0
          %v4013 = vadd.f32 0.0, %v4012
          %4014 = vmatmul.bf16.gmra.mxu0 %v3941
          %v4015 = vpop.f32.mrf.mxu0
          %v4016 = vadd.f32 0.0, %v4015
          %v4017 = vpop.f32.mrf.mxu0
          %v4018 = vadd.f32 0.0, %v4017
          %4019 = vmatmul.bf16.gmra.mxu0 %v3944
          %v4020 = vpop.f32.mrf.mxu0
          %v4021 = vadd.f32 0.0, %v4020
          %v4022 = vpop.f32.mrf.mxu0
          %v4023 = vadd.f32 0.0, %v4022
          %4024 = vmatmul.bf16.gmra.mxu0 %v3947
          %v4025 = vpop.f32.mrf.mxu0
          %v4026 = vadd.f32 0.0, %v4025
          %v4027 = vpop.f32.mrf.mxu0
          %v4028 = vadd.f32 0.0, %v4027
          %4029 = vmatmul.bf16.gmra.mxu0 %v3950
          %v4030 = vpop.f32.mrf.mxu0
          %v4031 = vadd.f32 0.0, %v4030
          %v4032 = vpop.f32.mrf.mxu0
          %v4033 = vadd.f32 0.0, %v4032
          %4034 = vmatmul.bf16.gmra.mxu0 %v3953
          %v4035 = vpop.f32.mrf.mxu0
          %v4036 = vadd.f32 0.0, %v4035
          %v4037 = vpop.f32.mrf.mxu0
          %v4038 = vadd.f32 0.0, %v4037
          %4039 = vmatmul.bf16.gmra.mxu0 %v3956
          %v4040 = vpop.f32.mrf.mxu0
          %v4041 = vadd.f32 0.0, %v4040
          %v4042 = vpop.f32.mrf.mxu0
          %v4043 = vadd.f32 0.0, %v4042
          %4044 = vmatmul.bf16.gmra.mxu0 %v3959
          %v4045 = vpop.f32.mrf.mxu0
          %v4046 = vadd.f32 0.0, %v4045
          %v4047 = vpop.f32.mrf.mxu0
          %v4048 = vadd.f32 0.0, %v4047
          %4049 = vdwg.mxu0
          %v4050 = vadd.f32 %v1399, %v3971
          %v4051 = vadd.f32 %v1400, %v3973
          %v4052 = vadd.f32 %v1401, %v3976
          %v4053 = vadd.f32 %v1402, %v3978
          %v4054 = vadd.f32 %v1403, %v3981
          %v4055 = vadd.f32 %v1404, %v3983
          %v4056 = vadd.f32 %v1405, %v3986
          %v4057 = vadd.f32 %v1406, %v3988
          %v4058 = vadd.f32 %v1407, %v3991
          %v4059 = vadd.f32 %v1408, %v3993
          %v4060 = vadd.f32 %v1409, %v3996
          %v4061 = vadd.f32 %v1410, %v3998
          %v4062 = vadd.f32 %v1411, %v4001
          %v4063 = vadd.f32 %v1412, %v4003
          %v4064 = vadd.f32 %v1413, %v4006
          %v4065 = vadd.f32 %v1414, %v4008
          %v4066 = vadd.f32 %v1415, %v4011
          %v4067 = vadd.f32 %v1416, %v4013
          %v4068 = vadd.f32 %v1417, %v4016
          %v4069 = vadd.f32 %v1418, %v4018
          %v4070 = vadd.f32 %v1419, %v4021
          %v4071 = vadd.f32 %v1420, %v4023
          %v4072 = vadd.f32 %v1421, %v4026
          %v4073 = vadd.f32 %v1422, %v4028
          %v4074 = vadd.f32 %v1423, %v4031
          %v4075 = vadd.f32 %v1424, %v4033
          %v4076 = vadd.f32 %v1425, %v4036
          %v4077 = vadd.f32 %v1426, %v4038
          %v4078 = vadd.f32 %v1427, %v4041
          %v4079 = vadd.f32 %v1428, %v4043
          %v4080 = vadd.f32 %v1429, %v4046
          %v4081 = vadd.f32 %v1430, %v4048
        $region72: #{tpu_custom_call.1} parent=55 // loop_footer
          %s1398 = sadd.s32 1, %s1394
        $region73: #{tpu_custom_call.1} parent=55 // loop_footer_branch
          %1393 = sbr.rel target = $region69
        $region74: #{tpu_custom_call.1} parent=55 // loop_exit
          _
        %v4082 = vld [vmem:[%s8] sm:$0x1]
        %v4084 = vperm.slane %v4082, 0
        %v4086 = vadd.f32 %v1399, %v4084
        %v4087 = vadd.f32 %v1400, %v4084
        %v4088 = vadd.f32 %v1401, %v4084
        %v4089 = vadd.f32 %v1402, %v4084
        %v4090 = vadd.f32 %v1403, %v4084
        %v4091 = vadd.f32 %v1404, %v4084
        %v4092 = vadd.f32 %v1405, %v4084
        %v4093 = vadd.f32 %v1406, %v4084
        %v4094 = vadd.f32 %v1407, %v4084
        %v4095 = vadd.f32 %v1408, %v4084
        %v4096 = vadd.f32 %v1409, %v4084
        %v4097 = vadd.f32 %v1410, %v4084
        %v4098 = vadd.f32 %v1411, %v4084
        %v4099 = vadd.f32 %v1412, %v4084
        %v4100 = vadd.f32 %v1413, %v4084
        %v4101 = vadd.f32 %v1414, %v4084
        %v4102 = vadd.f32 %v1415, %v4084
        %v4103 = vadd.f32 %v1416, %v4084
        %v4104 = vadd.f32 %v1417, %v4084
        %v4105 = vadd.f32 %v1418, %v4084
        %v4106 = vadd.f32 %v1419, %v4084
        %v4107 = vadd.f32 %v1420, %v4084
        %v4108 = vadd.f32 %v1421, %v4084
        %v4109 = vadd.f32 %v1422, %v4084
        %v4110 = vadd.f32 %v1423, %v4084
        %v4111 = vadd.f32 %v1424, %v4084
        %v4112 = vadd.f32 %v1425, %v4084
        %v4113 = vadd.f32 %v1426, %v4084
        %v4114 = vadd.f32 %v1427, %v4084
        %v4115 = vadd.f32 %v1428, %v4084
        %v4116 = vadd.f32 %v1429, %v4084
        %v4117 = vadd.f32 %v1430, %v4084
        %4118 = vst [vmem:[%s339] sm:$0xff] %v4086
        %4119 = vst [vmem:[%s339 + $0x8] sm:$0xff] %v4087
        %4120 = vst [vmem:[%s339 + $0x10] sm:$0xff] %v4088
        %4121 = vst [vmem:[%s339 + $0x18] sm:$0xff] %v4089
        %4122 = vst [vmem:[%s339 + $0x20] sm:$0xff] %v4090
        %4123 = vst [vmem:[%s339 + $0x28] sm:$0xff] %v4091
        %4124 = vst [vmem:[%s339 + $0x30] sm:$0xff] %v4092
        %4125 = vst [vmem:[%s339 + $0x38] sm:$0xff] %v4093
        %4126 = vst [vmem:[%s339 + $0x40] sm:$0xff] %v4094
        %4127 = vst [vmem:[%s339 + $0x48] sm:$0xff] %v4095
        %4128 = vst [vmem:[%s339 + $0x50] sm:$0xff] %v4096
        %4129 = vst [vmem:[%s339 + $0x58] sm:$0xff] %v4097
        %4130 = vst [vmem:[%s339 + $0x60] sm:$0xff] %v4098
        %4131 = vst [vmem:[%s339 + $0x68] sm:$0xff] %v4099
        %4132 = vst [vmem:[%s339 + $0x70] sm:$0xff] %v4100
        %4133 = vst [vmem:[%s339 + $0x78] sm:$0xff] %v4101
        %4134 = vst [vmem:[%s339 + $0x80] sm:$0xff] %v4102
        %4135 = vst [vmem:[%s339 + $0x88] sm:$0xff] %v4103
        %4136 = vst [vmem:[%s339 + $0x90] sm:$0xff] %v4104
        %4137 = vst [vmem:[%s339 + $0x98] sm:$0xff] %v4105
        %4138 = vst [vmem:[%s339 + $0xa0] sm:$0xff] %v4106
        %4139 = vst [vmem:[%s339 + $0xa8] sm:$0xff] %v4107
        %4140 = vst [vmem:[%s339 + $0xb0] sm:$0xff] %v4108
        %4141 = vst [vmem:[%s339 + $0xb8] sm:$0xff] %v4109
        %4142 = vst [vmem:[%s339 + $0xc0] sm:$0xff] %v4110
        %4143 = vst [vmem:[%s339 + $0xc8] sm:$0xff] %v4111
        %4144 = vst [vmem:[%s339 + $0xd0] sm:$0xff] %v4112
        %4145 = vst [vmem:[%s339 + $0xd8] sm:$0xff] %v4113
        %4146 = vst [vmem:[%s339 + $0xe0] sm:$0xff] %v4114
        %4147 = vst [vmem:[%s339 + $0xe8] sm:$0xff] %v4115
        %4148 = vst [vmem:[%s339 + $0xf0] sm:$0xff] %v4116
        %4149 = vst [vmem:[%s339 + $0xf8] sm:$0xff] %v4117
        %s4150 = sand.u32 %s239, 1
        %s4151 = scalar_lea.sflag [#allocation5], %s4150
        %s4152 = sand.u32 %s239, 1
        %s4153 = smul.addr %s4152, 256
        %s4154 = scalar_lea.vmem [#allocation4], %s4153
        // Predicated region
        $region75: #{tpu_custom_call.1} parent=55 // pred_check
          %p4155 = pneg %p249
        $region76: #{tpu_custom_call.1} parent=55 // pred_check_branch
          %4157 = sbr.rel (%p4155) target = $region78
        $region77: #{tpu_custom_call.1} parent=55 // pred_region
          %s4158 = smul.u32 32, %s28
          %4160 = vsyncadd %s4151, 0
          %s4161 = smul.addr %s27, 64
          %s4162 = sadd.s32 %s4158, %s4161
          %s4163 = smul.addr %s4162, 8
          %s4164 = scalar_lea.hbm %s9, %s4163
          %s4165 = sshll.u32 %s4154, 4
          %s4166 = int_to_ptr.vmem [resolvable:$true] %s4165
          %s4167 = sshll.u32 %s4164, 4
          %s4168 = int_to_ptr.hbm [resolvable:$true] %s4167
          %4173 = dma.vmem_to_hbm [thread:$0]  %s4166, 4096, %s4168, %s4151, 128, 128, 8
        $region78: #{tpu_custom_call.1} parent=55 // pred_fallthru
          _
      $region56: #{tpu_custom_call.1} parent=5 // pred_fallthru
        _
      %p4174 = scmp.le.s32.totalorder 2, %s18
      // Predicated region
      $region79: #{tpu_custom_call.1} parent=5 // pred_check
        %p4175 = pneg %p4174
      $region80: #{tpu_custom_call.1} parent=5 // pred_check_branch
        %4177 = sbr.rel (%p4175) target = $region82
      $region81: #{tpu_custom_call.1} parent=5 // pred_region
        %s4178 = ssub.s32 %s18, 2
        // Predicated region
        $region83: #{tpu_custom_call.1} parent=81 // pred_check
          %p4179 = pneg %p255
        $region84: #{tpu_custom_call.1} parent=81 // pred_check_branch
          %4181 = sbr.rel (%p4179) target = $region86
        $region85: #{tpu_custom_call.1} parent=81 // pred_region
          %s4182 = sand.u32 %s240, 1
          %s4183 = scalar_lea.sflag [#allocation5], %s4182
          %s4184 = sand.u32 %s240, 1
          %s4185 = smul.addr %s4184, 256
          %s4186 = scalar_lea.vmem [#allocation4], %s4185
          %4188 = dma.done %s4183, 4096
        $region86: #{tpu_custom_call.1} parent=81 // pred_fallthru
          _
      $region82: #{tpu_custom_call.1} parent=5 // pred_fallthru
        _
    $region6: #{tpu_custom_call.1} parent=1 // loop_footer
      %s22 = sadd.s32 1, %s18
    $region7: #{tpu_custom_call.1} parent=1 // loop_footer_branch
      %17 = sbr.rel target = $region3
    $region8: #{tpu_custom_call.1} parent=1 // loop_exit
      _
    %4189 = vsyncpa [#allocation5], 1
    %s4190 = scalar_lea.sflag [#allocation5], 1
    %4191 = vsyncpa %s4190, 1

</llo_original>
